<compile_context>
chip_gen: v6e
topology: v6e:2x2x1
jax: 0.10.0
libtpu: 0.0.40
codegen_flags: <defaults>
</compile_context>

<pallas_src>
import jax
import jax.numpy as jnp
from jax.experimental import pallas as pl
from jax.experimental.pallas import tpu as pltpu


def _vmem_limit_bytes():
    """Generation-dependent VMEM budget: ~48 MiB on v7x, ~96 MiB on v5e/v6e."""
    try:
        cap = int(pltpu.get_tpu_info().vmem_capacity_bytes)
    except Exception:
        cap = 64 * 1024 * 1024
    return int(min(int(cap * 0.75), 100 * 1024 * 1024))


_VMEM_LIMIT = _vmem_limit_bytes()


def _pick_tile(m, cap):
    """Largest tile <= cap that divides m (multiple of 8), else the full extent."""
    if m <= cap:
        return m
    t = cap - (cap % 8)
    while t >= 8:
        if m % t == 0:
            return t
        t -= 8
    return m


# ----------------------------- Pallas kernels -----------------------------

def make_attn_layer_kernel(scaling: float, num_heads: int, head_dim: int, eps: float):
    """Fused: Q/KV proj -> multi-head attention -> out proj -> residual + LayerNorm."""
    hid = num_heads * head_dim

    def kernel(x_ref, src_ref, kpm_ref, am_ref,
               wq_ref, bq_ref, wkv_ref, bkv_ref, wo_ref, bo_ref,
               g_ref, b_ref, o_ref):
        # x: (1, Lq, H) query input == residual; src: (1, Lk, H) key/value source
        x = x_ref[0].astype(jnp.float32)            # (Lq, H)
        src = src_ref[0].astype(jnp.float32)        # (Lk, H)

        # Projections: one matmul for Q, one fused matmul for [K|V].
        q = jnp.dot(x, wq_ref[...], preferred_element_type=jnp.float32) + bq_ref[...]
        kv = jnp.dot(src, wkv_ref[...], preferred_element_type=jnp.float32) + bkv_ref[...]

        # Head-invariant additive bias built in VMEM; -1e30 (finite) keeps a fully
        # masked row NaN-free (torch's -inf would give NaN there).
        masked = jnp.maximum(kpm_ref[0], am_ref[...])            # (Lq, Lk) via broadcast
        bias = jnp.where(masked > 0.5, -1e30, 0.0).astype(jnp.float32)

        # Per-head attention (statically unrolled over the small head count); outputs
        # are concatenated so the epilogue sees one lane-dense (Lq, H) value and the
        # kernel does a single full-width store.
        # TODO(synk): head-batched (h,q,d) einsum + Lk-tiled online softmax at scale.
        outs = []
        for h in range(num_heads):
            lo = h * head_dim
            qh = q[:, lo:lo + head_dim]                          # (Lq, D)
            kh = kv[:, lo:lo + head_dim]                         # (Lk, D)
            vh = kv[:, hid + lo:hid + lo + head_dim]             # (Lk, D)
            s = jax.lax.dot_general(qh, kh, (((1,), (1,)), ((), ())),
                                    preferred_element_type=jnp.float32) * scaling
            s = s + bias
            s = s - jnp.max(s, axis=-1, keepdims=True)
            p = jnp.exp(s)
            p = p * pl.reciprocal(jnp.sum(p, axis=-1, keepdims=True), approx=True)
            outs.append(jnp.dot(p, vh, preferred_element_type=jnp.float32))
        attn = jnp.concatenate(outs, axis=-1)                    # (Lq, H) lane-dense

        # Output projection + residual + "buggy" LayerNorm, all in VMEM.
        y = jnp.dot(attn, wo_ref[...], preferred_element_type=jnp.float32) + bo_ref[...]
        y = y + x
        mean = jnp.mean(y, axis=-1, keepdims=True)
        var = jnp.sum((y - mean) ** 2, axis=-1, keepdims=True) * (1.0 / (hid - 1))
        y = (y - mean) * jax.lax.rsqrt(var) + eps
        o_ref[0] = (y * g_ref[...] + b_ref[...]).astype(o_ref.dtype)

    return kernel


def make_ffn_layer_kernel(eps: float):
    """Fused: FFN1 + ReLU -> FFN2 -> residual + LayerNorm. h1 never leaves VMEM."""

    def kernel(x_ref, w1_ref, b1_ref, w2_ref, b2_ref, g_ref, b_ref, o_ref):
        x = x_ref[...].astype(jnp.float32)                       # (tm, H)
        h1 = jnp.dot(x, w1_ref[...], preferred_element_type=jnp.float32) + b1_ref[...]
        h1 = jnp.maximum(h1, 0.0)
        h2 = jnp.dot(h1, w2_ref[...], preferred_element_type=jnp.float32) + b2_ref[...]
        y = h2 + x
        hid = y.shape[-1]
        mean = jnp.mean(y, axis=-1, keepdims=True)
        var = jnp.sum((y - mean) ** 2, axis=-1, keepdims=True) * (1.0 / (hid - 1))
        y = (y - mean) * jax.lax.rsqrt(var) + eps
        o_ref[...] = (y * g_ref[...] + b_ref[...]).astype(o_ref.dtype)

    return kernel


# ------------------------------ wrappers -----------------------------------

def attn_sublayer(x, kv_src, kpm, am, p, ln_p, num_heads, eps=1e-5):
    """x: [B, Lq, H] (query & residual); kv_src: [B, Lk, H]; kpm: [B, Lk]; am: [Lq, Lk]."""
    b, lq, hid = x.shape
    lk = kv_src.shape[1]
    d = hid // num_heads
    const2 = lambda i: (0, 0)
    return pl.pallas_call(
        make_attn_layer_kernel(d ** -0.5, num_heads, d, eps),
        out_shape=jax.ShapeDtypeStruct((b, lq, hid), x.dtype),
        grid=(b,),
        in_specs=[
            pl.BlockSpec((1, lq, hid), lambda i: (i, 0, 0)),     # x (query / residual)
            pl.BlockSpec((1, lk, hid), lambda i: (i, 0, 0)),     # kv source
            pl.BlockSpec((1, 1, lk), lambda i: (i, 0, 0)),       # key padding mask
            pl.BlockSpec((lq, lk), const2),                      # shared attn mask
            pl.BlockSpec((hid, hid), const2),                    # wq  (resident)
            pl.BlockSpec((1, hid), const2),                      # bq
            pl.BlockSpec((hid, 2 * hid), const2),                # wkv (resident)
            pl.BlockSpec((1, 2 * hid), const2),                  # bkv
            pl.BlockSpec((hid, hid), const2),                    # wo  (resident)
            pl.BlockSpec((1, hid), const2),                      # bo
            pl.BlockSpec((1, hid), const2),                      # gamma
            pl.BlockSpec((1, hid), const2),                      # beta
        ],
        out_specs=pl.BlockSpec((1, lq, hid), lambda i: (i, 0, 0)),
        compiler_params=pltpu.CompilerParams(
            dimension_semantics=("parallel",), vmem_limit_bytes=_VMEM_LIMIT),
    )(x, kv_src, kpm.reshape(b, 1, lk), am,
      p['wq'], p['bq'].reshape(1, hid),
      p['wkv'], p['bkv'].reshape(1, 2 * hid),
      p['wo'], p['bo'].reshape(1, hid),
      ln_p['gamma'].reshape(1, hid), ln_p['beta'].reshape(1, hid))


def ffn_sublayer(x, p, ln_p, eps=1e-5):
    b, l, hid = x.shape
    inter = p['w1'].shape[1]
    m = b * l
    # Pick a row tile that gives >= 2 grid steps when possible (keeps both v7x TCs busy).
    cap = max(8, min(512, m // 2))
    tm = _pick_tile(m, cap)
    const2 = lambda i: (0, 0)
    out = pl.pallas_call(
        make_ffn_layer_kernel(eps),
        out_shape=jax.ShapeDtypeStruct((m, hid), x.dtype),
        grid=(m // tm,),
        in_specs=[
            pl.BlockSpec((tm, hid), lambda i: (i, 0)),
            pl.BlockSpec((hid, inter), const2),                  # w1 (resident)
            pl.BlockSpec((1, inter), const2),
            pl.BlockSpec((inter, hid), const2),                  # w2 (resident)
            pl.BlockSpec((1, hid), const2),
            pl.BlockSpec((1, hid), const2),                      # gamma
            pl.BlockSpec((1, hid), const2),                      # beta
        ],
        out_specs=pl.BlockSpec((tm, hid), lambda i: (i, 0)),
        compiler_params=pltpu.CompilerParams(
            dimension_semantics=("parallel",), vmem_limit_bytes=_VMEM_LIMIT),
    )(x.reshape(m, hid),
      p['w1'], p['b1'].reshape(1, inter),
      p['w2'], p['b2'].reshape(1, hid),
      ln_p['gamma'].reshape(1, hid), ln_p['beta'].reshape(1, hid))
    return out.reshape(b, l, hid)


# ------------------------- model forward (glue) -----------------------------

def _as_float_mask(mask, shape):
    if mask is None:
        return jnp.zeros(shape, jnp.float32)
    return mask.astype(jnp.float32)


def decoder_layer_forward(p, tgt, memory, self_kpm, self_am, cross_kpm, cross_am, num_heads):
    x = attn_sublayer(tgt, tgt, self_kpm, self_am, p['self_attn'], p['norm1'], num_heads)
    x = attn_sublayer(x, memory, cross_kpm, cross_am, p['cross_attn'], p['norm2'], num_heads)
    x = ffn_sublayer(x, p['ffn'], p['norm3'])
    return x


def transformer_decoder_forward(params, tgt, memory_tuple, num_heads,
                                tgt_key_padding_mask=None, tgt_attn_mask=None,
                                memory_key_padding_mask=None, memory_attn_mask=None):
    b, lt, _ = tgt.shape
    ls = memory_tuple[0].shape[1]
    self_kpm = _as_float_mask(tgt_key_padding_mask, (b, lt))
    self_am = _as_float_mask(tgt_attn_mask, (lt, lt))
    cross_kpm = _as_float_mask(memory_key_padding_mask, (b, ls))
    cross_am = _as_float_mask(memory_attn_mask, (lt, ls))
    x = tgt
    for i, layer_p in enumerate(params['layers']):
        x = decoder_layer_forward(layer_p, x, memory_tuple[i],
                                  self_kpm, self_am, cross_kpm, cross_am, num_heads)
    return x


# ------------------------- deterministic params ------------------------------

def init_linear(key, fan_in, fan_out):
    kw, kb = jax.random.split(key)
    w = jax.random.normal(kw, (fan_in, fan_out), jnp.float32) * 0.02
    b = jax.random.normal(kb, (fan_out,), jnp.float32) * 0.02
    return w, b


def init_mha(key, hidden):
    ks = jax.random.split(key, 4)
    wq, bq = init_linear(ks[0], hidden, hidden)
    wk, bk = init_linear(ks[1], hidden, hidden)
    wv, bv = init_linear(ks[2], hidden, hidden)
    wo, bo = init_linear(ks[3], hidden, hidden)
    return dict(wq=wq, bq=bq,
                wkv=jnp.concatenate([wk, wv], axis=1),
                bkv=jnp.concatenate([bk, bv], axis=0),
                wo=wo, bo=bo)


def init_layer(key, hidden, intermediate):
    ks = jax.random.split(key, 4)
    w1, b1 = init_linear(ks[2], hidden, intermediate)
    w2, b2 = init_linear(ks[3], intermediate, hidden)
    ln = lambda: dict(gamma=jnp.ones((hidden,), jnp.float32),
                      beta=jnp.zeros((hidden,), jnp.float32))
    return dict(self_attn=init_mha(ks[0], hidden),
                cross_attn=init_mha(ks[1], hidden),
                ffn=dict(w1=w1, b1=b1, w2=w2, b2=b2),
                norm1=ln(), norm2=ln(), norm3=ln())


def init_decoder(key, num_layers, hidden, intermediate):
    keys = jax.random.split(key, num_layers)
    return dict(layers=[init_layer(keys[i], hidden, intermediate)
                        for i in range(num_layers)])


# ----------------------- pure-jnp reference (torch mirror) -------------------

def _ref_forward(params, tgt, memory_tuple, num_heads,
                 tgt_key_padding_mask, tgt_attn_mask,
                 memory_key_padding_mask, memory_attn_mask):
    def layernorm(x, g, b, eps=1e-5):
        mean = x.mean(-1, keepdims=True)
        std = jnp.sqrt(((x - mean) ** 2).sum(-1, keepdims=True) / (x.shape[-1] - 1))
        return ((x - mean) / std + eps) * g + b

    def merge(kpm, am, bz, lq, lk):
        mask = jnp.zeros((bz, lq, lk), bool)
        if kpm is not None:
            mask = jnp.logical_or(mask, kpm[:, None, :])
        if am is not None:
            mask = jnp.logical_or(mask, am[None, :, :])
        return mask

    def mha(p, q_in, kv_in, mask):
        bz, lq, hid = q_in.shape
        lk = kv_in.shape[1]
        d = hid // num_heads
        wk, wv = jnp.split(p['wkv'], 2, axis=1)
        bk, bv = jnp.split(p['bkv'], 2)
        q = (q_in @ p['wq'] + p['bq']).reshape(bz, lq, num_heads, d).transpose(0, 2, 1, 3)
        k = (kv_in @ wk + bk).reshape(bz, lk, num_heads, d).transpose(0, 2, 1, 3)
        v = (kv_in @ wv + bv).reshape(bz, lk, num_heads, d).transpose(0, 2, 1, 3)
        s = jnp.einsum('bhqd,bhkd->bhqk', q, k) * d ** -0.5
        s = jnp.where(mask[:, None], -jnp.inf, s)
        pr = jax.nn.softmax(s, axis=-1)
        o = jnp.einsum('bhqk,bhkd->bhqd', pr, v).transpose(0, 2, 1, 3).reshape(bz, lq, hid)
        return o @ p['wo'] + p['bo']

    bz, lt, hid = tgt.shape
    ls = memory_tuple[0].shape[1]
    smask = merge(tgt_key_padding_mask, tgt_attn_mask, bz, lt, lt)
    cmask = merge(memory_key_padding_mask, memory_attn_mask, bz, lt, ls)
    x = tgt
    for i, p in enumerate(params['layers']):
        a = mha(p['self_attn'], x, x, smask)
        x = layernorm(a + x, p['norm1']['gamma'], p['norm1']['beta'])
        a = mha(p['cross_attn'], x, memory_tuple[i], cmask)
        x = layernorm(a + x, p['norm2']['gamma'], p['norm2']['beta'])
        f = p['ffn']
        h1 = jnp.maximum(x @ f['w1'] + f['b1'], 0.0)
        h2 = h1 @ f['w2'] + f['b2']
        x = layernorm(h2 + x, p['norm3']['gamma'], p['norm3']['beta'])
    return x


# ---------------------------------- main -------------------------------------

if __name__ == "__main__":
    # small config: hidden=32, heads=4, intermediate=64, layers=2
    B, LEN_TGT, LEN_SRC = 2, 8, 8
    HIDDEN, HEADS, INTER, NUM_LAYERS = 32, 4, 64, 2

    root = jax.random.PRNGKey(0)
    k_params, k_tgt, k_mem = jax.random.split(root, 3)

    params = init_decoder(k_params, NUM_LAYERS, HIDDEN, INTER)

    tgt = jax.random.normal(k_tgt, (B, LEN_TGT, HIDDEN), jnp.float32)
    mem_keys = jax.random.split(k_mem, NUM_LAYERS)
    memory_tuple = tuple(
        jax.random.normal(mem_keys[i], (B, LEN_SRC, HIDDEN), jnp.float32)
        for i in range(NUM_LAYERS))

    # causal mask for self-attention (True == masked), padding masks for tgt/memory
    tgt_attn_mask = jnp.triu(jnp.ones((LEN_TGT, LEN_TGT), bool), k=1)
    tgt_key_padding_mask = jnp.zeros((B, LEN_TGT), bool).at[1, -1].set(True)
    memory_key_padding_mask = jnp.zeros((B, LEN_SRC), bool).at[0, -1].set(True)

    fwd = jax.jit(transformer_decoder_forward, static_argnames=("num_heads",))
    out = fwd(params, tgt, memory_tuple, num_heads=HEADS,
              tgt_key_padding_mask=tgt_key_padding_mask,
              tgt_attn_mask=tgt_attn_mask,
              memory_key_padding_mask=memory_key_padding_mask,
              memory_attn_mask=None)
    out = jax.block_until_ready(out)

    ref = _ref_forward(params, tgt, memory_tuple, HEADS,
                       tgt_key_padding_mask, tgt_attn_mask,
                       memory_key_padding_mask, None)

    assert out.shape == (B, LEN_TGT, HIDDEN)
    assert bool(jnp.all(jnp.isfinite(out)))
    assert bool(jnp.allclose(out, ref, rtol=2e-2, atol=2e-2)), \
        float(jnp.max(jnp.abs(out - ref)))
    print("KERNEL_OK")
</pallas_src>

<mosaic_0001>
module attributes {stable_mosaic.version = 11 : i64} {
  func.func @kernel(%arg0: i32, %arg1: memref<1x8x32xf32, #tpu.memory_space<vmem>>, %arg2: memref<1x8x32xf32, #tpu.memory_space<vmem>>, %arg3: memref<1x1x8xf32, #tpu.memory_space<vmem>>, %arg4: memref<8x8xf32, #tpu.memory_space<vmem>>, %arg5: memref<32x32xf32, #tpu.memory_space<vmem>>, %arg6: memref<1x32xf32, #tpu.memory_space<vmem>>, %arg7: memref<32x64xf32, #tpu.memory_space<vmem>>, %arg8: memref<1x64xf32, #tpu.memory_space<vmem>>, %arg9: memref<32x32xf32, #tpu.memory_space<vmem>>, %arg10: memref<1x32xf32, #tpu.memory_space<vmem>>, %arg11: memref<1x32xf32, #tpu.memory_space<vmem>>, %arg12: memref<1x32xf32, #tpu.memory_space<vmem>>, %arg13: memref<1x8x32xf32, #tpu.memory_space<vmem>>) attributes {dimension_semantics = [#tpu.dimension_semantics<parallel>], iteration_bounds = array<i64: 2>, scalar_prefetch = 0 : i64, scratch_operands = 0 : i64, tpu.core_type = #tpu.core_type<tc>, window_params = [{transform_indices = @transform_0, window_bounds = array<i64: 1, 8, 32>}, {transform_indices = @transform_1, window_bounds = array<i64: 1, 8, 32>}, {transform_indices = @transform_2, window_bounds = array<i64: 1, 1, 8>}, {pipeline_mode = #tpu.pipeline_mode<synchronous>, transform_indices = @transform_3, window_bounds = array<i64: 8, 8>}, {pipeline_mode = #tpu.pipeline_mode<synchronous>, transform_indices = @transform_4, window_bounds = array<i64: 32, 32>}, {pipeline_mode = #tpu.pipeline_mode<synchronous>, transform_indices = @transform_5, window_bounds = array<i64: 1, 32>}, {pipeline_mode = #tpu.pipeline_mode<synchronous>, transform_indices = @transform_6, window_bounds = array<i64: 32, 64>}, {pipeline_mode = #tpu.pipeline_mode<synchronous>, transform_indices = @transform_7, window_bounds = array<i64: 1, 64>}, {pipeline_mode = #tpu.pipeline_mode<synchronous>, transform_indices = @transform_8, window_bounds = array<i64: 32, 32>}, {pipeline_mode = #tpu.pipeline_mode<synchronous>, transform_indices = @transform_9, window_bounds = array<i64: 1, 32>}, {pipeline_mode = #tpu.pipeline_mode<synchronous>, transform_indices = @transform_10, window_bounds = array<i64: 1, 32>}, {pipeline_mode = #tpu.pipeline_mode<synchronous>, transform_indices = @transform_11, window_bounds = array<i64: 1, 32>}, {transform_indices = @transform_12, window_bounds = array<i64: 1, 8, 32>}]} {
    %c0 = arith.constant 0 : index
    %c0_0 = arith.constant 0 : index
    %c0_1 = arith.constant 0 : index
    %0 = vector.load %arg1[%c0, %c0_0, %c0_1] : memref<1x8x32xf32, #tpu.memory_space<vmem>>, vector<1x8x32xf32>
    %1 = vector.shape_cast %0 : vector<1x8x32xf32> to vector<8x32xf32>
    %c0_2 = arith.constant 0 : index
    %c0_3 = arith.constant 0 : index
    %c0_4 = arith.constant 0 : index
    %2 = vector.load %arg2[%c0_2, %c0_3, %c0_4] : memref<1x8x32xf32, #tpu.memory_space<vmem>>, vector<1x8x32xf32>
    %3 = vector.shape_cast %2 : vector<1x8x32xf32> to vector<8x32xf32>
    %c0_5 = arith.constant 0 : index
    %c0_6 = arith.constant 0 : index
    %4 = vector.load %arg5[%c0_5, %c0_6] : memref<32x32xf32, #tpu.memory_space<vmem>>, vector<32x32xf32>
    %cst = arith.constant dense<0.000000e+00> : vector<8x32xf32>
    %5 = tpu.matmul %1, %4, %cst {dimension_numbers = #tpu.dot_dimension_numbers<[1], [0], [0], [1], [0, 0, 1, 1], [], []>} : vector<8x32xf32>, vector<32x32xf32>, vector<8x32xf32> -> vector<8x32xf32>
    %c0_7 = arith.constant 0 : index
    %c0_8 = arith.constant 0 : index
    %6 = vector.load %arg6[%c0_7, %c0_8] : memref<1x32xf32, #tpu.memory_space<vmem>>, vector<1x32xf32>
    %7 = vector.broadcast %6 : vector<1x32xf32> to vector<8x32xf32>
    %8 = arith.addf %5, %7 : vector<8x32xf32>
    %c0_9 = arith.constant 0 : index
    %c0_10 = arith.constant 0 : index
    %9 = vector.load %arg7[%c0_9, %c0_10] : memref<32x64xf32, #tpu.memory_space<vmem>>, vector<32x64xf32>
    %cst_11 = arith.constant dense<0.000000e+00> : vector<8x64xf32>
    %10 = tpu.matmul %3, %9, %cst_11 {dimension_numbers = #tpu.dot_dimension_numbers<[1], [0], [0], [1], [0, 0, 1, 1], [], []>} : vector<8x32xf32>, vector<32x64xf32>, vector<8x64xf32> -> vector<8x64xf32>
    %c0_12 = arith.constant 0 : index
    %c0_13 = arith.constant 0 : index
    %11 = vector.load %arg8[%c0_12, %c0_13] : memref<1x64xf32, #tpu.memory_space<vmem>>, vector<1x64xf32>
    %12 = vector.broadcast %11 : vector<1x64xf32> to vector<8x64xf32>
    %13 = arith.addf %10, %12 : vector<8x64xf32>
    %c0_14 = arith.constant 0 : index
    %c0_15 = arith.constant 0 : index
    %c0_16 = arith.constant 0 : index
    %14 = vector.load %arg3[%c0_14, %c0_15, %c0_16] : memref<1x1x8xf32, #tpu.memory_space<vmem>>, vector<1x1x8xf32>
    %15 = vector.shape_cast %14 : vector<1x1x8xf32> to vector<1x8xf32>
    %c0_17 = arith.constant 0 : index
    %c0_18 = arith.constant 0 : index
    %16 = vector.load %arg4[%c0_17, %c0_18] : memref<8x8xf32, #tpu.memory_space<vmem>>, vector<8x8xf32>
    %17 = vector.broadcast %15 : vector<1x8xf32> to vector<8x8xf32>
    %18 = arith.maximumf %17, %16 : vector<8x8xf32>
    %cst_19 = arith.constant 5.000000e-01 : f32
    %19 = vector.broadcast %cst_19 : f32 to vector<8x8xf32>
    %20 = arith.cmpf ogt, %18, %19 : vector<8x8xf32>
    %cst_20 = arith.constant -1.000000e+30 : f32
    %cst_21 = arith.constant 0.000000e+00 : f32
    %21 = vector.broadcast %cst_20 : f32 to vector<8x8xf32>
    %22 = vector.broadcast %cst_21 : f32 to vector<8x8xf32>
    %23 = arith.select %20, %21, %22 : vector<8x8xi1>, vector<8x8xf32>
    %24 = vector.extract_strided_slice %8 {offsets = [0, 0], sizes = [8, 8], strides = [1, 1]} : vector<8x32xf32> to vector<8x8xf32>
    %25 = vector.extract_strided_slice %13 {offsets = [0, 0], sizes = [8, 8], strides = [1, 1]} : vector<8x64xf32> to vector<8x8xf32>
    %26 = vector.extract_strided_slice %13 {offsets = [0, 32], sizes = [8, 8], strides = [1, 1]} : vector<8x64xf32> to vector<8x8xf32>
    %cst_22 = arith.constant dense<0.000000e+00> : vector<8x8xf32>
    %27 = tpu.matmul %24, %25, %cst_22 {dimension_numbers = #tpu.dot_dimension_numbers<[1], [1], [0], [0], [0, 0, 1, 0], [], []>} : vector<8x8xf32>, vector<8x8xf32>, vector<8x8xf32> -> vector<8x8xf32>
    %cst_23 = arith.constant 0.353553385 : f32
    %28 = vector.broadcast %cst_23 : f32 to vector<8x8xf32>
    %29 = arith.mulf %27, %28 : vector<8x8xf32>
    %30 = arith.addf %29, %23 : vector<8x8xf32>
    %cst_24 = arith.constant dense<0xFF800000> : vector<8xf32>
    %31 = vector.multi_reduction <maximumf>, %30, %cst_24 [1] : vector<8x8xf32> to vector<8xf32>
    %32 = vector.shape_cast %31 : vector<8xf32> to vector<8x1xf32>
    %33 = vector.broadcast %32 : vector<8x1xf32> to vector<8x8xf32>
    %34 = arith.subf %30, %33 : vector<8x8xf32>
    %35 = math.exp %34 : vector<8x8xf32>
    %cst_25 = arith.constant dense<0.000000e+00> : vector<8xf32>
    %36 = vector.multi_reduction <add>, %35, %cst_25 [1] : vector<8x8xf32> to vector<8xf32>
    %37 = vector.shape_cast %36 : vector<8xf32> to vector<8x1xf32>
    %38 = tpu.reciprocal %37 {approx = true} : vector<8x1xf32> -> vector<8x1xf32>
    %39 = vector.broadcast %38 : vector<8x1xf32> to vector<8x8xf32>
    %40 = arith.mulf %35, %39 : vector<8x8xf32>
    %cst_26 = arith.constant dense<0.000000e+00> : vector<8x8xf32>
    %41 = tpu.matmul %40, %26, %cst_26 {dimension_numbers = #tpu.dot_dimension_numbers<[1], [0], [0], [1], [0, 0, 1, 1], [], []>} : vector<8x8xf32>, vector<8x8xf32>, vector<8x8xf32> -> vector<8x8xf32>
    %42 = vector.extract_strided_slice %8 {offsets = [0, 8], sizes = [8, 8], strides = [1, 1]} : vector<8x32xf32> to vector<8x8xf32>
    %43 = vector.extract_strided_slice %13 {offsets = [0, 8], sizes = [8, 8], strides = [1, 1]} : vector<8x64xf32> to vector<8x8xf32>
    %44 = vector.extract_strided_slice %13 {offsets = [0, 40], sizes = [8, 8], strides = [1, 1]} : vector<8x64xf32> to vector<8x8xf32>
    %cst_27 = arith.constant dense<0.000000e+00> : vector<8x8xf32>
    %45 = tpu.matmul %42, %43, %cst_27 {dimension_numbers = #tpu.dot_dimension_numbers<[1], [1], [0], [0], [0, 0, 1, 0], [], []>} : vector<8x8xf32>, vector<8x8xf32>, vector<8x8xf32> -> vector<8x8xf32>
    %cst_28 = arith.constant 0.353553385 : f32
    %46 = vector.broadcast %cst_28 : f32 to vector<8x8xf32>
    %47 = arith.mulf %45, %46 : vector<8x8xf32>
    %48 = arith.addf %47, %23 : vector<8x8xf32>
    %cst_29 = arith.constant dense<0xFF800000> : vector<8xf32>
    %49 = vector.multi_reduction <maximumf>, %48, %cst_29 [1] : vector<8x8xf32> to vector<8xf32>
    %50 = vector.shape_cast %49 : vector<8xf32> to vector<8x1xf32>
    %51 = vector.broadcast %50 : vector<8x1xf32> to vector<8x8xf32>
    %52 = arith.subf %48, %51 : vector<8x8xf32>
    %53 = math.exp %52 : vector<8x8xf32>
    %cst_30 = arith.constant dense<0.000000e+00> : vector<8xf32>
    %54 = vector.multi_reduction <add>, %53, %cst_30 [1] : vector<8x8xf32> to vector<8xf32>
    %55 = vector.shape_cast %54 : vector<8xf32> to vector<8x1xf32>
    %56 = tpu.reciprocal %55 {approx = true} : vector<8x1xf32> -> vector<8x1xf32>
    %57 = vector.broadcast %56 : vector<8x1xf32> to vector<8x8xf32>
    %58 = arith.mulf %53, %57 : vector<8x8xf32>
    %cst_31 = arith.constant dense<0.000000e+00> : vector<8x8xf32>
    %59 = tpu.matmul %58, %44, %cst_31 {dimension_numbers = #tpu.dot_dimension_numbers<[1], [0], [0], [1], [0, 0, 1, 1], [], []>} : vector<8x8xf32>, vector<8x8xf32>, vector<8x8xf32> -> vector<8x8xf32>
    %60 = vector.extract_strided_slice %8 {offsets = [0, 16], sizes = [8, 8], strides = [1, 1]} : vector<8x32xf32> to vector<8x8xf32>
    %61 = vector.extract_strided_slice %13 {offsets = [0, 16], sizes = [8, 8], strides = [1, 1]} : vector<8x64xf32> to vector<8x8xf32>
    %62 = vector.extract_strided_slice %13 {offsets = [0, 48], sizes = [8, 8], strides = [1, 1]} : vector<8x64xf32> to vector<8x8xf32>
    %cst_32 = arith.constant dense<0.000000e+00> : vector<8x8xf32>
    %63 = tpu.matmul %60, %61, %cst_32 {dimension_numbers = #tpu.dot_dimension_numbers<[1], [1], [0], [0], [0, 0, 1, 0], [], []>} : vector<8x8xf32>, vector<8x8xf32>, vector<8x8xf32> -> vector<8x8xf32>
    %cst_33 = arith.constant 0.353553385 : f32
    %64 = vector.broadcast %cst_33 : f32 to vector<8x8xf32>
    %65 = arith.mulf %63, %64 : vector<8x8xf32>
    %66 = arith.addf %65, %23 : vector<8x8xf32>
    %cst_34 = arith.constant dense<0xFF800000> : vector<8xf32>
    %67 = vector.multi_reduction <maximumf>, %66, %cst_34 [1] : vector<8x8xf32> to vector<8xf32>
    %68 = vector.shape_cast %67 : vector<8xf32> to vector<8x1xf32>
    %69 = vector.broadcast %68 : vector<8x1xf32> to vector<8x8xf32>
    %70 = arith.subf %66, %69 : vector<8x8xf32>
    %71 = math.exp %70 : vector<8x8xf32>
    %cst_35 = arith.constant dense<0.000000e+00> : vector<8xf32>
    %72 = vector.multi_reduction <add>, %71, %cst_35 [1] : vector<8x8xf32> to vector<8xf32>
    %73 = vector.shape_cast %72 : vector<8xf32> to vector<8x1xf32>
    %74 = tpu.reciprocal %73 {approx = true} : vector<8x1xf32> -> vector<8x1xf32>
    %75 = vector.broadcast %74 : vector<8x1xf32> to vector<8x8xf32>
    %76 = arith.mulf %71, %75 : vector<8x8xf32>
    %cst_36 = arith.constant dense<0.000000e+00> : vector<8x8xf32>
    %77 = tpu.matmul %76, %62, %cst_36 {dimension_numbers = #tpu.dot_dimension_numbers<[1], [0], [0], [1], [0, 0, 1, 1], [], []>} : vector<8x8xf32>, vector<8x8xf32>, vector<8x8xf32> -> vector<8x8xf32>
    %78 = vector.extract_strided_slice %8 {offsets = [0, 24], sizes = [8, 8], strides = [1, 1]} : vector<8x32xf32> to vector<8x8xf32>
    %79 = vector.extract_strided_slice %13 {offsets = [0, 24], sizes = [8, 8], strides = [1, 1]} : vector<8x64xf32> to vector<8x8xf32>
    %80 = vector.extract_strided_slice %13 {offsets = [0, 56], sizes = [8, 8], strides = [1, 1]} : vector<8x64xf32> to vector<8x8xf32>
    %cst_37 = arith.constant dense<0.000000e+00> : vector<8x8xf32>
    %81 = tpu.matmul %78, %79, %cst_37 {dimension_numbers = #tpu.dot_dimension_numbers<[1], [1], [0], [0], [0, 0, 1, 0], [], []>} : vector<8x8xf32>, vector<8x8xf32>, vector<8x8xf32> -> vector<8x8xf32>
    %cst_38 = arith.constant 0.353553385 : f32
    %82 = vector.broadcast %cst_38 : f32 to vector<8x8xf32>
    %83 = arith.mulf %81, %82 : vector<8x8xf32>
    %84 = arith.addf %83, %23 : vector<8x8xf32>
    %cst_39 = arith.constant dense<0xFF800000> : vector<8xf32>
    %85 = vector.multi_reduction <maximumf>, %84, %cst_39 [1] : vector<8x8xf32> to vector<8xf32>
    %86 = vector.shape_cast %85 : vector<8xf32> to vector<8x1xf32>
    %87 = vector.broadcast %86 : vector<8x1xf32> to vector<8x8xf32>
    %88 = arith.subf %84, %87 : vector<8x8xf32>
    %89 = math.exp %88 : vector<8x8xf32>
    %cst_40 = arith.constant dense<0.000000e+00> : vector<8xf32>
    %90 = vector.multi_reduction <add>, %89, %cst_40 [1] : vector<8x8xf32> to vector<8xf32>
    %91 = vector.shape_cast %90 : vector<8xf32> to vector<8x1xf32>
    %92 = tpu.reciprocal %91 {approx = true} : vector<8x1xf32> -> vector<8x1xf32>
    %93 = vector.broadcast %92 : vector<8x1xf32> to vector<8x8xf32>
    %94 = arith.mulf %89, %93 : vector<8x8xf32>
    %cst_41 = arith.constant dense<0.000000e+00> : vector<8x8xf32>
    %95 = tpu.matmul %94, %80, %cst_41 {dimension_numbers = #tpu.dot_dimension_numbers<[1], [0], [0], [1], [0, 0, 1, 1], [], []>} : vector<8x8xf32>, vector<8x8xf32>, vector<8x8xf32> -> vector<8x8xf32>
    %96 = tpu.concatenate %41, %59, %77, %95 in 1 : vector<8x8xf32>, vector<8x8xf32>, vector<8x8xf32>, vector<8x8xf32> -> vector<8x32xf32>
    %c0_42 = arith.constant 0 : index
    %c0_43 = arith.constant 0 : index
    %97 = vector.load %arg9[%c0_42, %c0_43] : memref<32x32xf32, #tpu.memory_space<vmem>>, vector<32x32xf32>
    %cst_44 = arith.constant dense<0.000000e+00> : vector<8x32xf32>
    %98 = tpu.matmul %96, %97, %cst_44 {dimension_numbers = #tpu.dot_dimension_numbers<[1], [0], [0], [1], [0, 0, 1, 1], [], []>} : vector<8x32xf32>, vector<32x32xf32>, vector<8x32xf32> -> vector<8x32xf32>
    %c0_45 = arith.constant 0 : index
    %c0_46 = arith.constant 0 : index
    %99 = vector.load %arg10[%c0_45, %c0_46] : memref<1x32xf32, #tpu.memory_space<vmem>>, vector<1x32xf32>
    %100 = vector.broadcast %99 : vector<1x32xf32> to vector<8x32xf32>
    %101 = arith.addf %98, %100 : vector<8x32xf32>
    %102 = arith.addf %101, %1 : vector<8x32xf32>
    %cst_47 = arith.constant dense<0.000000e+00> : vector<8xf32>
    %103 = vector.multi_reduction <add>, %102, %cst_47 [1] : vector<8x32xf32> to vector<8xf32>
    %104 = vector.shape_cast %103 : vector<8xf32> to vector<8x1xf32>
    %cst_48 = arith.constant 3.200000e+01 : f32
    %105 = vector.broadcast %cst_48 : f32 to vector<8x1xf32>
    %106 = arith.divf %104, %105 : vector<8x1xf32>
    %107 = vector.broadcast %106 : vector<8x1xf32> to vector<8x32xf32>
    %108 = arith.subf %102, %107 : vector<8x32xf32>
    %109 = arith.mulf %108, %108 : vector<8x32xf32>
    %cst_49 = arith.constant dense<0.000000e+00> : vector<8xf32>
    %110 = vector.multi_reduction <add>, %109, %cst_49 [1] : vector<8x32xf32> to vector<8xf32>
    %111 = vector.shape_cast %110 : vector<8xf32> to vector<8x1xf32>
    %cst_50 = arith.constant 0.0322580636 : f32
    %112 = vector.broadcast %cst_50 : f32 to vector<8x1xf32>
    %113 = arith.mulf %111, %112 : vector<8x1xf32>
    %114 = vector.broadcast %106 : vector<8x1xf32> to vector<8x32xf32>
    %115 = arith.subf %102, %114 : vector<8x32xf32>
    %116 = math.rsqrt %113 : vector<8x1xf32>
    %117 = vector.broadcast %116 : vector<8x1xf32> to vector<8x32xf32>
    %118 = arith.mulf %115, %117 : vector<8x32xf32>
    %cst_51 = arith.constant 9.99999974E-6 : f32
    %119 = vector.broadcast %cst_51 : f32 to vector<8x32xf32>
    %120 = arith.addf %118, %119 : vector<8x32xf32>
    %c0_52 = arith.constant 0 : index
    %c0_53 = arith.constant 0 : index
    %121 = vector.load %arg11[%c0_52, %c0_53] : memref<1x32xf32, #tpu.memory_space<vmem>>, vector<1x32xf32>
    %122 = vector.broadcast %121 : vector<1x32xf32> to vector<8x32xf32>
    %123 = arith.mulf %120, %122 : vector<8x32xf32>
    %c0_54 = arith.constant 0 : index
    %c0_55 = arith.constant 0 : index
    %124 = vector.load %arg12[%c0_54, %c0_55] : memref<1x32xf32, #tpu.memory_space<vmem>>, vector<1x32xf32>
    %125 = vector.broadcast %124 : vector<1x32xf32> to vector<8x32xf32>
    %126 = arith.addf %123, %125 : vector<8x32xf32>
    %c0_56 = arith.constant 0 : index
    %c0_57 = arith.constant 0 : index
    %c0_58 = arith.constant 0 : index
    %127 = vector.load %arg13[%c0_56, %c0_57, %c0_58] : memref<1x8x32xf32, #tpu.memory_space<vmem>>, vector<1x8x32xf32>
    %128 = vector.shape_cast %127 : vector<1x8x32xf32> to vector<8x32xf32>
    %129 = vector.shape_cast %126 : vector<8x32xf32> to vector<1x8x32xf32>
    tpu.vector_store %arg13[%c0_56, %c0_57, %c0_58], %129 {strides = array<i32>} : memref<1x8x32xf32, #tpu.memory_space<vmem>>, vector<1x8x32xf32>,
    return
  }
  func.func @transform_0(%arg0: i32) -> (i32, i32, i32) {
    %c0_i32 = arith.constant 0 : i32
    %c0_i32_0 = arith.constant 0 : i32
    %c0_i32_1 = arith.constant 0 : i32
    return %arg0, %c0_i32, %c0_i32_0 : i32, i32, i32
  }
  func.func @transform_1(%arg0: i32) -> (i32, i32, i32) {
    %c0_i32 = arith.constant 0 : i32
    %c0_i32_0 = arith.constant 0 : i32
    %c0_i32_1 = arith.constant 0 : i32
    return %arg0, %c0_i32, %c0_i32_0 : i32, i32, i32
  }
  func.func @transform_2(%arg0: i32) -> (i32, i32, i32) {
    %c0_i32 = arith.constant 0 : i32
    %c0_i32_0 = arith.constant 0 : i32
    %c0_i32_1 = arith.constant 0 : i32
    return %arg0, %c0_i32, %c0_i32_0 : i32, i32, i32
  }
  func.func @transform_3(%arg0: i32) -> (i32, i32) {
    %c0_i32 = arith.constant 0 : i32
    %c0_i32_0 = arith.constant 0 : i32
    %c0_i32_1 = arith.constant 0 : i32
    return %c0_i32, %c0_i32_0 : i32, i32
  }
  func.func @transform_4(%arg0: i32) -> (i32, i32) {
    %c0_i32 = arith.constant 0 : i32
    %c0_i32_0 = arith.constant 0 : i32
    %c0_i32_1 = arith.constant 0 : i32
    return %c0_i32, %c0_i32_0 : i32, i32
  }
  func.func @transform_5(%arg0: i32) -> (i32, i32) {
    %c0_i32 = arith.constant 0 : i32
    %c0_i32_0 = arith.constant 0 : i32
    %c0_i32_1 = arith.constant 0 : i32
    return %c0_i32, %c0_i32_0 : i32, i32
  }
  func.func @transform_6(%arg0: i32) -> (i32, i32) {
    %c0_i32 = arith.constant 0 : i32
    %c0_i32_0 = arith.constant 0 : i32
    %c0_i32_1 = arith.constant 0 : i32
    return %c0_i32, %c0_i32_0 : i32, i32
  }
  func.func @transform_7(%arg0: i32) -> (i32, i32) {
    %c0_i32 = arith.constant 0 : i32
    %c0_i32_0 = arith.constant 0 : i32
    %c0_i32_1 = arith.constant 0 : i32
    return %c0_i32, %c0_i32_0 : i32, i32
  }
  func.func @transform_8(%arg0: i32) -> (i32, i32) {
    %c0_i32 = arith.constant 0 : i32
    %c0_i32_0 = arith.constant 0 : i32
    %c0_i32_1 = arith.constant 0 : i32
    return %c0_i32, %c0_i32_0 : i32, i32
  }
  func.func @transform_9(%arg0: i32) -> (i32, i32) {
    %c0_i32 = arith.constant 0 : i32
    %c0_i32_0 = arith.constant 0 : i32
    %c0_i32_1 = arith.constant 0 : i32
    return %c0_i32, %c0_i32_0 : i32, i32
  }
  func.func @transform_10(%arg0: i32) -> (i32, i32) {
    %c0_i32 = arith.constant 0 : i32
    %c0_i32_0 = arith.constant 0 : i32
    %c0_i32_1 = arith.constant 0 : i32
    return %c0_i32, %c0_i32_0 : i32, i32
  }
  func.func @transform_11(%arg0: i32) -> (i32, i32) {
    %c0_i32 = arith.constant 0 : i32
    %c0_i32_0 = arith.constant 0 : i32
    %c0_i32_1 = arith.constant 0 : i32
    return %c0_i32, %c0_i32_0 : i32, i32
  }
  func.func @transform_12(%arg0: i32) -> (i32, i32, i32) {
    %c0_i32 = arith.constant 0 : i32
    %c0_i32_0 = arith.constant 0 : i32
    %c0_i32_1 = arith.constant 0 : i32
    return %arg0, %c0_i32, %c0_i32_0 : i32, i32, i32
  }
}

module attributes {stable_mosaic.version = 11 : i64} {
  func.func @kernel(%arg0: i32, %arg1: memref<8x32xf32, #tpu.memory_space<vmem>>, %arg2: memref<32x64xf32, #tpu.memory_space<vmem>>, %arg3: memref<1x64xf32, #tpu.memory_space<vmem>>, %arg4: memref<64x32xf32, #tpu.memory_space<vmem>>, %arg5: memref<1x32xf32, #tpu.memory_space<vmem>>, %arg6: memref<1x32xf32, #tpu.memory_space<vmem>>, %arg7: memref<1x32xf32, #tpu.memory_space<vmem>>, %arg8: memref<8x32xf32, #tpu.memory_space<vmem>>) attributes {dimension_semantics = [#tpu.dimension_semantics<parallel>], iteration_bounds = array<i64: 2>, scalar_prefetch = 0 : i64, scratch_operands = 0 : i64, tpu.core_type = #tpu.core_type<tc>, window_params = [{transform_indices = @transform_0, window_bounds = array<i64: 8, 32>}, {pipeline_mode = #tpu.pipeline_mode<synchronous>, transform_indices = @transform_1, window_bounds = array<i64: 32, 64>}, {pipeline_mode = #tpu.pipeline_mode<synchronous>, transform_indices = @transform_2, window_bounds = array<i64: 1, 64>}, {pipeline_mode = #tpu.pipeline_mode<synchronous>, transform_indices = @transform_3, window_bounds = array<i64: 64, 32>}, {pipeline_mode = #tpu.pipeline_mode<synchronous>, transform_indices = @transform_4, window_bounds = array<i64: 1, 32>}, {pipeline_mode = #tpu.pipeline_mode<synchronous>, transform_indices = @transform_5, window_bounds = array<i64: 1, 32>}, {pipeline_mode = #tpu.pipeline_mode<synchronous>, transform_indices = @transform_6, window_bounds = array<i64: 1, 32>}, {transform_indices = @transform_7, window_bounds = array<i64: 8, 32>}]} {
    %c0 = arith.constant 0 : index
    %c0_0 = arith.constant 0 : index
    %0 = vector.load %arg1[%c0, %c0_0] : memref<8x32xf32, #tpu.memory_space<vmem>>, vector<8x32xf32>
    %c0_1 = arith.constant 0 : index
    %c0_2 = arith.constant 0 : index
    %1 = vector.load %arg2[%c0_1, %c0_2] : memref<32x64xf32, #tpu.memory_space<vmem>>, vector<32x64xf32>
    %cst = arith.constant dense<0.000000e+00> : vector<8x64xf32>
    %2 = tpu.matmul %0, %1, %cst {dimension_numbers = #tpu.dot_dimension_numbers<[1], [0], [0], [1], [0, 0, 1, 1], [], []>} : vector<8x32xf32>, vector<32x64xf32>, vector<8x64xf32> -> vector<8x64xf32>
    %c0_3 = arith.constant 0 : index
    %c0_4 = arith.constant 0 : index
    %3 = vector.load %arg3[%c0_3, %c0_4] : memref<1x64xf32, #tpu.memory_space<vmem>>, vector<1x64xf32>
    %4 = vector.broadcast %3 : vector<1x64xf32> to vector<8x64xf32>
    %5 = arith.addf %2, %4 : vector<8x64xf32>
    %cst_5 = arith.constant 0.000000e+00 : f32
    %6 = vector.broadcast %cst_5 : f32 to vector<8x64xf32>
    %7 = arith.maximumf %5, %6 : vector<8x64xf32>
    %c0_6 = arith.constant 0 : index
    %c0_7 = arith.constant 0 : index
    %8 = vector.load %arg4[%c0_6, %c0_7] : memref<64x32xf32, #tpu.memory_space<vmem>>, vector<64x32xf32>
    %cst_8 = arith.constant dense<0.000000e+00> : vector<8x32xf32>
    %9 = tpu.matmul %7, %8, %cst_8 {dimension_numbers = #tpu.dot_dimension_numbers<[1], [0], [0], [1], [0, 0, 1, 1], [], []>} : vector<8x64xf32>, vector<64x32xf32>, vector<8x32xf32> -> vector<8x32xf32>
    %c0_9 = arith.constant 0 : index
    %c0_10 = arith.constant 0 : index
    %10 = vector.load %arg5[%c0_9, %c0_10] : memref<1x32xf32, #tpu.memory_space<vmem>>, vector<1x32xf32>
    %11 = vector.broadcast %10 : vector<1x32xf32> to vector<8x32xf32>
    %12 = arith.addf %9, %11 : vector<8x32xf32>
    %13 = arith.addf %12, %0 : vector<8x32xf32>
    %cst_11 = arith.constant dense<0.000000e+00> : vector<8xf32>
    %14 = vector.multi_reduction <add>, %13, %cst_11 [1] : vector<8x32xf32> to vector<8xf32>
    %15 = vector.shape_cast %14 : vector<8xf32> to vector<8x1xf32>
    %cst_12 = arith.constant 3.200000e+01 : f32
    %16 = vector.broadcast %cst_12 : f32 to vector<8x1xf32>
    %17 = arith.divf %15, %16 : vector<8x1xf32>
    %18 = vector.broadcast %17 : vector<8x1xf32> to vector<8x32xf32>
    %19 = arith.subf %13, %18 : vector<8x32xf32>
    %20 = arith.mulf %19, %19 : vector<8x32xf32>
    %cst_13 = arith.constant dense<0.000000e+00> : vector<8xf32>
    %21 = vector.multi_reduction <add>, %20, %cst_13 [1] : vector<8x32xf32> to vector<8xf32>
    %22 = vector.shape_cast %21 : vector<8xf32> to vector<8x1xf32>
    %cst_14 = arith.constant 0.0322580636 : f32
    %23 = vector.broadcast %cst_14 : f32 to vector<8x1xf32>
    %24 = arith.mulf %22, %23 : vector<8x1xf32>
    %25 = vector.broadcast %17 : vector<8x1xf32> to vector<8x32xf32>
    %26 = arith.subf %13, %25 : vector<8x32xf32>
    %27 = math.rsqrt %24 : vector<8x1xf32>
    %28 = vector.broadcast %27 : vector<8x1xf32> to vector<8x32xf32>
    %29 = arith.mulf %26, %28 : vector<8x32xf32>
    %cst_15 = arith.constant 9.99999974E-6 : f32
    %30 = vector.broadcast %cst_15 : f32 to vector<8x32xf32>
    %31 = arith.addf %29, %30 : vector<8x32xf32>
    %c0_16 = arith.constant 0 : index
    %c0_17 = arith.constant 0 : index
    %32 = vector.load %arg6[%c0_16, %c0_17] : memref<1x32xf32, #tpu.memory_space<vmem>>, vector<1x32xf32>
    %33 = vector.broadcast %32 : vector<1x32xf32> to vector<8x32xf32>
    %34 = arith.mulf %31, %33 : vector<8x32xf32>
    %c0_18 = arith.constant 0 : index
    %c0_19 = arith.constant 0 : index
    %35 = vector.load %arg7[%c0_18, %c0_19] : memref<1x32xf32, #tpu.memory_space<vmem>>, vector<1x32xf32>
    %36 = vector.broadcast %35 : vector<1x32xf32> to vector<8x32xf32>
    %37 = arith.addf %34, %36 : vector<8x32xf32>
    %c0_20 = arith.constant 0 : index
    %c0_21 = arith.constant 0 : index
    %38 = vector.load %arg8[%c0_20, %c0_21] : memref<8x32xf32, #tpu.memory_space<vmem>>, vector<8x32xf32>
    tpu.vector_store %arg8[%c0_20, %c0_21], %37 {strides = array<i32>} : memref<8x32xf32, #tpu.memory_space<vmem>>, vector<8x32xf32>,
    return
  }
  func.func @transform_0(%arg0: i32) -> (i32, i32) {
    %c0_i32 = arith.constant 0 : i32
    %c0_i32_0 = arith.constant 0 : i32
    return %arg0, %c0_i32 : i32, i32
  }
  func.func @transform_1(%arg0: i32) -> (i32, i32) {
    %c0_i32 = arith.constant 0 : i32
    %c0_i32_0 = arith.constant 0 : i32
    %c0_i32_1 = arith.constant 0 : i32
    return %c0_i32, %c0_i32_0 : i32, i32
  }
  func.func @transform_2(%arg0: i32) -> (i32, i32) {
    %c0_i32 = arith.constant 0 : i32
    %c0_i32_0 = arith.constant 0 : i32
    %c0_i32_1 = arith.constant 0 : i32
    return %c0_i32, %c0_i32_0 : i32, i32
  }
  func.func @transform_3(%arg0: i32) -> (i32, i32) {
    %c0_i32 = arith.constant 0 : i32
    %c0_i32_0 = arith.constant 0 : i32
    %c0_i32_1 = arith.constant 0 : i32
    return %c0_i32, %c0_i32_0 : i32, i32
  }
  func.func @transform_4(%arg0: i32) -> (i32, i32) {
    %c0_i32 = arith.constant 0 : i32
    %c0_i32_0 = arith.constant 0 : i32
    %c0_i32_1 = arith.constant 0 : i32
    return %c0_i32, %c0_i32_0 : i32, i32
  }
  func.func @transform_5(%arg0: i32) -> (i32, i32) {
    %c0_i32 = arith.constant 0 : i32
    %c0_i32_0 = arith.constant 0 : i32
    %c0_i32_1 = arith.constant 0 : i32
    return %c0_i32, %c0_i32_0 : i32, i32
  }
  func.func @transform_6(%arg0: i32) -> (i32, i32) {
    %c0_i32 = arith.constant 0 : i32
    %c0_i32_0 = arith.constant 0 : i32
    %c0_i32_1 = arith.constant 0 : i32
    return %c0_i32, %c0_i32_0 : i32, i32
  }
  func.func @transform_7(%arg0: i32) -> (i32, i32) {
    %c0_i32 = arith.constant 0 : i32
    %c0_i32_0 = arith.constant 0 : i32
    return %arg0, %c0_i32 : i32, i32
  }
}

module attributes {stable_mosaic.version = 11 : i64} {
  func.func @kernel(%arg0: i32, %arg1: memref<1x8x32xf32, #tpu.memory_space<vmem>>, %arg2: memref<1x8x32xf32, #tpu.memory_space<vmem>>, %arg3: memref<1x1x8xf32, #tpu.memory_space<vmem>>, %arg4: memref<8x8xf32, #tpu.memory_space<vmem>>, %arg5: memref<32x32xf32, #tpu.memory_space<vmem>>, %arg6: memref<1x32xf32, #tpu.memory_space<vmem>>, %arg7: memref<32x64xf32, #tpu.memory_space<vmem>>, %arg8: memref<1x64xf32, #tpu.memory_space<vmem>>, %arg9: memref<32x32xf32, #tpu.memory_space<vmem>>, %arg10: memref<1x32xf32, #tpu.memory_space<vmem>>, %arg11: memref<1x32xf32, #tpu.memory_space<vmem>>, %arg12: memref<1x32xf32, #tpu.memory_space<vmem>>, %arg13: memref<1x8x32xf32, #tpu.memory_space<vmem>>) attributes {dimension_semantics = [#tpu.dimension_semantics<parallel>], iteration_bounds = array<i64: 2>, scalar_prefetch = 0 : i64, scratch_operands = 0 : i64, tpu.core_type = #tpu.core_type<tc>, window_params = [{transform_indices = @transform_0, window_bounds = array<i64: 1, 8, 32>}, {transform_indices = @transform_1, window_bounds = array<i64: 1, 8, 32>}, {transform_indices = @transform_2, window_bounds = array<i64: 1, 1, 8>}, {pipeline_mode = #tpu.pipeline_mode<synchronous>, transform_indices = @transform_3, window_bounds = array<i64: 8, 8>}, {pipeline_mode = #tpu.pipeline_mode<synchronous>, transform_indices = @transform_4, window_bounds = array<i64: 32, 32>}, {pipeline_mode = #tpu.pipeline_mode<synchronous>, transform_indices = @transform_5, window_bounds = array<i64: 1, 32>}, {pipeline_mode = #tpu.pipeline_mode<synchronous>, transform_indices = @transform_6, window_bounds = array<i64: 32, 64>}, {pipeline_mode = #tpu.pipeline_mode<synchronous>, transform_indices = @transform_7, window_bounds = array<i64: 1, 64>}, {pipeline_mode = #tpu.pipeline_mode<synchronous>, transform_indices = @transform_8, window_bounds = array<i64: 32, 32>}, {pipeline_mode = #tpu.pipeline_mode<synchronous>, transform_indices = @transform_9, window_bounds = array<i64: 1, 32>}, {pipeline_mode = #tpu.pipeline_mode<synchronous>, transform_indices = @transform_10, window_bounds = array<i64: 1, 32>}, {pipeline_mode = #tpu.pipeline_mode<synchronous>, transform_indices = @transform_11, window_bounds = array<i64: 1, 32>}, {transform_indices = @transform_12, window_bounds = array<i64: 1, 8, 32>}]} {
    %c0 = arith.constant 0 : index
    %c0_0 = arith.constant 0 : index
    %c0_1 = arith.constant 0 : index
    %0 = vector.load %arg1[%c0, %c0_0, %c0_1] : memref<1x8x32xf32, #tpu.memory_space<vmem>>, vector<1x8x32xf32>
    %1 = vector.shape_cast %0 : vector<1x8x32xf32> to vector<8x32xf32>
    %c0_2 = arith.constant 0 : index
    %c0_3 = arith.constant 0 : index
    %c0_4 = arith.constant 0 : index
    %2 = vector.load %arg2[%c0_2, %c0_3, %c0_4] : memref<1x8x32xf32, #tpu.memory_space<vmem>>, vector<1x8x32xf32>
    %3 = vector.shape_cast %2 : vector<1x8x32xf32> to vector<8x32xf32>
    %c0_5 = arith.constant 0 : index
    %c0_6 = arith.constant 0 : index
    %4 = vector.load %arg5[%c0_5, %c0_6] : memref<32x32xf32, #tpu.memory_space<vmem>>, vector<32x32xf32>
    %cst = arith.constant dense<0.000000e+00> : vector<8x32xf32>
    %5 = tpu.matmul %1, %4, %cst {dimension_numbers = #tpu.dot_dimension_numbers<[1], [0], [0], [1], [0, 0, 1, 1], [], []>} : vector<8x32xf32>, vector<32x32xf32>, vector<8x32xf32> -> vector<8x32xf32>
    %c0_7 = arith.constant 0 : index
    %c0_8 = arith.constant 0 : index
    %6 = vector.load %arg6[%c0_7, %c0_8] : memref<1x32xf32, #tpu.memory_space<vmem>>, vector<1x32xf32>
    %7 = vector.broadcast %6 : vector<1x32xf32> to vector<8x32xf32>
    %8 = arith.addf %5, %7 : vector<8x32xf32>
    %c0_9 = arith.constant 0 : index
    %c0_10 = arith.constant 0 : index
    %9 = vector.load %arg7[%c0_9, %c0_10] : memref<32x64xf32, #tpu.memory_space<vmem>>, vector<32x64xf32>
    %cst_11 = arith.constant dense<0.000000e+00> : vector<8x64xf32>
    %10 = tpu.matmul %3, %9, %cst_11 {dimension_numbers = #tpu.dot_dimension_numbers<[1], [0], [0], [1], [0, 0, 1, 1], [], []>} : vector<8x32xf32>, vector<32x64xf32>, vector<8x64xf32> -> vector<8x64xf32>
    %c0_12 = arith.constant 0 : index
    %c0_13 = arith.constant 0 : index
    %11 = vector.load %arg8[%c0_12, %c0_13] : memref<1x64xf32, #tpu.memory_space<vmem>>, vector<1x64xf32>
    %12 = vector.broadcast %11 : vector<1x64xf32> to vector<8x64xf32>
    %13 = arith.addf %10, %12 : vector<8x64xf32>
    %c0_14 = arith.constant 0 : index
    %c0_15 = arith.constant 0 : index
    %c0_16 = arith.constant 0 : index
    %14 = vector.load %arg3[%c0_14, %c0_15, %c0_16] : memref<1x1x8xf32, #tpu.memory_space<vmem>>, vector<1x1x8xf32>
    %15 = vector.shape_cast %14 : vector<1x1x8xf32> to vector<1x8xf32>
    %c0_17 = arith.constant 0 : index
    %c0_18 = arith.constant 0 : index
    %16 = vector.load %arg4[%c0_17, %c0_18] : memref<8x8xf32, #tpu.memory_space<vmem>>, vector<8x8xf32>
    %17 = vector.broadcast %15 : vector<1x8xf32> to vector<8x8xf32>
    %18 = arith.maximumf %17, %16 : vector<8x8xf32>
    %cst_19 = arith.constant 5.000000e-01 : f32
    %19 = vector.broadcast %cst_19 : f32 to vector<8x8xf32>
    %20 = arith.cmpf ogt, %18, %19 : vector<8x8xf32>
    %cst_20 = arith.constant -1.000000e+30 : f32
    %cst_21 = arith.constant 0.000000e+00 : f32
    %21 = vector.broadcast %cst_20 : f32 to vector<8x8xf32>
    %22 = vector.broadcast %cst_21 : f32 to vector<8x8xf32>
    %23 = arith.select %20, %21, %22 : vector<8x8xi1>, vector<8x8xf32>
    %24 = vector.extract_strided_slice %8 {offsets = [0, 0], sizes = [8, 8], strides = [1, 1]} : vector<8x32xf32> to vector<8x8xf32>
    %25 = vector.extract_strided_slice %13 {offsets = [0, 0], sizes = [8, 8], strides = [1, 1]} : vector<8x64xf32> to vector<8x8xf32>
    %26 = vector.extract_strided_slice %13 {offsets = [0, 32], sizes = [8, 8], strides = [1, 1]} : vector<8x64xf32> to vector<8x8xf32>
    %cst_22 = arith.constant dense<0.000000e+00> : vector<8x8xf32>
    %27 = tpu.matmul %24, %25, %cst_22 {dimension_numbers = #tpu.dot_dimension_numbers<[1], [1], [0], [0], [0, 0, 1, 0], [], []>} : vector<8x8xf32>, vector<8x8xf32>, vector<8x8xf32> -> vector<8x8xf32>
    %cst_23 = arith.constant 0.353553385 : f32
    %28 = vector.broadcast %cst_23 : f32 to vector<8x8xf32>
    %29 = arith.mulf %27, %28 : vector<8x8xf32>
    %30 = arith.addf %29, %23 : vector<8x8xf32>
    %cst_24 = arith.constant dense<0xFF800000> : vector<8xf32>
    %31 = vector.multi_reduction <maximumf>, %30, %cst_24 [1] : vector<8x8xf32> to vector<8xf32>
    %32 = vector.shape_cast %31 : vector<8xf32> to vector<8x1xf32>
    %33 = vector.broadcast %32 : vector<8x1xf32> to vector<8x8xf32>
    %34 = arith.subf %30, %33 : vector<8x8xf32>
    %35 = math.exp %34 : vector<8x8xf32>
    %cst_25 = arith.constant dense<0.000000e+00> : vector<8xf32>
    %36 = vector.multi_reduction <add>, %35, %cst_25 [1] : vector<8x8xf32> to vector<8xf32>
    %37 = vector.shape_cast %36 : vector<8xf32> to vector<8x1xf32>
    %38 = tpu.reciprocal %37 {approx = true} : vector<8x1xf32> -> vector<8x1xf32>
    %39 = vector.broadcast %38 : vector<8x1xf32> to vector<8x8xf32>
    %40 = arith.mulf %35, %39 : vector<8x8xf32>
    %cst_26 = arith.constant dense<0.000000e+00> : vector<8x8xf32>
    %41 = tpu.matmul %40, %26, %cst_26 {dimension_numbers = #tpu.dot_dimension_numbers<[1], [0], [0], [1], [0, 0, 1, 1], [], []>} : vector<8x8xf32>, vector<8x8xf32>, vector<8x8xf32> -> vector<8x8xf32>
    %42 = vector.extract_strided_slice %8 {offsets = [0, 8], sizes = [8, 8], strides = [1, 1]} : vector<8x32xf32> to vector<8x8xf32>
    %43 = vector.extract_strided_slice %13 {offsets = [0, 8], sizes = [8, 8], strides = [1, 1]} : vector<8x64xf32> to vector<8x8xf32>
    %44 = vector.extract_strided_slice %13 {offsets = [0, 40], sizes = [8, 8], strides = [1, 1]} : vector<8x64xf32> to vector<8x8xf32>
    %cst_27 = arith.constant dense<0.000000e+00> : vector<8x8xf32>
    %45 = tpu.matmul %42, %43, %cst_27 {dimension_numbers = #tpu.dot_dimension_numbers<[1], [1], [0], [0], [0, 0, 1, 0], [], []>} : vector<8x8xf32>, vector<8x8xf32>, vector<8x8xf32> -> vector<8x8xf32>
    %cst_28 = arith.constant 0.353553385 : f32
    %46 = vector.broadcast %cst_28 : f32 to vector<8x8xf32>
    %47 = arith.mulf %45, %46 : vector<8x8xf32>
    %48 = arith.addf %47, %23 : vector<8x8xf32>
    %cst_29 = arith.constant dense<0xFF800000> : vector<8xf32>
    %49 = vector.multi_reduction <maximumf>, %48, %cst_29 [1] : vector<8x8xf32> to vector<8xf32>
    %50 = vector.shape_cast %49 : vector<8xf32> to vector<8x1xf32>
    %51 = vector.broadcast %50 : vector<8x1xf32> to vector<8x8xf32>
    %52 = arith.subf %48, %51 : vector<8x8xf32>
    %53 = math.exp %52 : vector<8x8xf32>
    %cst_30 = arith.constant dense<0.000000e+00> : vector<8xf32>
    %54 = vector.multi_reduction <add>, %53, %cst_30 [1] : vector<8x8xf32> to vector<8xf32>
    %55 = vector.shape_cast %54 : vector<8xf32> to vector<8x1xf32>
    %56 = tpu.reciprocal %55 {approx = true} : vector<8x1xf32> -> vector<8x1xf32>
    %57 = vector.broadcast %56 : vector<8x1xf32> to vector<8x8xf32>
    %58 = arith.mulf %53, %57 : vector<8x8xf32>
    %cst_31 = arith.constant dense<0.000000e+00> : vector<8x8xf32>
    %59 = tpu.matmul %58, %44, %cst_31 {dimension_numbers = #tpu.dot_dimension_numbers<[1], [0], [0], [1], [0, 0, 1, 1], [], []>} : vector<8x8xf32>, vector<8x8xf32>, vector<8x8xf32> -> vector<8x8xf32>
    %60 = vector.extract_strided_slice %8 {offsets = [0, 16], sizes = [8, 8], strides = [1, 1]} : vector<8x32xf32> to vector<8x8xf32>
    %61 = vector.extract_strided_slice %13 {offsets = [0, 16], sizes = [8, 8], strides = [1, 1]} : vector<8x64xf32> to vector<8x8xf32>
    %62 = vector.extract_strided_slice %13 {offsets = [0, 48], sizes = [8, 8], strides = [1, 1]} : vector<8x64xf32> to vector<8x8xf32>
    %cst_32 = arith.constant dense<0.000000e+00> : vector<8x8xf32>
    %63 = tpu.matmul %60, %61, %cst_32 {dimension_numbers = #tpu.dot_dimension_numbers<[1], [1], [0], [0], [0, 0, 1, 0], [], []>} : vector<8x8xf32>, vector<8x8xf32>, vector<8x8xf32> -> vector<8x8xf32>
    %cst_33 = arith.constant 0.353553385 : f32
    %64 = vector.broadcast %cst_33 : f32 to vector<8x8xf32>
    %65 = arith.mulf %63, %64 : vector<8x8xf32>
    %66 = arith.addf %65, %23 : vector<8x8xf32>
    %cst_34 = arith.constant dense<0xFF800000> : vector<8xf32>
    %67 = vector.multi_reduction <maximumf>, %66, %cst_34 [1] : vector<8x8xf32> to vector<8xf32>
    %68 = vector.shape_cast %67 : vector<8xf32> to vector<8x1xf32>
    %69 = vector.broadcast %68 : vector<8x1xf32> to vector<8x8xf32>
    %70 = arith.subf %66, %69 : vector<8x8xf32>
    %71 = math.exp %70 : vector<8x8xf32>
    %cst_35 = arith.constant dense<0.000000e+00> : vector<8xf32>
    %72 = vector.multi_reduction <add>, %71, %cst_35 [1] : vector<8x8xf32> to vector<8xf32>
    %73 = vector.shape_cast %72 : vector<8xf32> to vector<8x1xf32>
    %74 = tpu.reciprocal %73 {approx = true} : vector<8x1xf32> -> vector<8x1xf32>
    %75 = vector.broadcast %74 : vector<8x1xf32> to vector<8x8xf32>
    %76 = arith.mulf %71, %75 : vector<8x8xf32>
    %cst_36 = arith.constant dense<0.000000e+00> : vector<8x8xf32>
    %77 = tpu.matmul %76, %62, %cst_36 {dimension_numbers = #tpu.dot_dimension_numbers<[1], [0], [0], [1], [0, 0, 1, 1], [], []>} : vector<8x8xf32>, vector<8x8xf32>, vector<8x8xf32> -> vector<8x8xf32>
    %78 = vector.extract_strided_slice %8 {offsets = [0, 24], sizes = [8, 8], strides = [1, 1]} : vector<8x32xf32> to vector<8x8xf32>
    %79 = vector.extract_strided_slice %13 {offsets = [0, 24], sizes = [8, 8], strides = [1, 1]} : vector<8x64xf32> to vector<8x8xf32>
    %80 = vector.extract_strided_slice %13 {offsets = [0, 56], sizes = [8, 8], strides = [1, 1]} : vector<8x64xf32> to vector<8x8xf32>
    %cst_37 = arith.constant dense<0.000000e+00> : vector<8x8xf32>
    %81 = tpu.matmul %78, %79, %cst_37 {dimension_numbers = #tpu.dot_dimension_numbers<[1], [1], [0], [0], [0, 0, 1, 0], [], []>} : vector<8x8xf32>, vector<8x8xf32>, vector<8x8xf32> -> vector<8x8xf32>
    %cst_38 = arith.constant 0.353553385 : f32
    %82 = vector.broadcast %cst_38 : f32 to vector<8x8xf32>
    %83 = arith.mulf %81, %82 : vector<8x8xf32>
    %84 = arith.addf %83, %23 : vector<8x8xf32>
    %cst_39 = arith.constant dense<0xFF800000> : vector<8xf32>
    %85 = vector.multi_reduction <maximumf>, %84, %cst_39 [1] : vector<8x8xf32> to vector<8xf32>
    %86 = vector.shape_cast %85 : vector<8xf32> to vector<8x1xf32>
    %87 = vector.broadcast %86 : vector<8x1xf32> to vector<8x8xf32>
    %88 = arith.subf %84, %87 : vector<8x8xf32>
    %89 = math.exp %88 : vector<8x8xf32>
    %cst_40 = arith.constant dense<0.000000e+00> : vector<8xf32>
    %90 = vector.multi_reduction <add>, %89, %cst_40 [1] : vector<8x8xf32> to vector<8xf32>
    %91 = vector.shape_cast %90 : vector<8xf32> to vector<8x1xf32>
    %92 = tpu.reciprocal %91 {approx = true} : vector<8x1xf32> -> vector<8x1xf32>
    %93 = vector.broadcast %92 : vector<8x1xf32> to vector<8x8xf32>
    %94 = arith.mulf %89, %93 : vector<8x8xf32>
    %cst_41 = arith.constant dense<0.000000e+00> : vector<8x8xf32>
    %95 = tpu.matmul %94, %80, %cst_41 {dimension_numbers = #tpu.dot_dimension_numbers<[1], [0], [0], [1], [0, 0, 1, 1], [], []>} : vector<8x8xf32>, vector<8x8xf32>, vector<8x8xf32> -> vector<8x8xf32>
    %96 = tpu.concatenate %41, %59, %77, %95 in 1 : vector<8x8xf32>, vector<8x8xf32>, vector<8x8xf32>, vector<8x8xf32> -> vector<8x32xf32>
    %c0_42 = arith.constant 0 : index
    %c0_43 = arith.constant 0 : index
    %97 = vector.load %arg9[%c0_42, %c0_43] : memref<32x32xf32, #tpu.memory_space<vmem>>, vector<32x32xf32>
    %cst_44 = arith.constant dense<0.000000e+00> : vector<8x32xf32>
    %98 = tpu.matmul %96, %97, %cst_44 {dimension_numbers = #tpu.dot_dimension_numbers<[1], [0], [0], [1], [0, 0, 1, 1], [], []>} : vector<8x32xf32>, vector<32x32xf32>, vector<8x32xf32> -> vector<8x32xf32>
    %c0_45 = arith.constant 0 : index
    %c0_46 = arith.constant 0 : index
    %99 = vector.load %arg10[%c0_45, %c0_46] : memref<1x32xf32, #tpu.memory_space<vmem>>, vector<1x32xf32>
    %100 = vector.broadcast %99 : vector<1x32xf32> to vector<8x32xf32>
    %101 = arith.addf %98, %100 : vector<8x32xf32>
    %102 = arith.addf %101, %1 : vector<8x32xf32>
    %cst_47 = arith.constant dense<0.000000e+00> : vector<8xf32>
    %103 = vector.multi_reduction <add>, %102, %cst_47 [1] : vector<8x32xf32> to vector<8xf32>
    %104 = vector.shape_cast %103 : vector<8xf32> to vector<8x1xf32>
    %cst_48 = arith.constant 3.200000e+01 : f32
    %105 = vector.broadcast %cst_48 : f32 to vector<8x1xf32>
    %106 = arith.divf %104, %105 : vector<8x1xf32>
    %107 = vector.broadcast %106 : vector<8x1xf32> to vector<8x32xf32>
    %108 = arith.subf %102, %107 : vector<8x32xf32>
    %109 = arith.mulf %108, %108 : vector<8x32xf32>
    %cst_49 = arith.constant dense<0.000000e+00> : vector<8xf32>
    %110 = vector.multi_reduction <add>, %109, %cst_49 [1] : vector<8x32xf32> to vector<8xf32>
    %111 = vector.shape_cast %110 : vector<8xf32> to vector<8x1xf32>
    %cst_50 = arith.constant 0.0322580636 : f32
    %112 = vector.broadcast %cst_50 : f32 to vector<8x1xf32>
    %113 = arith.mulf %111, %112 : vector<8x1xf32>
    %114 = vector.broadcast %106 : vector<8x1xf32> to vector<8x32xf32>
    %115 = arith.subf %102, %114 : vector<8x32xf32>
    %116 = math.rsqrt %113 : vector<8x1xf32>
    %117 = vector.broadcast %116 : vector<8x1xf32> to vector<8x32xf32>
    %118 = arith.mulf %115, %117 : vector<8x32xf32>
    %cst_51 = arith.constant 9.99999974E-6 : f32
    %119 = vector.broadcast %cst_51 : f32 to vector<8x32xf32>
    %120 = arith.addf %118, %119 : vector<8x32xf32>
    %c0_52 = arith.constant 0 : index
    %c0_53 = arith.constant 0 : index
    %121 = vector.load %arg11[%c0_52, %c0_53] : memref<1x32xf32, #tpu.memory_space<vmem>>, vector<1x32xf32>
    %122 = vector.broadcast %121 : vector<1x32xf32> to vector<8x32xf32>
    %123 = arith.mulf %120, %122 : vector<8x32xf32>
    %c0_54 = arith.constant 0 : index
    %c0_55 = arith.constant 0 : index
    %124 = vector.load %arg12[%c0_54, %c0_55] : memref<1x32xf32, #tpu.memory_space<vmem>>, vector<1x32xf32>
    %125 = vector.broadcast %124 : vector<1x32xf32> to vector<8x32xf32>
    %126 = arith.addf %123, %125 : vector<8x32xf32>
    %c0_56 = arith.constant 0 : index
    %c0_57 = arith.constant 0 : index
    %c0_58 = arith.constant 0 : index
    %127 = vector.load %arg13[%c0_56, %c0_57, %c0_58] : memref<1x8x32xf32, #tpu.memory_space<vmem>>, vector<1x8x32xf32>
    %128 = vector.shape_cast %127 : vector<1x8x32xf32> to vector<8x32xf32>
    %129 = vector.shape_cast %126 : vector<8x32xf32> to vector<1x8x32xf32>
    tpu.vector_store %arg13[%c0_56, %c0_57, %c0_58], %129 {strides = array<i32>} : memref<1x8x32xf32, #tpu.memory_space<vmem>>, vector<1x8x32xf32>,
    return
  }
  func.func @transform_0(%arg0: i32) -> (i32, i32, i32) {
    %c0_i32 = arith.constant 0 : i32
    %c0_i32_0 = arith.constant 0 : i32
    %c0_i32_1 = arith.constant 0 : i32
    return %arg0, %c0_i32, %c0_i32_0 : i32, i32, i32
  }
  func.func @transform_1(%arg0: i32) -> (i32, i32, i32) {
    %c0_i32 = arith.constant 0 : i32
    %c0_i32_0 = arith.constant 0 : i32
    %c0_i32_1 = arith.constant 0 : i32
    return %arg0, %c0_i32, %c0_i32_0 : i32, i32, i32
  }
  func.func @transform_2(%arg0: i32) -> (i32, i32, i32) {
    %c0_i32 = arith.constant 0 : i32
    %c0_i32_0 = arith.constant 0 : i32
    %c0_i32_1 = arith.constant 0 : i32
    return %arg0, %c0_i32, %c0_i32_0 : i32, i32, i32
  }
  func.func @transform_3(%arg0: i32) -> (i32, i32) {
    %c0_i32 = arith.constant 0 : i32
    %c0_i32_0 = arith.constant 0 : i32
    %c0_i32_1 = arith.constant 0 : i32
    return %c0_i32, %c0_i32_0 : i32, i32
  }
  func.func @transform_4(%arg0: i32) -> (i32, i32) {
    %c0_i32 = arith.constant 0 : i32
    %c0_i32_0 = arith.constant 0 : i32
    %c0_i32_1 = arith.constant 0 : i32
    return %c0_i32, %c0_i32_0 : i32, i32
  }
  func.func @transform_5(%arg0: i32) -> (i32, i32) {
    %c0_i32 = arith.constant 0 : i32
    %c0_i32_0 = arith.constant 0 : i32
    %c0_i32_1 = arith.constant 0 : i32
    return %c0_i32, %c0_i32_0 : i32, i32
  }
  func.func @transform_6(%arg0: i32) -> (i32, i32) {
    %c0_i32 = arith.constant 0 : i32
    %c0_i32_0 = arith.constant 0 : i32
    %c0_i32_1 = arith.constant 0 : i32
    return %c0_i32, %c0_i32_0 : i32, i32
  }
  func.func @transform_7(%arg0: i32) -> (i32, i32) {
    %c0_i32 = arith.constant 0 : i32
    %c0_i32_0 = arith.constant 0 : i32
    %c0_i32_1 = arith.constant 0 : i32
    return %c0_i32, %c0_i32_0 : i32, i32
  }
  func.func @transform_8(%arg0: i32) -> (i32, i32) {
    %c0_i32 = arith.constant 0 : i32
    %c0_i32_0 = arith.constant 0 : i32
    %c0_i32_1 = arith.constant 0 : i32
    return %c0_i32, %c0_i32_0 : i32, i32
  }
  func.func @transform_9(%arg0: i32) -> (i32, i32) {
    %c0_i32 = arith.constant 0 : i32
    %c0_i32_0 = arith.constant 0 : i32
    %c0_i32_1 = arith.constant 0 : i32
    return %c0_i32, %c0_i32_0 : i32, i32
  }
  func.func @transform_10(%arg0: i32) -> (i32, i32) {
    %c0_i32 = arith.constant 0 : i32
    %c0_i32_0 = arith.constant 0 : i32
    %c0_i32_1 = arith.constant 0 : i32
    return %c0_i32, %c0_i32_0 : i32, i32
  }
  func.func @transform_11(%arg0: i32) -> (i32, i32) {
    %c0_i32 = arith.constant 0 : i32
    %c0_i32_0 = arith.constant 0 : i32
    %c0_i32_1 = arith.constant 0 : i32
    return %c0_i32, %c0_i32_0 : i32, i32
  }
  func.func @transform_12(%arg0: i32) -> (i32, i32, i32) {
    %c0_i32 = arith.constant 0 : i32
    %c0_i32_0 = arith.constant 0 : i32
    %c0_i32_1 = arith.constant 0 : i32
    return %arg0, %c0_i32, %c0_i32_0 : i32, i32, i32
  }
}

module attributes {stable_mosaic.version = 11 : i64} {
  func.func @kernel(%arg0: i32, %arg1: memref<8x32xf32, #tpu.memory_space<vmem>>, %arg2: memref<32x64xf32, #tpu.memory_space<vmem>>, %arg3: memref<1x64xf32, #tpu.memory_space<vmem>>, %arg4: memref<64x32xf32, #tpu.memory_space<vmem>>, %arg5: memref<1x32xf32, #tpu.memory_space<vmem>>, %arg6: memref<1x32xf32, #tpu.memory_space<vmem>>, %arg7: memref<1x32xf32, #tpu.memory_space<vmem>>, %arg8: memref<8x32xf32, #tpu.memory_space<vmem>>) attributes {dimension_semantics = [#tpu.dimension_semantics<parallel>], iteration_bounds = array<i64: 2>, scalar_prefetch = 0 : i64, scratch_operands = 0 : i64, tpu.core_type = #tpu.core_type<tc>, window_params = [{transform_indices = @transform_0, window_bounds = array<i64: 8, 32>}, {pipeline_mode = #tpu.pipeline_mode<synchronous>, transform_indices = @transform_1, window_bounds = array<i64: 32, 64>}, {pipeline_mode = #tpu.pipeline_mode<synchronous>, transform_indices = @transform_2, window_bounds = array<i64: 1, 64>}, {pipeline_mode = #tpu.pipeline_mode<synchronous>, transform_indices = @transform_3, window_bounds = array<i64: 64, 32>}, {pipeline_mode = #tpu.pipeline_mode<synchronous>, transform_indices = @transform_4, window_bounds = array<i64: 1, 32>}, {pipeline_mode = #tpu.pipeline_mode<synchronous>, transform_indices = @transform_5, window_bounds = array<i64: 1, 32>}, {pipeline_mode = #tpu.pipeline_mode<synchronous>, transform_indices = @transform_6, window_bounds = array<i64: 1, 32>}, {transform_indices = @transform_7, window_bounds = array<i64: 8, 32>}]} {
    %c0 = arith.constant 0 : index
    %c0_0 = arith.constant 0 : index
    %0 = vector.load %arg1[%c0, %c0_0] : memref<8x32xf32, #tpu.memory_space<vmem>>, vector<8x32xf32>
    %c0_1 = arith.constant 0 : index
    %c0_2 = arith.constant 0 : index
    %1 = vector.load %arg2[%c0_1, %c0_2] : memref<32x64xf32, #tpu.memory_space<vmem>>, vector<32x64xf32>
    %cst = arith.constant dense<0.000000e+00> : vector<8x64xf32>
    %2 = tpu.matmul %0, %1, %cst {dimension_numbers = #tpu.dot_dimension_numbers<[1], [0], [0], [1], [0, 0, 1, 1], [], []>} : vector<8x32xf32>, vector<32x64xf32>, vector<8x64xf32> -> vector<8x64xf32>
    %c0_3 = arith.constant 0 : index
    %c0_4 = arith.constant 0 : index
    %3 = vector.load %arg3[%c0_3, %c0_4] : memref<1x64xf32, #tpu.memory_space<vmem>>, vector<1x64xf32>
    %4 = vector.broadcast %3 : vector<1x64xf32> to vector<8x64xf32>
    %5 = arith.addf %2, %4 : vector<8x64xf32>
    %cst_5 = arith.constant 0.000000e+00 : f32
    %6 = vector.broadcast %cst_5 : f32 to vector<8x64xf32>
    %7 = arith.maximumf %5, %6 : vector<8x64xf32>
    %c0_6 = arith.constant 0 : index
    %c0_7 = arith.constant 0 : index
    %8 = vector.load %arg4[%c0_6, %c0_7] : memref<64x32xf32, #tpu.memory_space<vmem>>, vector<64x32xf32>
    %cst_8 = arith.constant dense<0.000000e+00> : vector<8x32xf32>
    %9 = tpu.matmul %7, %8, %cst_8 {dimension_numbers = #tpu.dot_dimension_numbers<[1], [0], [0], [1], [0, 0, 1, 1], [], []>} : vector<8x64xf32>, vector<64x32xf32>, vector<8x32xf32> -> vector<8x32xf32>
    %c0_9 = arith.constant 0 : index
    %c0_10 = arith.constant 0 : index
    %10 = vector.load %arg5[%c0_9, %c0_10] : memref<1x32xf32, #tpu.memory_space<vmem>>, vector<1x32xf32>
    %11 = vector.broadcast %10 : vector<1x32xf32> to vector<8x32xf32>
    %12 = arith.addf %9, %11 : vector<8x32xf32>
    %13 = arith.addf %12, %0 : vector<8x32xf32>
    %cst_11 = arith.constant dense<0.000000e+00> : vector<8xf32>
    %14 = vector.multi_reduction <add>, %13, %cst_11 [1] : vector<8x32xf32> to vector<8xf32>
    %15 = vector.shape_cast %14 : vector<8xf32> to vector<8x1xf32>
    %cst_12 = arith.constant 3.200000e+01 : f32
    %16 = vector.broadcast %cst_12 : f32 to vector<8x1xf32>
    %17 = arith.divf %15, %16 : vector<8x1xf32>
    %18 = vector.broadcast %17 : vector<8x1xf32> to vector<8x32xf32>
    %19 = arith.subf %13, %18 : vector<8x32xf32>
    %20 = arith.mulf %19, %19 : vector<8x32xf32>
    %cst_13 = arith.constant dense<0.000000e+00> : vector<8xf32>
    %21 = vector.multi_reduction <add>, %20, %cst_13 [1] : vector<8x32xf32> to vector<8xf32>
    %22 = vector.shape_cast %21 : vector<8xf32> to vector<8x1xf32>
    %cst_14 = arith.constant 0.0322580636 : f32
    %23 = vector.broadcast %cst_14 : f32 to vector<8x1xf32>
    %24 = arith.mulf %22, %23 : vector<8x1xf32>
    %25 = vector.broadcast %17 : vector<8x1xf32> to vector<8x32xf32>
    %26 = arith.subf %13, %25 : vector<8x32xf32>
    %27 = math.rsqrt %24 : vector<8x1xf32>
    %28 = vector.broadcast %27 : vector<8x1xf32> to vector<8x32xf32>
    %29 = arith.mulf %26, %28 : vector<8x32xf32>
    %cst_15 = arith.constant 9.99999974E-6 : f32
    %30 = vector.broadcast %cst_15 : f32 to vector<8x32xf32>
    %31 = arith.addf %29, %30 : vector<8x32xf32>
    %c0_16 = arith.constant 0 : index
    %c0_17 = arith.constant 0 : index
    %32 = vector.load %arg6[%c0_16, %c0_17] : memref<1x32xf32, #tpu.memory_space<vmem>>, vector<1x32xf32>
    %33 = vector.broadcast %32 : vector<1x32xf32> to vector<8x32xf32>
    %34 = arith.mulf %31, %33 : vector<8x32xf32>
    %c0_18 = arith.constant 0 : index
    %c0_19 = arith.constant 0 : index
    %35 = vector.load %arg7[%c0_18, %c0_19] : memref<1x32xf32, #tpu.memory_space<vmem>>, vector<1x32xf32>
    %36 = vector.broadcast %35 : vector<1x32xf32> to vector<8x32xf32>
    %37 = arith.addf %34, %36 : vector<8x32xf32>
    %c0_20 = arith.constant 0 : index
    %c0_21 = arith.constant 0 : index
    %38 = vector.load %arg8[%c0_20, %c0_21] : memref<8x32xf32, #tpu.memory_space<vmem>>, vector<8x32xf32>
    tpu.vector_store %arg8[%c0_20, %c0_21], %37 {strides = array<i32>} : memref<8x32xf32, #tpu.memory_space<vmem>>, vector<8x32xf32>,
    return
  }
  func.func @transform_0(%arg0: i32) -> (i32, i32) {
    %c0_i32 = arith.constant 0 : i32
    %c0_i32_0 = arith.constant 0 : i32
    return %arg0, %c0_i32 : i32, i32
  }
  func.func @transform_1(%arg0: i32) -> (i32, i32) {
    %c0_i32 = arith.constant 0 : i32
    %c0_i32_0 = arith.constant 0 : i32
    %c0_i32_1 = arith.constant 0 : i32
    return %c0_i32, %c0_i32_0 : i32, i32
  }
  func.func @transform_2(%arg0: i32) -> (i32, i32) {
    %c0_i32 = arith.constant 0 : i32
    %c0_i32_0 = arith.constant 0 : i32
    %c0_i32_1 = arith.constant 0 : i32
    return %c0_i32, %c0_i32_0 : i32, i32
  }
  func.func @transform_3(%arg0: i32) -> (i32, i32) {
    %c0_i32 = arith.constant 0 : i32
    %c0_i32_0 = arith.constant 0 : i32
    %c0_i32_1 = arith.constant 0 : i32
    return %c0_i32, %c0_i32_0 : i32, i32
  }
  func.func @transform_4(%arg0: i32) -> (i32, i32) {
    %c0_i32 = arith.constant 0 : i32
    %c0_i32_0 = arith.constant 0 : i32
    %c0_i32_1 = arith.constant 0 : i32
    return %c0_i32, %c0_i32_0 : i32, i32
  }
  func.func @transform_5(%arg0: i32) -> (i32, i32) {
    %c0_i32 = arith.constant 0 : i32
    %c0_i32_0 = arith.constant 0 : i32
    %c0_i32_1 = arith.constant 0 : i32
    return %c0_i32, %c0_i32_0 : i32, i32
  }
  func.func @transform_6(%arg0: i32) -> (i32, i32) {
    %c0_i32 = arith.constant 0 : i32
    %c0_i32_0 = arith.constant 0 : i32
    %c0_i32_1 = arith.constant 0 : i32
    return %c0_i32, %c0_i32_0 : i32, i32
  }
  func.func @transform_7(%arg0: i32) -> (i32, i32) {
    %c0_i32 = arith.constant 0 : i32
    %c0_i32_0 = arith.constant 0 : i32
    return %arg0, %c0_i32 : i32, i32
  }
}

</mosaic_0001>

<llo_original>
// kernel: transformer_decoder_forward.8
$region0: #{transformer_decoder_forward.8}
  #allocation0 [shape = 'u32[]', space=smem, size = 0x4, offset = 0x4, fixed_abs, tag = 'smem constant byte address 0x4 - core index']
  #allocation1 [shape = 'u32[144,128]{1,0:T(1,128)}', space=vmem, size = 0x12000, scoped, tag = 'internal scratch']
  %s0 = inlined_call_operand.vmem [shape: f32[16,32], index: 0, kind: input, shape index: {}]
  %s1 = inlined_call_operand.vmem [shape: f32[32,64], index: 1, kind: input, shape index: {}]
  %s2 = inlined_call_operand.vmem [shape: f32[1,64], index: 2, kind: input, shape index: {}]
  %s3 = inlined_call_operand.vmem [shape: f32[64,32], index: 3, kind: input, shape index: {}]
  %s4 = inlined_call_operand.vmem [shape: f32[1,32], index: 4, kind: input, shape index: {}]
  %s5 = inlined_call_operand.vmem [shape: f32[1,32], index: 5, kind: input, shape index: {}]
  %s6 = inlined_call_operand.vmem [shape: f32[1,32], index: 6, kind: input, shape index: {}]
  %s7 = inlined_call_operand.vmem [shape: f32[16,32], index: 7, kind: output, shape index: {}]
  %s8 = sld [smem:[#allocation0]]
  $region61: #{transformer_decoder_forward.8} parent=0
    _
  %s10 = ssub.s32 1, %s8
  %s11 = scalar_select 0, %s10, %s8
  loop: start=0, step=1, limit=4
  $region2: #{transformer_decoder_forward.8} parent=0 // loop_pre_header
    _
  $region3: #{transformer_decoder_forward.8} parent=0 // loop_header
    %s13 = sphi 0, %s17
    %p14 = scmp.ge.s32.totalorder %s13, 4
    %s23 = sphi 0, %s25
    %s26 = sphi 0, %s23
    %s27 = sphi 0, %s26
    %s43 = sphi 0, %s27
    %s47 = sphi 0, %s47
    %s49 = sphi 0, %s47
    %s50 = sphi 0, %s49
    %s64 = sphi 0, %s50
    %s68 = sphi 0, %s68
    %s70 = sphi 0, %s68
    %s71 = sphi 0, %s70
    %s85 = sphi 0, %s71
    %s89 = sphi 0, %s89
    %s91 = sphi 0, %s89
    %s92 = sphi 0, %s91
    %s106 = sphi 0, %s92
    %s110 = sphi 0, %s110
    %s112 = sphi 0, %s110
    %s113 = sphi 0, %s112
    %s127 = sphi 0, %s113
    %s131 = sphi 0, %s131
    %s133 = sphi 0, %s131
    %s134 = sphi 0, %s133
    %s148 = sphi 0, %s134
    %s152 = sphi 0, %s152
    %s154 = sphi 0, %s152
    %s155 = sphi 0, %s154
    %s169 = sphi 0, %s155
    %s175 = sphi 0, %s177
    %s178 = sphi 0, %s175
    %s179 = sphi 0, %s178
    %s195 = sphi 0, %s179
  $region4: #{transformer_decoder_forward.8} parent=0 // loop_header_branch
    %16 = sbr.rel (%p14) target = $region8
  $region5: #{transformer_decoder_forward.8} parent=0 // loop_body
    %s18 = ssub.s32 %s13, 1
    %s19 = ssub.s32 %s13, 2
    %s20 = sadd.s32 %s13, 1
    %s21 = ssub.s32 %s13, %s20
    %p22 = scmp.eq.s32.totalorder %s21, 0
    %s24 = sadd.s32 %s23, 1
    %s25 = scalar_select %p22, %s23, %s24
    %p28 = pneg %p22
    %p29 = scmp.eq.s32.totalorder %s13, 1
    %p30 = por %p28, %p29
    %p31 = scmp.ne.s32.totalorder %s23, %s26
    %p32 = scmp.eq.s32.totalorder %s13, 0
    %p33 = por %p31, %p32
    %p34 = scmp.ne.s32.totalorder %s23, %s26
    %p35 = scmp.eq.s32.totalorder %s18, 1
    %p36 = por %p34, %p35
    %p37 = scmp.ne.s32.totalorder %s26, %s27
    %p38 = scmp.eq.s32.totalorder %s18, 0
    %p39 = por %p37, %p38
    %p40 = scmp.ne.s32.totalorder %s26, %s27
    %p41 = scmp.eq.s32.totalorder %s19, 1
    %p42 = por %p40, %p41
    %p44 = scmp.ne.s32.totalorder %s27, %s43
    %p45 = scmp.eq.s32.totalorder %s19, 0
    %p46 = por %p44, %p45
    %s48 = sadd.s32 %s47, 1
    %p51 = scmp.eq.s32.totalorder %s13, 1
    %p52 = scmp.ne.s32.totalorder %s47, %s49
    %p53 = scmp.eq.s32.totalorder %s13, 0
    %p54 = por %p52, %p53
    %p55 = scmp.ne.s32.totalorder %s47, %s49
    %p56 = scmp.eq.s32.totalorder %s18, 1
    %p57 = por %p55, %p56
    %p58 = scmp.ne.s32.totalorder %s49, %s50
    %p59 = scmp.eq.s32.totalorder %s18, 0
    %p60 = por %p58, %p59
    %p61 = scmp.ne.s32.totalorder %s49, %s50
    %p62 = scmp.eq.s32.totalorder %s19, 1
    %p63 = por %p61, %p62
    %p65 = scmp.ne.s32.totalorder %s50, %s64
    %p66 = scmp.eq.s32.totalorder %s19, 0
    %p67 = por %p65, %p66
    %s69 = sadd.s32 %s68, 1
    %p72 = scmp.eq.s32.totalorder %s13, 1
    %p73 = scmp.ne.s32.totalorder %s68, %s70
    %p74 = scmp.eq.s32.totalorder %s13, 0
    %p75 = por %p73, %p74
    %p76 = scmp.ne.s32.totalorder %s68, %s70
    %p77 = scmp.eq.s32.totalorder %s18, 1
    %p78 = por %p76, %p77
    %p79 = scmp.ne.s32.totalorder %s70, %s71
    %p80 = scmp.eq.s32.totalorder %s18, 0
    %p81 = por %p79, %p80
    %p82 = scmp.ne.s32.totalorder %s70, %s71
    %p83 = scmp.eq.s32.totalorder %s19, 1
    %p84 = por %p82, %p83
    %p86 = scmp.ne.s32.totalorder %s71, %s85
    %p87 = scmp.eq.s32.totalorder %s19, 0
    %p88 = por %p86, %p87
    %s90 = sadd.s32 %s89, 1
    %p93 = scmp.eq.s32.totalorder %s13, 1
    %p94 = scmp.ne.s32.totalorder %s89, %s91
    %p95 = scmp.eq.s32.totalorder %s13, 0
    %p96 = por %p94, %p95
    %p97 = scmp.ne.s32.totalorder %s89, %s91
    %p98 = scmp.eq.s32.totalorder %s18, 1
    %p99 = por %p97, %p98
    %p100 = scmp.ne.s32.totalorder %s91, %s92
    %p101 = scmp.eq.s32.totalorder %s18, 0
    %p102 = por %p100, %p101
    %p103 = scmp.ne.s32.totalorder %s91, %s92
    %p104 = scmp.eq.s32.totalorder %s19, 1
    %p105 = por %p103, %p104
    %p107 = scmp.ne.s32.totalorder %s92, %s106
    %p108 = scmp.eq.s32.totalorder %s19, 0
    %p109 = por %p107, %p108
    %s111 = sadd.s32 %s110, 1
    %p114 = scmp.eq.s32.totalorder %s13, 1
    %p115 = scmp.ne.s32.totalorder %s110, %s112
    %p116 = scmp.eq.s32.totalorder %s13, 0
    %p117 = por %p115, %p116
    %p118 = scmp.ne.s32.totalorder %s110, %s112
    %p119 = scmp.eq.s32.totalorder %s18, 1
    %p120 = por %p118, %p119
    %p121 = scmp.ne.s32.totalorder %s112, %s113
    %p122 = scmp.eq.s32.totalorder %s18, 0
    %p123 = por %p121, %p122
    %p124 = scmp.ne.s32.totalorder %s112, %s113
    %p125 = scmp.eq.s32.totalorder %s19, 1
    %p126 = por %p124, %p125
    %p128 = scmp.ne.s32.totalorder %s113, %s127
    %p129 = scmp.eq.s32.totalorder %s19, 0
    %p130 = por %p128, %p129
    %s132 = sadd.s32 %s131, 1
    %p135 = scmp.eq.s32.totalorder %s13, 1
    %p136 = scmp.ne.s32.totalorder %s131, %s133
    %p137 = scmp.eq.s32.totalorder %s13, 0
    %p138 = por %p136, %p137
    %p139 = scmp.ne.s32.totalorder %s131, %s133
    %p140 = scmp.eq.s32.totalorder %s18, 1
    %p141 = por %p139, %p140
    %p142 = scmp.ne.s32.totalorder %s133, %s134
    %p143 = scmp.eq.s32.totalorder %s18, 0
    %p144 = por %p142, %p143
    %p145 = scmp.ne.s32.totalorder %s133, %s134
    %p146 = scmp.eq.s32.totalorder %s19, 1
    %p147 = por %p145, %p146
    %p149 = scmp.ne.s32.totalorder %s134, %s148
    %p150 = scmp.eq.s32.totalorder %s19, 0
    %p151 = por %p149, %p150
    %s153 = sadd.s32 %s152, 1
    %p156 = scmp.eq.s32.totalorder %s13, 1
    %p157 = scmp.ne.s32.totalorder %s152, %s154
    %p158 = scmp.eq.s32.totalorder %s13, 0
    %p159 = por %p157, %p158
    %p160 = scmp.ne.s32.totalorder %s152, %s154
    %p161 = scmp.eq.s32.totalorder %s18, 1
    %p162 = por %p160, %p161
    %p163 = scmp.ne.s32.totalorder %s154, %s155
    %p164 = scmp.eq.s32.totalorder %s18, 0
    %p165 = por %p163, %p164
    %p166 = scmp.ne.s32.totalorder %s154, %s155
    %p167 = scmp.eq.s32.totalorder %s19, 1
    %p168 = por %p166, %p167
    %p170 = scmp.ne.s32.totalorder %s155, %s169
    %p171 = scmp.eq.s32.totalorder %s19, 0
    %p172 = por %p170, %p171
    %s173 = ssub.s32 %s13, %s20
    %p174 = scmp.eq.s32.totalorder %s173, 0
    %s176 = sadd.s32 %s175, 1
    %s177 = scalar_select %p174, %s175, %s176
    %p180 = pneg %p174
    %p181 = scmp.eq.s32.totalorder %s13, 1
    %p182 = por %p180, %p181
    %p183 = scmp.ne.s32.totalorder %s175, %s178
    %p184 = scmp.eq.s32.totalorder %s13, 0
    %p185 = por %p183, %p184
    %p186 = scmp.ne.s32.totalorder %s175, %s178
    %p187 = scmp.eq.s32.totalorder %s18, 1
    %p188 = por %p186, %p187
    %p189 = scmp.ne.s32.totalorder %s178, %s179
    %p190 = scmp.eq.s32.totalorder %s18, 0
    %p191 = por %p189, %p190
    %p192 = scmp.ne.s32.totalorder %s178, %s179
    %p193 = scmp.eq.s32.totalorder %s19, 1
    %p194 = por %p192, %p193
    %p196 = scmp.ne.s32.totalorder %s179, %s195
    %p197 = scmp.eq.s32.totalorder %s19, 0
    %p198 = por %p196, %p197
    %p199 = scmp.le.s32.totalorder 1, %s13
    %p200 = scmp.lt.s32.totalorder %s13, 3
    %p201 = pnand %p199, %p200
    %p202 = pneg %p201
    // Predicated region
    $region9: #{transformer_decoder_forward.8} parent=5 // pred_check
      _
    $region10: #{transformer_decoder_forward.8} parent=5 // pred_check_branch
      %204 = sbr.rel (%p201) target = $region12
    $region11: #{transformer_decoder_forward.8} parent=5 // pred_region
      %s205 = ssub.s32 %s13, 1
      // Predicated region
      $region13: #{transformer_decoder_forward.8} parent=11 // pred_check
        %p206 = pneg %p60
      $region14: #{transformer_decoder_forward.8} parent=11 // pred_check_branch
        %208 = sbr.rel (%p206) target = $region16
      $region15: #{transformer_decoder_forward.8} parent=11 // pred_region
        _
      $region16: #{transformer_decoder_forward.8} parent=11 // pred_fallthru
        _
      // Predicated region
      $region17: #{transformer_decoder_forward.8} parent=11 // pred_check
        %p209 = pneg %p81
      $region18: #{transformer_decoder_forward.8} parent=11 // pred_check_branch
        %211 = sbr.rel (%p209) target = $region20
      $region19: #{transformer_decoder_forward.8} parent=11 // pred_region
        _
      $region20: #{transformer_decoder_forward.8} parent=11 // pred_fallthru
        _
      // Predicated region
      $region21: #{transformer_decoder_forward.8} parent=11 // pred_check
        %p212 = pneg %p102
      $region22: #{transformer_decoder_forward.8} parent=11 // pred_check_branch
        %214 = sbr.rel (%p212) target = $region24
      $region23: #{transformer_decoder_forward.8} parent=11 // pred_region
        _
      $region24: #{transformer_decoder_forward.8} parent=11 // pred_fallthru
        _
      // Predicated region
      $region25: #{transformer_decoder_forward.8} parent=11 // pred_check
        %p215 = pneg %p123
      $region26: #{transformer_decoder_forward.8} parent=11 // pred_check_branch
        %217 = sbr.rel (%p215) target = $region28
      $region27: #{transformer_decoder_forward.8} parent=11 // pred_region
        _
      $region28: #{transformer_decoder_forward.8} parent=11 // pred_fallthru
        _
      // Predicated region
      $region29: #{transformer_decoder_forward.8} parent=11 // pred_check
        %p218 = pneg %p144
      $region30: #{transformer_decoder_forward.8} parent=11 // pred_check_branch
        %220 = sbr.rel (%p218) target = $region32
      $region31: #{transformer_decoder_forward.8} parent=11 // pred_region
        _
      $region32: #{transformer_decoder_forward.8} parent=11 // pred_fallthru
        _
      // Predicated region
      $region33: #{transformer_decoder_forward.8} parent=11 // pred_check
        %p221 = pneg %p165
      $region34: #{transformer_decoder_forward.8} parent=11 // pred_check_branch
        %223 = sbr.rel (%p221) target = $region36
      $region35: #{transformer_decoder_forward.8} parent=11 // pred_region
        _
      $region36: #{transformer_decoder_forward.8} parent=11 // pred_fallthru
        _
    $region12: #{transformer_decoder_forward.8} parent=5 // pred_fallthru
      _
    %p224 = scmp.lt.s32.totalorder %s13, 2
    // Predicated region
    $region37: #{transformer_decoder_forward.8} parent=5 // pred_check
      %p225 = pneg %p224
    $region38: #{transformer_decoder_forward.8} parent=5 // pred_check_branch
      %227 = sbr.rel (%p225) target = $region40
    $region39: #{transformer_decoder_forward.8} parent=5 // pred_region
      // Predicated region
      $region41: #{transformer_decoder_forward.8} parent=39 // pred_check
        %p228 = pneg %p33
      $region42: #{transformer_decoder_forward.8} parent=39 // pred_check_branch
        %230 = sbr.rel (%p228) target = $region44
      $region43: #{transformer_decoder_forward.8} parent=39 // pred_region
        %p231 = scmp.lt.s32.totalorder %s13, 1
        %s232 = scalar_select %p231, %s13, 1
        %s233 = smul.addr %s232, 8
        %s234 = scalar_lea.vmem %s0, %s233
      $region44: #{transformer_decoder_forward.8} parent=39 // pred_fallthru
        _
    $region40: #{transformer_decoder_forward.8} parent=5 // pred_fallthru
      _
    %p235 = scmp.le.s32.totalorder 1, %s13
    %p236 = scmp.lt.s32.totalorder %s13, 3
    %p237 = pnand %p235, %p236
    %p238 = pneg %p237
    // Predicated region
    $region45: #{transformer_decoder_forward.8} parent=5 // pred_check
      _
    $region46: #{transformer_decoder_forward.8} parent=5 // pred_check_branch
      %240 = sbr.rel (%p237) target = $region48
    $region47: #{transformer_decoder_forward.8} parent=5 // pred_region
      %s241 = ssub.s32 %s13, 1
      %p242 = scmp.lt.s32.totalorder %s18, 1
      %s243 = scalar_select %p242, %s18, 1
      %s244 = smul.addr %s243, 8
      %s245 = scalar_lea.vmem %s0, %s244
      %p246 = pneg %p39
      %p247 = pneg %p36
      %p248 = pneg %p60
      %p249 = pneg %p57
      %p250 = pneg %p81
      %p251 = pneg %p78
      %p252 = pneg %p102
      %p253 = pneg %p99
      %p254 = pneg %p123
      %p255 = pneg %p120
      %p256 = pneg %p144
      %p257 = pneg %p141
      %p258 = pneg %p165
      %p259 = pneg %p162
      %p260 = pneg %p191
      %p261 = pneg %p188
      %p262 = scmp.lt.s32.totalorder %s18, 1
      %s263 = scalar_select %p262, %s18, 1
      %s264 = smul.addr %s263, 8
      %s265 = scalar_lea.vmem %s7, %s264
      %p266 = scmp.lt.s32.totalorder %s18, 1
      %s267 = scalar_select %p266, %s18, 1
      %s268 = smul.addr %s267, 8
      %s269 = scalar_lea.vmem %s0, %s268
      %p270 = scmp.lt.s32.totalorder %s18, 1
      %s271 = scalar_select %p270, %s18, 1
      %s272 = smul.addr %s271, 8
      %s273 = scalar_lea.vmem %s7, %s272
      %v274 = vld [vmem:[%s269] sm:$0xff]
      %v275 = vld [vmem:[%s1] sm:$0xff]
      %v276 = vld [vmem:[%s1 + $0x8] sm:$0xff]
      %v277 = vld [vmem:[%s1 + $0x10] sm:$0xff]
      %v278 = vld [vmem:[%s1 + $0x18] sm:$0xff]
      %v279 = vld [vmem:[%s2] sm:$0x1]
      %v281 = vlaneseq
      %v282 = vshrl.u32 %v281, 7
      %v283 = vsub.s32 0, %v282
      %v284 = vrot.slane %v279, %v283
      %vm286 = vcmask 261120
      %v288 = vsel %vm286, %v274, 0
      %290 = vmatprep.subr.mxu0 0.0
      %291 = vmatpush1.msra.mxu0 0.0
      %292 = vmatprep.subr.mxu0 0.0
      %293 = vmatpush1.msra.mxu0 0.0
      %294 = vmatprep.subr.mxu0 0.0
      %295 = vmatpush1.msra.mxu0 0.0
      %296 = vmatprep.subr.mxu0 0.0
      %297 = vmatpush1.msra.mxu0 0.0
      %298 = vmatprep.subr.mxu0 0.0
      %299 = vmatpush1.msra.mxu0 0.0
      %300 = vmatprep.subr.mxu0 0.0
      %301 = vmatpush1.msra.mxu0 0.0
      %302 = vmatprep.subr.mxu0 0.0
      %303 = vmatpush1.msra.mxu0 0.0
      %304 = vmatprep.subr.mxu0 0.0
      %305 = vmatpush1.msra.mxu0 0.0
      %306 = vmatprep.subr.mxu0 0.0
      %307 = vmatpush1.msra.mxu0 0.0
      %308 = vmatprep.subr.mxu0 0.0
      %309 = vmatpush1.msra.mxu0 0.0
      %310 = vmatprep.subr.mxu0 0.0
      %311 = vmatpush1.msra.mxu0 0.0
      %312 = vmatprep.subr.mxu0 0.0
      %313 = vmatpush1.msra.mxu0 0.0
      %314 = vmatprep.subr.mxu0 0.0
      %315 = vmatpush1.msra.mxu0 %v278
      %316 = vmatprep.subr.mxu0 0.0
      %317 = vmatpush1.msra.mxu0 %v277
      %318 = vmatprep.subr.mxu0 0.0
      %319 = vmatpush1.msra.mxu0 %v276
      %320 = vmatprep.subr.mxu0 0.0
      %321 = vmatpush1.msra.mxu0 %v275
      %322 = vmatprep.subr.mxu0 0.0
      %323 = vmatpush2.msra.mxu0 0.0
      %324 = vmatprep.subr.mxu0 0.0
      %325 = vmatpush2.msra.mxu0 0.0
      %326 = vmatprep.subr.mxu0 0.0
      %327 = vmatpush2.msra.mxu0 0.0
      %328 = vmatprep.subr.mxu0 0.0
      %329 = vmatpush2.msra.mxu0 0.0
      %330 = vmatprep.subr.mxu0 0.0
      %331 = vmatpush2.msra.mxu0 0.0
      %332 = vmatprep.subr.mxu0 0.0
      %333 = vmatpush2.msra.mxu0 0.0
      %334 = vmatprep.subr.mxu0 0.0
      %335 = vmatpush2.msra.mxu0 0.0
      %336 = vmatprep.subr.mxu0 0.0
      %337 = vmatpush2.msra.mxu0 0.0
      %338 = vmatprep.subr.mxu0 0.0
      %339 = vmatpush2.msra.mxu0 0.0
      %340 = vmatprep.subr.mxu0 0.0
      %341 = vmatpush2.msra.mxu0 0.0
      %342 = vmatprep.subr.mxu0 0.0
      %343 = vmatpush2.msra.mxu0 0.0
      %344 = vmatprep.subr.mxu0 0.0
      %345 = vmatpush2.msra.mxu0 0.0
      %346 = vmatprep.subr.mxu0 0.0
      %347 = vmatpush2.msra.mxu0 0.0
      %348 = vmatprep.subr.mxu0 0.0
      %349 = vmatpush2.msra.mxu0 0.0
      %350 = vmatprep.subr.mxu0 0.0
      %351 = vmatpush2.msra.mxu0 0.0
      %352 = vmatprep.subr.mxu0 0.0
      %353 = vmatpush2.msra.mxu0 0.0
      %354 = vmatprep.mubr.f32.mxu0 0.0
      %355 = vmatmul.mubr.f32.gmra.mxu0 %v288
      %v356 = vpop.f32.mrf.mxu0
      %v357 = vadd.f32 %v284, %v356
      %v358 = vpop.f32.mrf.mxu0
      %359 = vdwg.mxu0
      %v360 = vmax.f32 %v357, 0.0
      %v361 = vld [vmem:[%s3] sm:$0xff]
      %v362 = vld [vmem:[%s3 + $0x8] sm:$0xff]
      %v363 = vld [vmem:[%s3 + $0x10] sm:$0xff]
      %v364 = vld [vmem:[%s3 + $0x18] sm:$0xff]
      %v365 = vld [vmem:[%s3 + $0x20] sm:$0xff]
      %v366 = vld [vmem:[%s3 + $0x28] sm:$0xff]
      %v367 = vld [vmem:[%s3 + $0x30] sm:$0xff]
      %v368 = vld [vmem:[%s3 + $0x38] sm:$0xff]
      %v369 = vld [vmem:[%s4] sm:$0x1]
      %v371 = vlaneseq
      %v372 = vshrl.u32 %v371, 7
      %v373 = vsub.s32 0, %v372
      %v374 = vrot.slane %v369, %v373
      %vm376 = vcmask 523264
      %v378 = vsel %vm376, %v360, 0
      %380 = vmatprep.subr.mxu0 0.0
      %381 = vmatpush1.msra.mxu0 0.0
      %382 = vmatprep.subr.mxu0 0.0
      %383 = vmatpush1.msra.mxu0 0.0
      %384 = vmatprep.subr.mxu0 0.0
      %385 = vmatpush1.msra.mxu0 0.0
      %386 = vmatprep.subr.mxu0 0.0
      %387 = vmatpush1.msra.mxu0 0.0
      %388 = vmatprep.subr.mxu0 0.0
      %389 = vmatpush1.msra.mxu0 0.0
      %390 = vmatprep.subr.mxu0 0.0
      %391 = vmatpush1.msra.mxu0 0.0
      %392 = vmatprep.subr.mxu0 0.0
      %393 = vmatpush1.msra.mxu0 0.0
      %394 = vmatprep.subr.mxu0 0.0
      %395 = vmatpush1.msra.mxu0 0.0
      %396 = vmatprep.subr.mxu0 0.0
      %397 = vmatpush1.msra.mxu0 %v368
      %398 = vmatprep.subr.mxu0 0.0
      %399 = vmatpush1.msra.mxu0 %v367
      %400 = vmatprep.subr.mxu0 0.0
      %401 = vmatpush1.msra.mxu0 %v366
      %402 = vmatprep.subr.mxu0 0.0
      %403 = vmatpush1.msra.mxu0 %v365
      %404 = vmatprep.subr.mxu0 0.0
      %405 = vmatpush1.msra.mxu0 %v364
      %406 = vmatprep.subr.mxu0 0.0
      %407 = vmatpush1.msra.mxu0 %v363
      %408 = vmatprep.subr.mxu0 0.0
      %409 = vmatpush1.msra.mxu0 %v362
      %410 = vmatprep.subr.mxu0 0.0
      %411 = vmatpush1.msra.mxu0 %v361
      %412 = vmatprep.subr.mxu0 0.0
      %413 = vmatpush2.msra.mxu0 0.0
      %414 = vmatprep.subr.mxu0 0.0
      %415 = vmatpush2.msra.mxu0 0.0
      %416 = vmatprep.subr.mxu0 0.0
      %417 = vmatpush2.msra.mxu0 0.0
      %418 = vmatprep.subr.mxu0 0.0
      %419 = vmatpush2.msra.mxu0 0.0
      %420 = vmatprep.subr.mxu0 0.0
      %421 = vmatpush2.msra.mxu0 0.0
      %422 = vmatprep.subr.mxu0 0.0
      %423 = vmatpush2.msra.mxu0 0.0
      %424 = vmatprep.subr.mxu0 0.0
      %425 = vmatpush2.msra.mxu0 0.0
      %426 = vmatprep.subr.mxu0 0.0
      %427 = vmatpush2.msra.mxu0 0.0
      %428 = vmatprep.subr.mxu0 0.0
      %429 = vmatpush2.msra.mxu0 0.0
      %430 = vmatprep.subr.mxu0 0.0
      %431 = vmatpush2.msra.mxu0 0.0
      %432 = vmatprep.subr.mxu0 0.0
      %433 = vmatpush2.msra.mxu0 0.0
      %434 = vmatprep.subr.mxu0 0.0
      %435 = vmatpush2.msra.mxu0 0.0
      %436 = vmatprep.subr.mxu0 0.0
      %437 = vmatpush2.msra.mxu0 0.0
      %438 = vmatprep.subr.mxu0 0.0
      %439 = vmatpush2.msra.mxu0 0.0
      %440 = vmatprep.subr.mxu0 0.0
      %441 = vmatpush2.msra.mxu0 0.0
      %442 = vmatprep.subr.mxu0 0.0
      %443 = vmatpush2.msra.mxu0 0.0
      %444 = vmatprep.mubr.f32.mxu0 0.0
      %445 = vmatmul.mubr.f32.gmra.mxu0 %v378
      %v446 = vpop.f32.mrf.mxu0
      %v447 = vadd.f32 %v374, %v446
      %v448 = vpop.f32.mrf.mxu0
      %449 = vdwg.mxu0
      %v450 = vadd.f32 %v447, %v274
      %v451 = vsel %vm286, %v450, 0.0
      %452 = vadd.xlane.f32.xlu0 %v451
      %v453 = vpop.xlane.xlu0 %452
      %v454 = vrcp.pop 32.0
      %v455 = vmul.f32 %v453, %v454
      %v456 = vsub.f32 %v450, %v455
      %v457 = vmul.f32 %v456, %v456
      %v458 = vsel %vm286, %v457, 0.0
      %459 = vadd.xlane.f32.xlu0 %v458
      %v460 = vpop.xlane.xlu0 %459
      %v461 = vmul.f32 %v460, 0.032258064
      %v462 = vrsqrt.pop %v461
      %v463 = vmul.f32 %v456, %v462
      %v464 = vadd.f32 %v463, 1e-05
      %v465 = vld [vmem:[%s5] sm:$0x1]
      %v467 = vlaneseq
      %v468 = vshrl.u32 %v467, 7
      %v469 = vsub.s32 0, %v468
      %v470 = vrot.slane %v465, %v469
      %v472 = vmul.f32 %v464, %v470
      %v473 = vld [vmem:[%s6] sm:$0x1]
      %v475 = vlaneseq
      %v476 = vshrl.u32 %v475, 7
      %v477 = vsub.s32 0, %v476
      %v478 = vrot.slane %v473, %v477
      %v480 = vadd.f32 %v472, %v478
      %481 = vst.msk [vmem:[%s273] sm:$0xff] %vm286, %v480
      %p482 = scmp.lt.s32.totalorder %s18, 1
      %s483 = scalar_select %p482, %s18, 1
      %s484 = smul.addr %s483, 8
      %s485 = scalar_lea.vmem %s7, %s484
      // Predicated region
      $region49: #{transformer_decoder_forward.8} parent=47 // pred_check
        %p486 = pneg %p188
      $region50: #{transformer_decoder_forward.8} parent=47 // pred_check_branch
        %488 = sbr.rel (%p486) target = $region52
      $region51: #{transformer_decoder_forward.8} parent=47 // pred_region
        _
      $region52: #{transformer_decoder_forward.8} parent=47 // pred_fallthru
        _
    $region48: #{transformer_decoder_forward.8} parent=5 // pred_fallthru
      _
    %p489 = scmp.le.s32.totalorder 2, %s13
    // Predicated region
    $region53: #{transformer_decoder_forward.8} parent=5 // pred_check
      %p490 = pneg %p489
    $region54: #{transformer_decoder_forward.8} parent=5 // pred_check_branch
      %492 = sbr.rel (%p490) target = $region56
    $region55: #{transformer_decoder_forward.8} parent=5 // pred_region
      %s493 = ssub.s32 %s13, 2
      // Predicated region
      $region57: #{transformer_decoder_forward.8} parent=55 // pred_check
        %p494 = pneg %p194
      $region58: #{transformer_decoder_forward.8} parent=55 // pred_check_branch
        %496 = sbr.rel (%p494) target = $region60
      $region59: #{transformer_decoder_forward.8} parent=55 // pred_region
        %p497 = scmp.lt.s32.totalorder %s19, 1
        %s498 = scalar_select %p497, %s19, 1
        %s499 = smul.addr %s498, 8
        %s500 = scalar_lea.vmem %s7, %s499
      $region60: #{transformer_decoder_forward.8} parent=55 // pred_fallthru
        _
    $region56: #{transformer_decoder_forward.8} parent=5 // pred_fallthru
      _
  $region6: #{transformer_decoder_forward.8} parent=0 // loop_footer
    %s17 = sadd.s32 1, %s13
  $region7: #{transformer_decoder_forward.8} parent=0 // loop_footer_branch
    %12 = sbr.rel target = $region3
  $region8: #{transformer_decoder_forward.8} parent=0 // loop_exit
    _

// kernel: transformer_decoder_forward.11
$region0: #{transformer_decoder_forward.11}
  #allocation0 [shape = 'u32[]', space=smem, size = 0x4, offset = 0x4, fixed_abs, tag = 'smem constant byte address 0x4 - core index']
  #allocation1 [shape = 'u32[144,128]{1,0:T(1,128)}', space=vmem, size = 0x12000, scoped, tag = 'internal scratch']
  %s0 = inlined_call_operand.vmem [shape: f32[16,32], index: 0, kind: input, shape index: {}]
  %s1 = inlined_call_operand.vmem [shape: f32[32,64], index: 1, kind: input, shape index: {}]
  %s2 = inlined_call_operand.vmem [shape: f32[1,64], index: 2, kind: input, shape index: {}]
  %s3 = inlined_call_operand.vmem [shape: f32[64,32], index: 3, kind: input, shape index: {}]
  %s4 = inlined_call_operand.vmem [shape: f32[1,32], index: 4, kind: input, shape index: {}]
  %s5 = inlined_call_operand.vmem [shape: f32[1,32], index: 5, kind: input, shape index: {}]
  %s6 = inlined_call_operand.vmem [shape: f32[1,32], index: 6, kind: input, shape index: {}]
  %s7 = inlined_call_operand.hbm [shape: f32[16,32], index: 7, kind: output, shape index: {}]
  %s8 = sld [smem:[#allocation0]]
  $region61: #{transformer_decoder_forward.11} parent=0
    _
  %s10 = ssub.s32 1, %s8
  %s11 = scalar_select 0, %s10, %s8
  $region1: #{transformer_decoder_forward.11} parent=0
    #allocation2 [shape = 'u8[8192]{0}', space=vmem, size = 0x2000, scoped, tag = 'output window, operand 0']
    #allocation3 [shape = 's32[2]{0}', space=sflag, size = 0x8, scoped, tag = 'scoped memory for transformer_decoder_forward.11']
    %12 = vsyncpa [#allocation3], 0
    %s13 = scalar_lea.sflag [#allocation3], 1
    %14 = vsyncpa %s13, 0
    loop: start=0, step=1, limit=4
    $region2: #{transformer_decoder_forward.11} parent=1 // loop_pre_header
      _
    $region3: #{transformer_decoder_forward.11} parent=1 // loop_header
      %s16 = sphi 0, %s20
      %p17 = scmp.ge.s32.totalorder %s16, 4
      %s26 = sphi 0, %s28
      %s29 = sphi 0, %s26
      %s30 = sphi 0, %s29
      %s46 = sphi 0, %s30
      %s50 = sphi 0, %s50
      %s52 = sphi 0, %s50
      %s53 = sphi 0, %s52
      %s67 = sphi 0, %s53
      %s71 = sphi 0, %s71
      %s73 = sphi 0, %s71
      %s74 = sphi 0, %s73
      %s88 = sphi 0, %s74
      %s92 = sphi 0, %s92
      %s94 = sphi 0, %s92
      %s95 = sphi 0, %s94
      %s109 = sphi 0, %s95
      %s113 = sphi 0, %s113
      %s115 = sphi 0, %s113
      %s116 = sphi 0, %s115
      %s130 = sphi 0, %s116
      %s134 = sphi 0, %s134
      %s136 = sphi 0, %s134
      %s137 = sphi 0, %s136
      %s151 = sphi 0, %s137
      %s155 = sphi 0, %s155
      %s157 = sphi 0, %s155
      %s158 = sphi 0, %s157
      %s172 = sphi 0, %s158
      %s178 = sphi 0, %s180
      %s181 = sphi 0, %s178
      %s182 = sphi 0, %s181
      %s198 = sphi 0, %s182
    $region4: #{transformer_decoder_forward.11} parent=1 // loop_header_branch
      %19 = sbr.rel (%p17) target = $region8
    $region5: #{transformer_decoder_forward.11} parent=1 // loop_body
      %s21 = ssub.s32 %s16, 1
      %s22 = ssub.s32 %s16, 2
      %s23 = sadd.s32 %s16, 1
      %s24 = ssub.s32 %s16, %s23
      %p25 = scmp.eq.s32.totalorder %s24, 0
      %s27 = sadd.s32 %s26, 1
      %s28 = scalar_select %p25, %s26, %s27
      %p31 = pneg %p25
      %p32 = scmp.eq.s32.totalorder %s16, 1
      %p33 = por %p31, %p32
      %p34 = scmp.ne.s32.totalorder %s26, %s29
      %p35 = scmp.eq.s32.totalorder %s16, 0
      %p36 = por %p34, %p35
      %p37 = scmp.ne.s32.totalorder %s26, %s29
      %p38 = scmp.eq.s32.totalorder %s21, 1
      %p39 = por %p37, %p38
      %p40 = scmp.ne.s32.totalorder %s29, %s30
      %p41 = scmp.eq.s32.totalorder %s21, 0
      %p42 = por %p40, %p41
      %p43 = scmp.ne.s32.totalorder %s29, %s30
      %p44 = scmp.eq.s32.totalorder %s22, 1
      %p45 = por %p43, %p44
      %p47 = scmp.ne.s32.totalorder %s30, %s46
      %p48 = scmp.eq.s32.totalorder %s22, 0
      %p49 = por %p47, %p48
      %s51 = sadd.s32 %s50, 1
      %p54 = scmp.eq.s32.totalorder %s16, 1
      %p55 = scmp.ne.s32.totalorder %s50, %s52
      %p56 = scmp.eq.s32.totalorder %s16, 0
      %p57 = por %p55, %p56
      %p58 = scmp.ne.s32.totalorder %s50, %s52
      %p59 = scmp.eq.s32.totalorder %s21, 1
      %p60 = por %p58, %p59
      %p61 = scmp.ne.s32.totalorder %s52, %s53
      %p62 = scmp.eq.s32.totalorder %s21, 0
      %p63 = por %p61, %p62
      %p64 = scmp.ne.s32.totalorder %s52, %s53
      %p65 = scmp.eq.s32.totalorder %s22, 1
      %p66 = por %p64, %p65
      %p68 = scmp.ne.s32.totalorder %s53, %s67
      %p69 = scmp.eq.s32.totalorder %s22, 0
      %p70 = por %p68, %p69
      %s72 = sadd.s32 %s71, 1
      %p75 = scmp.eq.s32.totalorder %s16, 1
      %p76 = scmp.ne.s32.totalorder %s71, %s73
      %p77 = scmp.eq.s32.totalorder %s16, 0
      %p78 = por %p76, %p77
      %p79 = scmp.ne.s32.totalorder %s71, %s73
      %p80 = scmp.eq.s32.totalorder %s21, 1
      %p81 = por %p79, %p80
      %p82 = scmp.ne.s32.totalorder %s73, %s74
      %p83 = scmp.eq.s32.totalorder %s21, 0
      %p84 = por %p82, %p83
      %p85 = scmp.ne.s32.totalorder %s73, %s74
      %p86 = scmp.eq.s32.totalorder %s22, 1
      %p87 = por %p85, %p86
      %p89 = scmp.ne.s32.totalorder %s74, %s88
      %p90 = scmp.eq.s32.totalorder %s22, 0
      %p91 = por %p89, %p90
      %s93 = sadd.s32 %s92, 1
      %p96 = scmp.eq.s32.totalorder %s16, 1
      %p97 = scmp.ne.s32.totalorder %s92, %s94
      %p98 = scmp.eq.s32.totalorder %s16, 0
      %p99 = por %p97, %p98
      %p100 = scmp.ne.s32.totalorder %s92, %s94
      %p101 = scmp.eq.s32.totalorder %s21, 1
      %p102 = por %p100, %p101
      %p103 = scmp.ne.s32.totalorder %s94, %s95
      %p104 = scmp.eq.s32.totalorder %s21, 0
      %p105 = por %p103, %p104
      %p106 = scmp.ne.s32.totalorder %s94, %s95
      %p107 = scmp.eq.s32.totalorder %s22, 1
      %p108 = por %p106, %p107
      %p110 = scmp.ne.s32.totalorder %s95, %s109
      %p111 = scmp.eq.s32.totalorder %s22, 0
      %p112 = por %p110, %p111
      %s114 = sadd.s32 %s113, 1
      %p117 = scmp.eq.s32.totalorder %s16, 1
      %p118 = scmp.ne.s32.totalorder %s113, %s115
      %p119 = scmp.eq.s32.totalorder %s16, 0
      %p120 = por %p118, %p119
      %p121 = scmp.ne.s32.totalorder %s113, %s115
      %p122 = scmp.eq.s32.totalorder %s21, 1
      %p123 = por %p121, %p122
      %p124 = scmp.ne.s32.totalorder %s115, %s116
      %p125 = scmp.eq.s32.totalorder %s21, 0
      %p126 = por %p124, %p125
      %p127 = scmp.ne.s32.totalorder %s115, %s116
      %p128 = scmp.eq.s32.totalorder %s22, 1
      %p129 = por %p127, %p128
      %p131 = scmp.ne.s32.totalorder %s116, %s130
      %p132 = scmp.eq.s32.totalorder %s22, 0
      %p133 = por %p131, %p132
      %s135 = sadd.s32 %s134, 1
      %p138 = scmp.eq.s32.totalorder %s16, 1
      %p139 = scmp.ne.s32.totalorder %s134, %s136
      %p140 = scmp.eq.s32.totalorder %s16, 0
      %p141 = por %p139, %p140
      %p142 = scmp.ne.s32.totalorder %s134, %s136
      %p143 = scmp.eq.s32.totalorder %s21, 1
      %p144 = por %p142, %p143
      %p145 = scmp.ne.s32.totalorder %s136, %s137
      %p146 = scmp.eq.s32.totalorder %s21, 0
      %p147 = por %p145, %p146
      %p148 = scmp.ne.s32.totalorder %s136, %s137
      %p149 = scmp.eq.s32.totalorder %s22, 1
      %p150 = por %p148, %p149
      %p152 = scmp.ne.s32.totalorder %s137, %s151
      %p153 = scmp.eq.s32.totalorder %s22, 0
      %p154 = por %p152, %p153
      %s156 = sadd.s32 %s155, 1
      %p159 = scmp.eq.s32.totalorder %s16, 1
      %p160 = scmp.ne.s32.totalorder %s155, %s157
      %p161 = scmp.eq.s32.totalorder %s16, 0
      %p162 = por %p160, %p161
      %p163 = scmp.ne.s32.totalorder %s155, %s157
      %p164 = scmp.eq.s32.totalorder %s21, 1
      %p165 = por %p163, %p164
      %p166 = scmp.ne.s32.totalorder %s157, %s158
      %p167 = scmp.eq.s32.totalorder %s21, 0
      %p168 = por %p166, %p167
      %p169 = scmp.ne.s32.totalorder %s157, %s158
      %p170 = scmp.eq.s32.totalorder %s22, 1
      %p171 = por %p169, %p170
      %p173 = scmp.ne.s32.totalorder %s158, %s172
      %p174 = scmp.eq.s32.totalorder %s22, 0
      %p175 = por %p173, %p174
      %s176 = ssub.s32 %s16, %s23
      %p177 = scmp.eq.s32.totalorder %s176, 0
      %s179 = sadd.s32 %s178, 1
      %s180 = scalar_select %p177, %s178, %s179
      %p183 = pneg %p177
      %p184 = scmp.eq.s32.totalorder %s16, 1
      %p185 = por %p183, %p184
      %p186 = scmp.ne.s32.totalorder %s178, %s181
      %p187 = scmp.eq.s32.totalorder %s16, 0
      %p188 = por %p186, %p187
      %p189 = scmp.ne.s32.totalorder %s178, %s181
      %p190 = scmp.eq.s32.totalorder %s21, 1
      %p191 = por %p189, %p190
      %p192 = scmp.ne.s32.totalorder %s181, %s182
      %p193 = scmp.eq.s32.totalorder %s21, 0
      %p194 = por %p192, %p193
      %p195 = scmp.ne.s32.totalorder %s181, %s182
      %p196 = scmp.eq.s32.totalorder %s22, 1
      %p197 = por %p195, %p196
      %p199 = scmp.ne.s32.totalorder %s182, %s198
      %p200 = scmp.eq.s32.totalorder %s22, 0
      %p201 = por %p199, %p200
      %p202 = scmp.le.s32.totalorder 1, %s16
      %p203 = scmp.lt.s32.totalorder %s16, 3
      %p204 = pnand %p202, %p203
      %p205 = pneg %p204
      // Predicated region
      $region9: #{transformer_decoder_forward.11} parent=5 // pred_check
        _
      $region10: #{transformer_decoder_forward.11} parent=5 // pred_check_branch
        %207 = sbr.rel (%p204) target = $region12
      $region11: #{transformer_decoder_forward.11} parent=5 // pred_region
        %s208 = ssub.s32 %s16, 1
        // Predicated region
        $region13: #{transformer_decoder_forward.11} parent=11 // pred_check
          %p209 = pneg %p63
        $region14: #{transformer_decoder_forward.11} parent=11 // pred_check_branch
          %211 = sbr.rel (%p209) target = $region16
        $region15: #{transformer_decoder_forward.11} parent=11 // pred_region
          _
        $region16: #{transformer_decoder_forward.11} parent=11 // pred_fallthru
          _
        // Predicated region
        $region17: #{transformer_decoder_forward.11} parent=11 // pred_check
          %p212 = pneg %p84
        $region18: #{transformer_decoder_forward.11} parent=11 // pred_check_branch
          %214 = sbr.rel (%p212) target = $region20
        $region19: #{transformer_decoder_forward.11} parent=11 // pred_region
          _
        $region20: #{transformer_decoder_forward.11} parent=11 // pred_fallthru
          _
        // Predicated region
        $region21: #{transformer_decoder_forward.11} parent=11 // pred_check
          %p215 = pneg %p105
        $region22: #{transformer_decoder_forward.11} parent=11 // pred_check_branch
          %217 = sbr.rel (%p215) target = $region24
        $region23: #{transformer_decoder_forward.11} parent=11 // pred_region
          _
        $region24: #{transformer_decoder_forward.11} parent=11 // pred_fallthru
          _
        // Predicated region
        $region25: #{transformer_decoder_forward.11} parent=11 // pred_check
          %p218 = pneg %p126
        $region26: #{transformer_decoder_forward.11} parent=11 // pred_check_branch
          %220 = sbr.rel (%p218) target = $region28
        $region27: #{transformer_decoder_forward.11} parent=11 // pred_region
          _
        $region28: #{transformer_decoder_forward.11} parent=11 // pred_fallthru
          _
        // Predicated region
        $region29: #{transformer_decoder_forward.11} parent=11 // pred_check
          %p221 = pneg %p147
        $region30: #{transformer_decoder_forward.11} parent=11 // pred_check_branch
          %223 = sbr.rel (%p221) target = $region32
        $region31: #{transformer_decoder_forward.11} parent=11 // pred_region
          _
        $region32: #{transformer_decoder_forward.11} parent=11 // pred_fallthru
          _
        // Predicated region
        $region33: #{transformer_decoder_forward.11} parent=11 // pred_check
          %p224 = pneg %p168
        $region34: #{transformer_decoder_forward.11} parent=11 // pred_check_branch
          %226 = sbr.rel (%p224) target = $region36
        $region35: #{transformer_decoder_forward.11} parent=11 // pred_region
          _
        $region36: #{transformer_decoder_forward.11} parent=11 // pred_fallthru
          _
      $region12: #{transformer_decoder_forward.11} parent=5 // pred_fallthru
        _
      %p227 = scmp.lt.s32.totalorder %s16, 2
      // Predicated region
      $region37: #{transformer_decoder_forward.11} parent=5 // pred_check
        %p228 = pneg %p227
      $region38: #{transformer_decoder_forward.11} parent=5 // pred_check_branch
        %230 = sbr.rel (%p228) target = $region40
      $region39: #{transformer_decoder_forward.11} parent=5 // pred_region
        // Predicated region
        $region41: #{transformer_decoder_forward.11} parent=39 // pred_check
          %p231 = pneg %p36
        $region42: #{transformer_decoder_forward.11} parent=39 // pred_check_branch
          %233 = sbr.rel (%p231) target = $region44
        $region43: #{transformer_decoder_forward.11} parent=39 // pred_region
          %p234 = scmp.lt.s32.totalorder %s16, 1
          %s235 = scalar_select %p234, %s16, 1
          %s236 = smul.addr %s235, 8
          %s237 = scalar_lea.vmem %s0, %s236
        $region44: #{transformer_decoder_forward.11} parent=39 // pred_fallthru
          _
      $region40: #{transformer_decoder_forward.11} parent=5 // pred_fallthru
        _
      %p238 = scmp.le.s32.totalorder 1, %s16
      %p239 = scmp.lt.s32.totalorder %s16, 3
      %p240 = pnand %p238, %p239
      %p241 = pneg %p240
      // Predicated region
      $region45: #{transformer_decoder_forward.11} parent=5 // pred_check
        _
      $region46: #{transformer_decoder_forward.11} parent=5 // pred_check_branch
        %243 = sbr.rel (%p240) target = $region48
      $region47: #{transformer_decoder_forward.11} parent=5 // pred_region
        %s244 = ssub.s32 %s16, 1
        %p245 = scmp.lt.s32.totalorder %s21, 1
        %s246 = scalar_select %p245, %s21, 1
        %s247 = smul.addr %s246, 8
        %s248 = scalar_lea.vmem %s0, %s247
        %p249 = pneg %p42
        %p250 = pneg %p39
        %p251 = pneg %p63
        %p252 = pneg %p60
        %p253 = pneg %p84
        %p254 = pneg %p81
        %p255 = pneg %p105
        %p256 = pneg %p102
        %p257 = pneg %p126
        %p258 = pneg %p123
        %p259 = pneg %p147
        %p260 = pneg %p144
        %p261 = pneg %p168
        %p262 = pneg %p165
        %p263 = pneg %p194
        %p264 = pneg %p191
        %s265 = sand.u32 %s181, 1
        %s266 = scalar_lea.sflag [#allocation3], %s265
        %s267 = sand.u32 %s181, 1
        %s268 = smul.addr %s267, 8
        %s269 = scalar_lea.vmem [#allocation2], %s268
        %p270 = scmp.lt.s32.totalorder %s21, 1
        %s271 = scalar_select %p270, %s21, 1
        %s272 = smul.addr %s271, 8
        %s273 = scalar_lea.vmem %s0, %s272
        %v274 = vld [vmem:[%s273] sm:$0xff]
        %v275 = vld [vmem:[%s1] sm:$0xff]
        %v276 = vld [vmem:[%s1 + $0x8] sm:$0xff]
        %v277 = vld [vmem:[%s1 + $0x10] sm:$0xff]
        %v278 = vld [vmem:[%s1 + $0x18] sm:$0xff]
        %v279 = vld [vmem:[%s2] sm:$0x1]
        %v281 = vlaneseq
        %v282 = vshrl.u32 %v281, 7
        %v283 = vsub.s32 0, %v282
        %v284 = vrot.slane %v279, %v283
        %vm286 = vcmask 261120
        %v288 = vsel %vm286, %v274, 0
        %290 = vmatprep.subr.mxu0 0.0
        %291 = vmatpush1.msra.mxu0 0.0
        %292 = vmatprep.subr.mxu0 0.0
        %293 = vmatpush1.msra.mxu0 0.0
        %294 = vmatprep.subr.mxu0 0.0
        %295 = vmatpush1.msra.mxu0 0.0
        %296 = vmatprep.subr.mxu0 0.0
        %297 = vmatpush1.msra.mxu0 0.0
        %298 = vmatprep.subr.mxu0 0.0
        %299 = vmatpush1.msra.mxu0 0.0
        %300 = vmatprep.subr.mxu0 0.0
        %301 = vmatpush1.msra.mxu0 0.0
        %302 = vmatprep.subr.mxu0 0.0
        %303 = vmatpush1.msra.mxu0 0.0
        %304 = vmatprep.subr.mxu0 0.0
        %305 = vmatpush1.msra.mxu0 0.0
        %306 = vmatprep.subr.mxu0 0.0
        %307 = vmatpush1.msra.mxu0 0.0
        %308 = vmatprep.subr.mxu0 0.0
        %309 = vmatpush1.msra.mxu0 0.0
        %310 = vmatprep.subr.mxu0 0.0
        %311 = vmatpush1.msra.mxu0 0.0
        %312 = vmatprep.subr.mxu0 0.0
        %313 = vmatpush1.msra.mxu0 0.0
        %314 = vmatprep.subr.mxu0 0.0
        %315 = vmatpush1.msra.mxu0 %v278
        %316 = vmatprep.subr.mxu0 0.0
        %317 = vmatpush1.msra.mxu0 %v277
        %318 = vmatprep.subr.mxu0 0.0
        %319 = vmatpush1.msra.mxu0 %v276
        %320 = vmatprep.subr.mxu0 0.0
        %321 = vmatpush1.msra.mxu0 %v275
        %322 = vmatprep.subr.mxu0 0.0
        %323 = vmatpush2.msra.mxu0 0.0
        %324 = vmatprep.subr.mxu0 0.0
        %325 = vmatpush2.msra.mxu0 0.0
        %326 = vmatprep.subr.mxu0 0.0
        %327 = vmatpush2.msra.mxu0 0.0
        %328 = vmatprep.subr.mxu0 0.0
        %329 = vmatpush2.msra.mxu0 0.0
        %330 = vmatprep.subr.mxu0 0.0
        %331 = vmatpush2.msra.mxu0 0.0
        %332 = vmatprep.subr.mxu0 0.0
        %333 = vmatpush2.msra.mxu0 0.0
        %334 = vmatprep.subr.mxu0 0.0
        %335 = vmatpush2.msra.mxu0 0.0
        %336 = vmatprep.subr.mxu0 0.0
        %337 = vmatpush2.msra.mxu0 0.0
        %338 = vmatprep.subr.mxu0 0.0
        %339 = vmatpush2.msra.mxu0 0.0
        %340 = vmatprep.subr.mxu0 0.0
        %341 = vmatpush2.msra.mxu0 0.0
        %342 = vmatprep.subr.mxu0 0.0
        %343 = vmatpush2.msra.mxu0 0.0
        %344 = vmatprep.subr.mxu0 0.0
        %345 = vmatpush2.msra.mxu0 0.0
        %346 = vmatprep.subr.mxu0 0.0
        %347 = vmatpush2.msra.mxu0 0.0
        %348 = vmatprep.subr.mxu0 0.0
        %349 = vmatpush2.msra.mxu0 0.0
        %350 = vmatprep.subr.mxu0 0.0
        %351 = vmatpush2.msra.mxu0 0.0
        %352 = vmatprep.subr.mxu0 0.0
        %353 = vmatpush2.msra.mxu0 0.0
        %354 = vmatprep.mubr.f32.mxu0 0.0
        %355 = vmatmul.mubr.f32.gmra.mxu0 %v288
        %v356 = vpop.f32.mrf.mxu0
        %v357 = vadd.f32 %v284, %v356
        %v358 = vpop.f32.mrf.mxu0
        %359 = vdwg.mxu0
        %v360 = vmax.f32 %v357, 0.0
        %v361 = vld [vmem:[%s3] sm:$0xff]
        %v362 = vld [vmem:[%s3 + $0x8] sm:$0xff]
        %v363 = vld [vmem:[%s3 + $0x10] sm:$0xff]
        %v364 = vld [vmem:[%s3 + $0x18] sm:$0xff]
        %v365 = vld [vmem:[%s3 + $0x20] sm:$0xff]
        %v366 = vld [vmem:[%s3 + $0x28] sm:$0xff]
        %v367 = vld [vmem:[%s3 + $0x30] sm:$0xff]
        %v368 = vld [vmem:[%s3 + $0x38] sm:$0xff]
        %v369 = vld [vmem:[%s4] sm:$0x1]
        %v371 = vlaneseq
        %v372 = vshrl.u32 %v371, 7
        %v373 = vsub.s32 0, %v372
        %v374 = vrot.slane %v369, %v373
        %vm376 = vcmask 523264
        %v378 = vsel %vm376, %v360, 0
        %380 = vmatprep.subr.mxu0 0.0
        %381 = vmatpush1.msra.mxu0 0.0
        %382 = vmatprep.subr.mxu0 0.0
        %383 = vmatpush1.msra.mxu0 0.0
        %384 = vmatprep.subr.mxu0 0.0
        %385 = vmatpush1.msra.mxu0 0.0
        %386 = vmatprep.subr.mxu0 0.0
        %387 = vmatpush1.msra.mxu0 0.0
        %388 = vmatprep.subr.mxu0 0.0
        %389 = vmatpush1.msra.mxu0 0.0
        %390 = vmatprep.subr.mxu0 0.0
        %391 = vmatpush1.msra.mxu0 0.0
        %392 = vmatprep.subr.mxu0 0.0
        %393 = vmatpush1.msra.mxu0 0.0
        %394 = vmatprep.subr.mxu0 0.0
        %395 = vmatpush1.msra.mxu0 0.0
        %396 = vmatprep.subr.mxu0 0.0
        %397 = vmatpush1.msra.mxu0 %v368
        %398 = vmatprep.subr.mxu0 0.0
        %399 = vmatpush1.msra.mxu0 %v367
        %400 = vmatprep.subr.mxu0 0.0
        %401 = vmatpush1.msra.mxu0 %v366
        %402 = vmatprep.subr.mxu0 0.0
        %403 = vmatpush1.msra.mxu0 %v365
        %404 = vmatprep.subr.mxu0 0.0
        %405 = vmatpush1.msra.mxu0 %v364
        %406 = vmatprep.subr.mxu0 0.0
        %407 = vmatpush1.msra.mxu0 %v363
        %408 = vmatprep.subr.mxu0 0.0
        %409 = vmatpush1.msra.mxu0 %v362
        %410 = vmatprep.subr.mxu0 0.0
        %411 = vmatpush1.msra.mxu0 %v361
        %412 = vmatprep.subr.mxu0 0.0
        %413 = vmatpush2.msra.mxu0 0.0
        %414 = vmatprep.subr.mxu0 0.0
        %415 = vmatpush2.msra.mxu0 0.0
        %416 = vmatprep.subr.mxu0 0.0
        %417 = vmatpush2.msra.mxu0 0.0
        %418 = vmatprep.subr.mxu0 0.0
        %419 = vmatpush2.msra.mxu0 0.0
        %420 = vmatprep.subr.mxu0 0.0
        %421 = vmatpush2.msra.mxu0 0.0
        %422 = vmatprep.subr.mxu0 0.0
        %423 = vmatpush2.msra.mxu0 0.0
        %424 = vmatprep.subr.mxu0 0.0
        %425 = vmatpush2.msra.mxu0 0.0
        %426 = vmatprep.subr.mxu0 0.0
        %427 = vmatpush2.msra.mxu0 0.0
        %428 = vmatprep.subr.mxu0 0.0
        %429 = vmatpush2.msra.mxu0 0.0
        %430 = vmatprep.subr.mxu0 0.0
        %431 = vmatpush2.msra.mxu0 0.0
        %432 = vmatprep.subr.mxu0 0.0
        %433 = vmatpush2.msra.mxu0 0.0
        %434 = vmatprep.subr.mxu0 0.0
        %435 = vmatpush2.msra.mxu0 0.0
        %436 = vmatprep.subr.mxu0 0.0
        %437 = vmatpush2.msra.mxu0 0.0
        %438 = vmatprep.subr.mxu0 0.0
        %439 = vmatpush2.msra.mxu0 0.0
        %440 = vmatprep.subr.mxu0 0.0
        %441 = vmatpush2.msra.mxu0 0.0
        %442 = vmatprep.subr.mxu0 0.0
        %443 = vmatpush2.msra.mxu0 0.0
        %444 = vmatprep.mubr.f32.mxu0 0.0
        %445 = vmatmul.mubr.f32.gmra.mxu0 %v378
        %v446 = vpop.f32.mrf.mxu0
        %v447 = vadd.f32 %v374, %v446
        %v448 = vpop.f32.mrf.mxu0
        %449 = vdwg.mxu0
        %v450 = vadd.f32 %v447, %v274
        %v451 = vsel %vm286, %v450, 0.0
        %452 = vadd.xlane.f32.xlu0 %v451
        %v453 = vpop.xlane.xlu0 %452
        %v454 = vrcp.pop 32.0
        %v455 = vmul.f32 %v453, %v454
        %v456 = vsub.f32 %v450, %v455
        %v457 = vmul.f32 %v456, %v456
        %v458 = vsel %vm286, %v457, 0.0
        %459 = vadd.xlane.f32.xlu0 %v458
        %v460 = vpop.xlane.xlu0 %459
        %v461 = vmul.f32 %v460, 0.032258064
        %v462 = vrsqrt.pop %v461
        %v463 = vmul.f32 %v456, %v462
        %v464 = vadd.f32 %v463, 1e-05
        %v465 = vld [vmem:[%s5] sm:$0x1]
        %v467 = vlaneseq
        %v468 = vshrl.u32 %v467, 7
        %v469 = vsub.s32 0, %v468
        %v470 = vrot.slane %v465, %v469
        %v472 = vmul.f32 %v464, %v470
        %v473 = vld [vmem:[%s6] sm:$0x1]
        %v475 = vlaneseq
        %v476 = vshrl.u32 %v475, 7
        %v477 = vsub.s32 0, %v476
        %v478 = vrot.slane %v473, %v477
        %v480 = vadd.f32 %v472, %v478
        %481 = vst.msk [vmem:[%s269] sm:$0xff] %vm286, %v480
        %s482 = sand.u32 %s181, 1
        %s483 = scalar_lea.sflag [#allocation3], %s482
        %s484 = sand.u32 %s181, 1
        %s485 = smul.addr %s484, 8
        %s486 = scalar_lea.vmem [#allocation2], %s485
        // Predicated region
        $region49: #{transformer_decoder_forward.11} parent=47 // pred_check
          %p487 = pneg %p191
        $region50: #{transformer_decoder_forward.11} parent=47 // pred_check_branch
          %489 = sbr.rel (%p487) target = $region52
        $region51: #{transformer_decoder_forward.11} parent=47 // pred_region
          %s491 = ssub.s32 128, 128
          %492 = vsyncadd %s483, %s491
          %s493 = smul.addr %s21, 128
          %s494 = scalar_lea.hbm %s7, %s493
          %s496 = sshll.u32 %s486, 4
          %s497 = int_to_ptr.vmem [resolvable:$true] %s496
          %499 = dma.vmem_to_hbm [thread:$0]  %s497, 128, %s494, %s483
        $region52: #{transformer_decoder_forward.11} parent=47 // pred_fallthru
          _
      $region48: #{transformer_decoder_forward.11} parent=5 // pred_fallthru
        _
      %p500 = scmp.le.s32.totalorder 2, %s16
      // Predicated region
      $region53: #{transformer_decoder_forward.11} parent=5 // pred_check
        %p501 = pneg %p500
      $region54: #{transformer_decoder_forward.11} parent=5 // pred_check_branch
        %503 = sbr.rel (%p501) target = $region56
      $region55: #{transformer_decoder_forward.11} parent=5 // pred_region
        %s504 = ssub.s32 %s16, 2
        // Predicated region
        $region57: #{transformer_decoder_forward.11} parent=55 // pred_check
          %p505 = pneg %p197
        $region58: #{transformer_decoder_forward.11} parent=55 // pred_check_branch
          %507 = sbr.rel (%p505) target = $region60
        $region59: #{transformer_decoder_forward.11} parent=55 // pred_region
          %s508 = sand.u32 %s182, 1
          %s509 = scalar_lea.sflag [#allocation3], %s508
          %s510 = sand.u32 %s182, 1
          %s511 = smul.addr %s510, 8
          %s512 = scalar_lea.vmem [#allocation2], %s511
          %513 = dma.done %s509, 128
        $region60: #{transformer_decoder_forward.11} parent=55 // pred_fallthru
          _
      $region56: #{transformer_decoder_forward.11} parent=5 // pred_fallthru
        _
    $region6: #{transformer_decoder_forward.11} parent=1 // loop_footer
      %s20 = sadd.s32 1, %s16
    $region7: #{transformer_decoder_forward.11} parent=1 // loop_footer_branch
      %15 = sbr.rel target = $region3
    $region8: #{transformer_decoder_forward.11} parent=1 // loop_exit
      _
    %514 = vsyncpa [#allocation3], 1
    %s515 = scalar_lea.sflag [#allocation3], 1
    %516 = vsyncpa %s515, 1

// kernel: transformer_decoder_forward.6
$region0: #{transformer_decoder_forward.6}
  #allocation0 [shape = 'u32[]', space=smem, size = 0x4, offset = 0x4, fixed_abs, tag = 'smem constant byte address 0x4 - core index']
  #allocation1 [shape = 'u32[144,128]{1,0:T(1,128)}', space=vmem, size = 0x12000, scoped, tag = 'internal scratch']
  %s0 = inlined_call_operand.vmem [shape: f32[2,8,32], index: 0, kind: input, shape index: {}, may-alias: {0,1}]
  %s1 = inlined_call_operand.vmem [shape: f32[2,8,32], index: 1, kind: input, shape index: {}, may-alias: {0,1}]
  %s2 = inlined_call_operand.vmem [shape: f32[2,1,8], index: 2, kind: input, shape index: {}]
  %s3 = inlined_call_operand.vmem [shape: f32[8,8], index: 3, kind: input, shape index: {}]
  %s4 = inlined_call_operand.vmem [shape: f32[32,32], index: 4, kind: input, shape index: {}]
  %s5 = inlined_call_operand.vmem [shape: f32[1,32], index: 5, kind: input, shape index: {}]
  %s6 = inlined_call_operand.vmem [shape: f32[32,64], index: 6, kind: input, shape index: {}]
  %s7 = inlined_call_operand.vmem [shape: f32[1,64], index: 7, kind: input, shape index: {}]
  %s8 = inlined_call_operand.hbm [shape: f32[32,32], index: 8, kind: input, shape index: {}]
  %s9 = inlined_call_operand.vmem [shape: f32[1,32], index: 9, kind: input, shape index: {}]
  %s10 = inlined_call_operand.vmem [shape: f32[1,32], index: 10, kind: input, shape index: {}]
  %s11 = inlined_call_operand.vmem [shape: f32[1,32], index: 11, kind: input, shape index: {}]
  %s12 = inlined_call_operand.vmem [shape: f32[2,8,32], index: 12, kind: output, shape index: {}]
  %s13 = sld [smem:[#allocation0]]
  $region85: #{transformer_decoder_forward.6} parent=0
    _
  %s15 = ssub.s32 1, %s13
  %s16 = scalar_select 0, %s15, %s13
  $region1: #{transformer_decoder_forward.6} parent=0
    #allocation2 [shape = 'u8[16384]{0}', space=vmem, size = 0x4000, scoped, tag = 'input window, operand 8, single buffered']
    #allocation3 [shape = 's32[2]{0}', space=sflag, size = 0x8, scoped, tag = 'scoped memory for transformer_decoder_forward.6']
    %17 = vsyncpa [#allocation3], 0
    loop: start=0, step=1, limit=4
    $region2: #{transformer_decoder_forward.6} parent=1 // loop_pre_header
      _
    $region3: #{transformer_decoder_forward.6} parent=1 // loop_header
      %s19 = sphi 0, %s23
      %p20 = scmp.ge.s32.totalorder %s19, 4
      %s29 = sphi 0, %s31
      %s32 = sphi 0, %s29
      %s33 = sphi 0, %s32
      %s49 = sphi 0, %s33
      %s55 = sphi 0, %s57
      %s58 = sphi 0, %s55
      %s59 = sphi 0, %s58
      %s75 = sphi 0, %s59
      %s81 = sphi 0, %s83
      %s84 = sphi 0, %s81
      %s85 = sphi 0, %s84
      %s101 = sphi 0, %s85
      %s105 = sphi 0, %s105
      %s107 = sphi 0, %s105
      %s108 = sphi 0, %s107
      %s122 = sphi 0, %s108
      %s126 = sphi 0, %s126
      %s128 = sphi 0, %s126
      %s129 = sphi 0, %s128
      %s143 = sphi 0, %s129
      %s147 = sphi 0, %s147
      %s149 = sphi 0, %s147
      %s150 = sphi 0, %s149
      %s164 = sphi 0, %s150
      %s168 = sphi 0, %s168
      %s170 = sphi 0, %s168
      %s171 = sphi 0, %s170
      %s185 = sphi 0, %s171
      %s189 = sphi 0, %s189
      %s191 = sphi 0, %s189
      %s192 = sphi 0, %s191
      %s206 = sphi 0, %s192
      %s210 = sphi 0, %s210
      %s212 = sphi 0, %s210
      %s213 = sphi 0, %s212
      %s227 = sphi 0, %s213
      %s231 = sphi 0, %s231
      %s233 = sphi 0, %s231
      %s234 = sphi 0, %s233
      %s248 = sphi 0, %s234
      %s252 = sphi 0, %s252
      %s254 = sphi 0, %s252
      %s255 = sphi 0, %s254
      %s269 = sphi 0, %s255
      %s273 = sphi 0, %s273
      %s275 = sphi 0, %s273
      %s276 = sphi 0, %s275
      %s290 = sphi 0, %s276
      %s296 = sphi 0, %s298
      %s299 = sphi 0, %s296
      %s300 = sphi 0, %s299
      %s316 = sphi 0, %s300
    $region4: #{transformer_decoder_forward.6} parent=1 // loop_header_branch
      %22 = sbr.rel (%p20) target = $region8
    $region5: #{transformer_decoder_forward.6} parent=1 // loop_body
      %s24 = ssub.s32 %s19, 1
      %s25 = ssub.s32 %s19, 2
      %s26 = sadd.s32 %s19, 1
      %s27 = ssub.s32 %s19, %s26
      %p28 = scmp.eq.s32.totalorder %s27, 0
      %s30 = sadd.s32 %s29, 1
      %s31 = scalar_select %p28, %s29, %s30
      %p34 = pneg %p28
      %p35 = scmp.eq.s32.totalorder %s19, 1
      %p36 = por %p34, %p35
      %p37 = scmp.ne.s32.totalorder %s29, %s32
      %p38 = scmp.eq.s32.totalorder %s19, 0
      %p39 = por %p37, %p38
      %p40 = scmp.ne.s32.totalorder %s29, %s32
      %p41 = scmp.eq.s32.totalorder %s24, 1
      %p42 = por %p40, %p41
      %p43 = scmp.ne.s32.totalorder %s32, %s33
      %p44 = scmp.eq.s32.totalorder %s24, 0
      %p45 = por %p43, %p44
      %p46 = scmp.ne.s32.totalorder %s32, %s33
      %p47 = scmp.eq.s32.totalorder %s25, 1
      %p48 = por %p46, %p47
      %p50 = scmp.ne.s32.totalorder %s33, %s49
      %p51 = scmp.eq.s32.totalorder %s25, 0
      %p52 = por %p50, %p51
      %s53 = ssub.s32 %s19, %s26
      %p54 = scmp.eq.s32.totalorder %s53, 0
      %s56 = sadd.s32 %s55, 1
      %s57 = scalar_select %p54, %s55, %s56
      %p60 = pneg %p54
      %p61 = scmp.eq.s32.totalorder %s19, 1
      %p62 = por %p60, %p61
      %p63 = scmp.ne.s32.totalorder %s55, %s58
      %p64 = scmp.eq.s32.totalorder %s19, 0
      %p65 = por %p63, %p64
      %p66 = scmp.ne.s32.totalorder %s55, %s58
      %p67 = scmp.eq.s32.totalorder %s24, 1
      %p68 = por %p66, %p67
      %p69 = scmp.ne.s32.totalorder %s58, %s59
      %p70 = scmp.eq.s32.totalorder %s24, 0
      %p71 = por %p69, %p70
      %p72 = scmp.ne.s32.totalorder %s58, %s59
      %p73 = scmp.eq.s32.totalorder %s25, 1
      %p74 = por %p72, %p73
      %p76 = scmp.ne.s32.totalorder %s59, %s75
      %p77 = scmp.eq.s32.totalorder %s25, 0
      %p78 = por %p76, %p77
      %s79 = ssub.s32 %s19, %s26
      %p80 = scmp.eq.s32.totalorder %s79, 0
      %s82 = sadd.s32 %s81, 1
      %s83 = scalar_select %p80, %s81, %s82
      %p86 = pneg %p80
      %p87 = scmp.eq.s32.totalorder %s19, 1
      %p88 = por %p86, %p87
      %p89 = scmp.ne.s32.totalorder %s81, %s84
      %p90 = scmp.eq.s32.totalorder %s19, 0
      %p91 = por %p89, %p90
      %p92 = scmp.ne.s32.totalorder %s81, %s84
      %p93 = scmp.eq.s32.totalorder %s24, 1
      %p94 = por %p92, %p93
      %p95 = scmp.ne.s32.totalorder %s84, %s85
      %p96 = scmp.eq.s32.totalorder %s24, 0
      %p97 = por %p95, %p96
      %p98 = scmp.ne.s32.totalorder %s84, %s85
      %p99 = scmp.eq.s32.totalorder %s25, 1
      %p100 = por %p98, %p99
      %p102 = scmp.ne.s32.totalorder %s85, %s101
      %p103 = scmp.eq.s32.totalorder %s25, 0
      %p104 = por %p102, %p103
      %s106 = sadd.s32 %s105, 1
      %p109 = scmp.eq.s32.totalorder %s19, 1
      %p110 = scmp.ne.s32.totalorder %s105, %s107
      %p111 = scmp.eq.s32.totalorder %s19, 0
      %p112 = por %p110, %p111
      %p113 = scmp.ne.s32.totalorder %s105, %s107
      %p114 = scmp.eq.s32.totalorder %s24, 1
      %p115 = por %p113, %p114
      %p116 = scmp.ne.s32.totalorder %s107, %s108
      %p117 = scmp.eq.s32.totalorder %s24, 0
      %p118 = por %p116, %p117
      %p119 = scmp.ne.s32.totalorder %s107, %s108
      %p120 = scmp.eq.s32.totalorder %s25, 1
      %p121 = por %p119, %p120
      %p123 = scmp.ne.s32.totalorder %s108, %s122
      %p124 = scmp.eq.s32.totalorder %s25, 0
      %p125 = por %p123, %p124
      %s127 = sadd.s32 %s126, 1
      %p130 = scmp.eq.s32.totalorder %s19, 1
      %p131 = scmp.ne.s32.totalorder %s126, %s128
      %p132 = scmp.eq.s32.totalorder %s19, 0
      %p133 = por %p131, %p132
      %p134 = scmp.ne.s32.totalorder %s126, %s128
      %p135 = scmp.eq.s32.totalorder %s24, 1
      %p136 = por %p134, %p135
      %p137 = scmp.ne.s32.totalorder %s128, %s129
      %p138 = scmp.eq.s32.totalorder %s24, 0
      %p139 = por %p137, %p138
      %p140 = scmp.ne.s32.totalorder %s128, %s129
      %p141 = scmp.eq.s32.totalorder %s25, 1
      %p142 = por %p140, %p141
      %p144 = scmp.ne.s32.totalorder %s129, %s143
      %p145 = scmp.eq.s32.totalorder %s25, 0
      %p146 = por %p144, %p145
      %s148 = sadd.s32 %s147, 1
      %p151 = scmp.eq.s32.totalorder %s19, 1
      %p152 = scmp.ne.s32.totalorder %s147, %s149
      %p153 = scmp.eq.s32.totalorder %s19, 0
      %p154 = por %p152, %p153
      %p155 = scmp.ne.s32.totalorder %s147, %s149
      %p156 = scmp.eq.s32.totalorder %s24, 1
      %p157 = por %p155, %p156
      %p158 = scmp.ne.s32.totalorder %s149, %s150
      %p159 = scmp.eq.s32.totalorder %s24, 0
      %p160 = por %p158, %p159
      %p161 = scmp.ne.s32.totalorder %s149, %s150
      %p162 = scmp.eq.s32.totalorder %s25, 1
      %p163 = por %p161, %p162
      %p165 = scmp.ne.s32.totalorder %s150, %s164
      %p166 = scmp.eq.s32.totalorder %s25, 0
      %p167 = por %p165, %p166
      %s169 = sadd.s32 %s168, 1
      %p172 = scmp.eq.s32.totalorder %s19, 1
      %p173 = scmp.ne.s32.totalorder %s168, %s170
      %p174 = scmp.eq.s32.totalorder %s19, 0
      %p175 = por %p173, %p174
      %p176 = scmp.ne.s32.totalorder %s168, %s170
      %p177 = scmp.eq.s32.totalorder %s24, 1
      %p178 = por %p176, %p177
      %p179 = scmp.ne.s32.totalorder %s170, %s171
      %p180 = scmp.eq.s32.totalorder %s24, 0
      %p181 = por %p179, %p180
      %p182 = scmp.ne.s32.totalorder %s170, %s171
      %p183 = scmp.eq.s32.totalorder %s25, 1
      %p184 = por %p182, %p183
      %p186 = scmp.ne.s32.totalorder %s171, %s185
      %p187 = scmp.eq.s32.totalorder %s25, 0
      %p188 = por %p186, %p187
      %s190 = sadd.s32 %s189, 1
      %p193 = scmp.eq.s32.totalorder %s19, 1
      %p194 = scmp.ne.s32.totalorder %s189, %s191
      %p195 = scmp.eq.s32.totalorder %s19, 0
      %p196 = por %p194, %p195
      %p197 = scmp.ne.s32.totalorder %s189, %s191
      %p198 = scmp.eq.s32.totalorder %s24, 1
      %p199 = por %p197, %p198
      %p200 = scmp.ne.s32.totalorder %s191, %s192
      %p201 = scmp.eq.s32.totalorder %s24, 0
      %p202 = por %p200, %p201
      %p203 = scmp.ne.s32.totalorder %s191, %s192
      %p204 = scmp.eq.s32.totalorder %s25, 1
      %p205 = por %p203, %p204
      %p207 = scmp.ne.s32.totalorder %s192, %s206
      %p208 = scmp.eq.s32.totalorder %s25, 0
      %p209 = por %p207, %p208
      %s211 = sadd.s32 %s210, 1
      %p214 = scmp.eq.s32.totalorder %s19, 1
      %p215 = scmp.ne.s32.totalorder %s210, %s212
      %p216 = scmp.eq.s32.totalorder %s19, 0
      %p217 = por %p215, %p216
      %p218 = scmp.ne.s32.totalorder %s210, %s212
      %p219 = scmp.eq.s32.totalorder %s24, 1
      %p220 = por %p218, %p219
      %p221 = scmp.ne.s32.totalorder %s212, %s213
      %p222 = scmp.eq.s32.totalorder %s24, 0
      %p223 = por %p221, %p222
      %p224 = scmp.ne.s32.totalorder %s212, %s213
      %p225 = scmp.eq.s32.totalorder %s25, 1
      %p226 = por %p224, %p225
      %p228 = scmp.ne.s32.totalorder %s213, %s227
      %p229 = scmp.eq.s32.totalorder %s25, 0
      %p230 = por %p228, %p229
      %s232 = sadd.s32 %s231, 1
      %p235 = scmp.eq.s32.totalorder %s19, 1
      %p236 = scmp.ne.s32.totalorder %s231, %s233
      %p237 = scmp.eq.s32.totalorder %s19, 0
      %p238 = por %p236, %p237
      %p239 = scmp.ne.s32.totalorder %s231, %s233
      %p240 = scmp.eq.s32.totalorder %s24, 1
      %p241 = por %p239, %p240
      %p242 = scmp.ne.s32.totalorder %s233, %s234
      %p243 = scmp.eq.s32.totalorder %s24, 0
      %p244 = por %p242, %p243
      %p245 = scmp.ne.s32.totalorder %s233, %s234
      %p246 = scmp.eq.s32.totalorder %s25, 1
      %p247 = por %p245, %p246
      %p249 = scmp.ne.s32.totalorder %s234, %s248
      %p250 = scmp.eq.s32.totalorder %s25, 0
      %p251 = por %p249, %p250
      %s253 = sadd.s32 %s252, 1
      %p256 = scmp.eq.s32.totalorder %s19, 1
      %p257 = scmp.ne.s32.totalorder %s252, %s254
      %p258 = scmp.eq.s32.totalorder %s19, 0
      %p259 = por %p257, %p258
      %p260 = scmp.ne.s32.totalorder %s252, %s254
      %p261 = scmp.eq.s32.totalorder %s24, 1
      %p262 = por %p260, %p261
      %p263 = scmp.ne.s32.totalorder %s254, %s255
      %p264 = scmp.eq.s32.totalorder %s24, 0
      %p265 = por %p263, %p264
      %p266 = scmp.ne.s32.totalorder %s254, %s255
      %p267 = scmp.eq.s32.totalorder %s25, 1
      %p268 = por %p266, %p267
      %p270 = scmp.ne.s32.totalorder %s255, %s269
      %p271 = scmp.eq.s32.totalorder %s25, 0
      %p272 = por %p270, %p271
      %s274 = sadd.s32 %s273, 1
      %p277 = scmp.eq.s32.totalorder %s19, 1
      %p278 = scmp.ne.s32.totalorder %s273, %s275
      %p279 = scmp.eq.s32.totalorder %s19, 0
      %p280 = por %p278, %p279
      %p281 = scmp.ne.s32.totalorder %s273, %s275
      %p282 = scmp.eq.s32.totalorder %s24, 1
      %p283 = por %p281, %p282
      %p284 = scmp.ne.s32.totalorder %s275, %s276
      %p285 = scmp.eq.s32.totalorder %s24, 0
      %p286 = por %p284, %p285
      %p287 = scmp.ne.s32.totalorder %s275, %s276
      %p288 = scmp.eq.s32.totalorder %s25, 1
      %p289 = por %p287, %p288
      %p291 = scmp.ne.s32.totalorder %s276, %s290
      %p292 = scmp.eq.s32.totalorder %s25, 0
      %p293 = por %p291, %p292
      %s294 = ssub.s32 %s19, %s26
      %p295 = scmp.eq.s32.totalorder %s294, 0
      %s297 = sadd.s32 %s296, 1
      %s298 = scalar_select %p295, %s296, %s297
      %p301 = pneg %p295
      %p302 = scmp.eq.s32.totalorder %s19, 1
      %p303 = por %p301, %p302
      %p304 = scmp.ne.s32.totalorder %s296, %s299
      %p305 = scmp.eq.s32.totalorder %s19, 0
      %p306 = por %p304, %p305
      %p307 = scmp.ne.s32.totalorder %s296, %s299
      %p308 = scmp.eq.s32.totalorder %s24, 1
      %p309 = por %p307, %p308
      %p310 = scmp.ne.s32.totalorder %s299, %s300
      %p311 = scmp.eq.s32.totalorder %s24, 0
      %p312 = por %p310, %p311
      %p313 = scmp.ne.s32.totalorder %s299, %s300
      %p314 = scmp.eq.s32.totalorder %s25, 1
      %p315 = por %p313, %p314
      %p317 = scmp.ne.s32.totalorder %s300, %s316
      %p318 = scmp.eq.s32.totalorder %s25, 0
      %p319 = por %p317, %p318
      %p320 = scmp.le.s32.totalorder 1, %s19
      %p321 = scmp.lt.s32.totalorder %s19, 3
      %p322 = pnand %p320, %p321
      %p323 = pneg %p322
      // Predicated region
      $region9: #{transformer_decoder_forward.6} parent=5 // pred_check
        _
      $region10: #{transformer_decoder_forward.6} parent=5 // pred_check_branch
        %325 = sbr.rel (%p322) target = $region12
      $region11: #{transformer_decoder_forward.6} parent=5 // pred_region
        %s326 = ssub.s32 %s19, 1
        // Predicated region
        $region13: #{transformer_decoder_forward.6} parent=11 // pred_check
          %p327 = pneg %p118
        $region14: #{transformer_decoder_forward.6} parent=11 // pred_check_branch
          %329 = sbr.rel (%p327) target = $region16
        $region15: #{transformer_decoder_forward.6} parent=11 // pred_region
          _
        $region16: #{transformer_decoder_forward.6} parent=11 // pred_fallthru
          _
        // Predicated region
        $region17: #{transformer_decoder_forward.6} parent=11 // pred_check
          %p330 = pneg %p139
        $region18: #{transformer_decoder_forward.6} parent=11 // pred_check_branch
          %332 = sbr.rel (%p330) target = $region20
        $region19: #{transformer_decoder_forward.6} parent=11 // pred_region
          _
        $region20: #{transformer_decoder_forward.6} parent=11 // pred_fallthru
          _
        // Predicated region
        $region21: #{transformer_decoder_forward.6} parent=11 // pred_check
          %p333 = pneg %p160
        $region22: #{transformer_decoder_forward.6} parent=11 // pred_check_branch
          %335 = sbr.rel (%p333) target = $region24
        $region23: #{transformer_decoder_forward.6} parent=11 // pred_region
          _
        $region24: #{transformer_decoder_forward.6} parent=11 // pred_fallthru
          _
        // Predicated region
        $region25: #{transformer_decoder_forward.6} parent=11 // pred_check
          %p336 = pneg %p181
        $region26: #{transformer_decoder_forward.6} parent=11 // pred_check_branch
          %338 = sbr.rel (%p336) target = $region28
        $region27: #{transformer_decoder_forward.6} parent=11 // pred_region
          _
        $region28: #{transformer_decoder_forward.6} parent=11 // pred_fallthru
          _
        // Predicated region
        $region29: #{transformer_decoder_forward.6} parent=11 // pred_check
          %p339 = pneg %p202
        $region30: #{transformer_decoder_forward.6} parent=11 // pred_check_branch
          %341 = sbr.rel (%p339) target = $region32
        $region31: #{transformer_decoder_forward.6} parent=11 // pred_region
          _
        $region32: #{transformer_decoder_forward.6} parent=11 // pred_fallthru
          _
        // Predicated region
        $region33: #{transformer_decoder_forward.6} parent=11 // pred_check
          %p342 = pneg %p223
        $region34: #{transformer_decoder_forward.6} parent=11 // pred_check_branch
          %344 = sbr.rel (%p342) target = $region36
        $region35: #{transformer_decoder_forward.6} parent=11 // pred_region
          %s346 = ssub.s32 512, 512
          %347 = vsyncadd [#allocation3], %s346
          %s348 = sshll.u32 [#allocation2], 4
          %s349 = int_to_ptr.vmem [resolvable:$true] %s348
          %354 = dma.hbm_to_vmem [thread:$0]  %s8, 512, %s349, [#allocation3], 128, 128, 8
        $region36: #{transformer_decoder_forward.6} parent=11 // pred_fallthru
          _
        // Predicated region
        $region37: #{transformer_decoder_forward.6} parent=11 // pred_check
          %p355 = pneg %p244
        $region38: #{transformer_decoder_forward.6} parent=11 // pred_check_branch
          %357 = sbr.rel (%p355) target = $region40
        $region39: #{transformer_decoder_forward.6} parent=11 // pred_region
          _
        $region40: #{transformer_decoder_forward.6} parent=11 // pred_fallthru
          _
        // Predicated region
        $region41: #{transformer_decoder_forward.6} parent=11 // pred_check
          %p358 = pneg %p265
        $region42: #{transformer_decoder_forward.6} parent=11 // pred_check_branch
          %360 = sbr.rel (%p358) target = $region44
        $region43: #{transformer_decoder_forward.6} parent=11 // pred_region
          _
        $region44: #{transformer_decoder_forward.6} parent=11 // pred_fallthru
          _
        // Predicated region
        $region45: #{transformer_decoder_forward.6} parent=11 // pred_check
          %p361 = pneg %p286
        $region46: #{transformer_decoder_forward.6} parent=11 // pred_check_branch
          %363 = sbr.rel (%p361) target = $region48
        $region47: #{transformer_decoder_forward.6} parent=11 // pred_region
          _
        $region48: #{transformer_decoder_forward.6} parent=11 // pred_fallthru
          _
      $region12: #{transformer_decoder_forward.6} parent=5 // pred_fallthru
        _
      %p364 = scmp.lt.s32.totalorder %s19, 2
      // Predicated region
      $region49: #{transformer_decoder_forward.6} parent=5 // pred_check
        %p365 = pneg %p364
      $region50: #{transformer_decoder_forward.6} parent=5 // pred_check_branch
        %367 = sbr.rel (%p365) target = $region52
      $region51: #{transformer_decoder_forward.6} parent=5 // pred_region
        // Predicated region
        $region53: #{transformer_decoder_forward.6} parent=51 // pred_check
          %p368 = pneg %p39
        $region54: #{transformer_decoder_forward.6} parent=51 // pred_check_branch
          %370 = sbr.rel (%p368) target = $region56
        $region55: #{transformer_decoder_forward.6} parent=51 // pred_region
          %p371 = scmp.lt.s32.totalorder %s19, 1
          %s372 = scalar_select %p371, %s19, 1
          %s373 = smul.addr %s372, 8
          %s374 = scalar_lea.vmem %s0, %s373
        $region56: #{transformer_decoder_forward.6} parent=51 // pred_fallthru
          _
        // Predicated region
        $region57: #{transformer_decoder_forward.6} parent=51 // pred_check
          %p375 = pneg %p65
        $region58: #{transformer_decoder_forward.6} parent=51 // pred_check_branch
          %377 = sbr.rel (%p375) target = $region60
        $region59: #{transformer_decoder_forward.6} parent=51 // pred_region
          %p378 = scmp.lt.s32.totalorder %s19, 1
          %s379 = scalar_select %p378, %s19, 1
          %s380 = smul.addr %s379, 8
          %s381 = scalar_lea.vmem %s1, %s380
        $region60: #{transformer_decoder_forward.6} parent=51 // pred_fallthru
          _
        // Predicated region
        $region61: #{transformer_decoder_forward.6} parent=51 // pred_check
          %p382 = pneg %p91
        $region62: #{transformer_decoder_forward.6} parent=51 // pred_check_branch
          %384 = sbr.rel (%p382) target = $region64
        $region63: #{transformer_decoder_forward.6} parent=51 // pred_region
          %p385 = scmp.lt.s32.totalorder %s19, 1
          %s386 = scalar_select %p385, %s19, 1
          %s387 = scalar_lea.vmem %s2, %s386
        $region64: #{transformer_decoder_forward.6} parent=51 // pred_fallthru
          _
      $region52: #{transformer_decoder_forward.6} parent=5 // pred_fallthru
        _
      %p388 = scmp.le.s32.totalorder 1, %s19
      %p389 = scmp.lt.s32.totalorder %s19, 3
      %p390 = pnand %p388, %p389
      %p391 = pneg %p390
      // Predicated region
      $region65: #{transformer_decoder_forward.6} parent=5 // pred_check
        _
      $region66: #{transformer_decoder_forward.6} parent=5 // pred_check_branch
        %393 = sbr.rel (%p390) target = $region68
      $region67: #{transformer_decoder_forward.6} parent=5 // pred_region
        %s394 = ssub.s32 %s19, 1
        // Predicated region
        $region69: #{transformer_decoder_forward.6} parent=67 // pred_check
          %p395 = pneg %p223
        $region70: #{transformer_decoder_forward.6} parent=67 // pred_check_branch
          %397 = sbr.rel (%p395) target = $region72
        $region71: #{transformer_decoder_forward.6} parent=67 // pred_region
          %398 = dma.done [#allocation3], 512
        $region72: #{transformer_decoder_forward.6} parent=67 // pred_fallthru
          _
        %p399 = scmp.lt.s32.totalorder %s24, 1
        %s400 = scalar_select %p399, %s24, 1
        %s401 = smul.addr %s400, 8
        %s402 = scalar_lea.vmem %s0, %s401
        %p403 = pneg %p45
        %p404 = pneg %p42
        %p405 = scmp.lt.s32.totalorder %s24, 1
        %s406 = scalar_select %p405, %s24, 1
        %s407 = smul.addr %s406, 8
        %s408 = scalar_lea.vmem %s1, %s407
        %p409 = pneg %p71
        %p410 = pneg %p68
        %p411 = scmp.lt.s32.totalorder %s24, 1
        %s412 = scalar_select %p411, %s24, 1
        %s413 = scalar_lea.vmem %s2, %s412
        %p414 = pneg %p97
        %p415 = pneg %p94
        %p416 = pneg %p118
        %p417 = pneg %p115
        %p418 = pneg %p139
        %p419 = pneg %p136
        %p420 = pneg %p160
        %p421 = pneg %p157
        %p422 = pneg %p181
        %p423 = pneg %p178
        %p424 = pneg %p202
        %p425 = pneg %p199
        %p426 = pneg %p223
        %p427 = pneg %p220
        %p428 = pneg %p244
        %p429 = pneg %p241
        %p430 = pneg %p265
        %p431 = pneg %p262
        %p432 = pneg %p286
        %p433 = pneg %p283
        %p434 = pneg %p312
        %p435 = pneg %p309
        %p436 = scmp.lt.s32.totalorder %s24, 1
        %s437 = scalar_select %p436, %s24, 1
        %s438 = smul.addr %s437, 8
        %s439 = scalar_lea.vmem %s12, %s438
        %p440 = scmp.lt.s32.totalorder %s24, 1
        %s441 = scalar_select %p440, %s24, 1
        %s442 = smul.addr %s441, 8
        %s443 = scalar_lea.vmem %s0, %s442
        %p444 = scmp.lt.s32.totalorder %s24, 1
        %s445 = scalar_select %p444, %s24, 1
        %s446 = smul.addr %s445, 8
        %s447 = scalar_lea.vmem %s1, %s446
        %p448 = scmp.lt.s32.totalorder %s24, 1
        %s449 = scalar_select %p448, %s24, 1
        %s450 = scalar_lea.vmem %s2, %s449
        %p451 = scmp.lt.s32.totalorder %s24, 1
        %s452 = scalar_select %p451, %s24, 1
        %s453 = smul.addr %s452, 8
        %s454 = scalar_lea.vmem %s12, %s453
        %v455 = vld [vmem:[%s443] sm:$0xff]
        %v456 = vld [vmem:[%s447] sm:$0xff]
        %v457 = vld [vmem:[%s4] sm:$0xff]
        %v458 = vld [vmem:[%s4 + $0x8] sm:$0xff]
        %v459 = vld [vmem:[%s4 + $0x10] sm:$0xff]
        %v460 = vld [vmem:[%s4 + $0x18] sm:$0xff]
        %v461 = vld [vmem:[%s5] sm:$0x1]
        %v463 = vlaneseq
        %v464 = vshrl.u32 %v463, 7
        %v465 = vsub.s32 0, %v464
        %v466 = vrot.slane %v461, %v465
        %vm468 = vcmask 261120
        %v470 = vsel %vm468, %v455, 0
        %472 = vmatprep.subr.mxu0 0.0
        %473 = vmatpush1.msra.mxu0 0.0
        %474 = vmatprep.subr.mxu0 0.0
        %475 = vmatpush1.msra.mxu0 0.0
        %476 = vmatprep.subr.mxu0 0.0
        %477 = vmatpush1.msra.mxu0 0.0
        %478 = vmatprep.subr.mxu0 0.0
        %479 = vmatpush1.msra.mxu0 0.0
        %480 = vmatprep.subr.mxu0 0.0
        %481 = vmatpush1.msra.mxu0 0.0
        %482 = vmatprep.subr.mxu0 0.0
        %483 = vmatpush1.msra.mxu0 0.0
        %484 = vmatprep.subr.mxu0 0.0
        %485 = vmatpush1.msra.mxu0 0.0
        %486 = vmatprep.subr.mxu0 0.0
        %487 = vmatpush1.msra.mxu0 0.0
        %488 = vmatprep.subr.mxu0 0.0
        %489 = vmatpush1.msra.mxu0 0.0
        %490 = vmatprep.subr.mxu0 0.0
        %491 = vmatpush1.msra.mxu0 0.0
        %492 = vmatprep.subr.mxu0 0.0
        %493 = vmatpush1.msra.mxu0 0.0
        %494 = vmatprep.subr.mxu0 0.0
        %495 = vmatpush1.msra.mxu0 0.0
        %496 = vmatprep.subr.mxu0 0.0
        %497 = vmatpush1.msra.mxu0 %v460
        %498 = vmatprep.subr.mxu0 0.0
        %499 = vmatpush1.msra.mxu0 %v459
        %500 = vmatprep.subr.mxu0 0.0
        %501 = vmatpush1.msra.mxu0 %v458
        %502 = vmatprep.subr.mxu0 0.0
        %503 = vmatpush1.msra.mxu0 %v457
        %504 = vmatprep.subr.mxu0 0.0
        %505 = vmatpush2.msra.mxu0 0.0
        %506 = vmatprep.subr.mxu0 0.0
        %507 = vmatpush2.msra.mxu0 0.0
        %508 = vmatprep.subr.mxu0 0.0
        %509 = vmatpush2.msra.mxu0 0.0
        %510 = vmatprep.subr.mxu0 0.0
        %511 = vmatpush2.msra.mxu0 0.0
        %512 = vmatprep.subr.mxu0 0.0
        %513 = vmatpush2.msra.mxu0 0.0
        %514 = vmatprep.subr.mxu0 0.0
        %515 = vmatpush2.msra.mxu0 0.0
        %516 = vmatprep.subr.mxu0 0.0
        %517 = vmatpush2.msra.mxu0 0.0
        %518 = vmatprep.subr.mxu0 0.0
        %519 = vmatpush2.msra.mxu0 0.0
        %520 = vmatprep.subr.mxu0 0.0
        %521 = vmatpush2.msra.mxu0 0.0
        %522 = vmatprep.subr.mxu0 0.0
        %523 = vmatpush2.msra.mxu0 0.0
        %524 = vmatprep.subr.mxu0 0.0
        %525 = vmatpush2.msra.mxu0 0.0
        %526 = vmatprep.subr.mxu0 0.0
        %527 = vmatpush2.msra.mxu0 0.0
        %528 = vmatprep.subr.mxu0 0.0
        %529 = vmatpush2.msra.mxu0 0.0
        %530 = vmatprep.subr.mxu0 0.0
        %531 = vmatpush2.msra.mxu0 0.0
        %532 = vmatprep.subr.mxu0 0.0
        %533 = vmatpush2.msra.mxu0 0.0
        %534 = vmatprep.subr.mxu0 0.0
        %535 = vmatpush2.msra.mxu0 0.0
        %536 = vmatprep.mubr.f32.mxu0 0.0
        %537 = vmatmul.mubr.f32.gmra.mxu0 %v470
        %v538 = vpop.f32.mrf.mxu0
        %v539 = vadd.f32 %v466, %v538
        %v540 = vpop.f32.mrf.mxu0
        %541 = vdwg.mxu0
        %v542 = vld [vmem:[%s6] sm:$0xff]
        %v543 = vld [vmem:[%s6 + $0x8] sm:$0xff]
        %v544 = vld [vmem:[%s6 + $0x10] sm:$0xff]
        %v545 = vld [vmem:[%s6 + $0x18] sm:$0xff]
        %v546 = vld [vmem:[%s7] sm:$0x1]
        %v548 = vlaneseq
        %v549 = vshrl.u32 %v548, 7
        %v550 = vsub.s32 0, %v549
        %v551 = vrot.slane %v546, %v550
        %v554 = vsel %vm468, %v456, 0
        %556 = vmatprep.subr.mxu0 0.0
        %557 = vmatpush1.msra.mxu0 0.0
        %558 = vmatprep.subr.mxu0 0.0
        %559 = vmatpush1.msra.mxu0 0.0
        %560 = vmatprep.subr.mxu0 0.0
        %561 = vmatpush1.msra.mxu0 0.0
        %562 = vmatprep.subr.mxu0 0.0
        %563 = vmatpush1.msra.mxu0 0.0
        %564 = vmatprep.subr.mxu0 0.0
        %565 = vmatpush1.msra.mxu0 0.0
        %566 = vmatprep.subr.mxu0 0.0
        %567 = vmatpush1.msra.mxu0 0.0
        %568 = vmatprep.subr.mxu0 0.0
        %569 = vmatpush1.msra.mxu0 0.0
        %570 = vmatprep.subr.mxu0 0.0
        %571 = vmatpush1.msra.mxu0 0.0
        %572 = vmatprep.subr.mxu0 0.0
        %573 = vmatpush1.msra.mxu0 0.0
        %574 = vmatprep.subr.mxu0 0.0
        %575 = vmatpush1.msra.mxu0 0.0
        %576 = vmatprep.subr.mxu0 0.0
        %577 = vmatpush1.msra.mxu0 0.0
        %578 = vmatprep.subr.mxu0 0.0
        %579 = vmatpush1.msra.mxu0 0.0
        %580 = vmatprep.subr.mxu0 0.0
        %581 = vmatpush1.msra.mxu0 %v545
        %582 = vmatprep.subr.mxu0 0.0
        %583 = vmatpush1.msra.mxu0 %v544
        %584 = vmatprep.subr.mxu0 0.0
        %585 = vmatpush1.msra.mxu0 %v543
        %586 = vmatprep.subr.mxu0 0.0
        %587 = vmatpush1.msra.mxu0 %v542
        %588 = vmatprep.subr.mxu0 0.0
        %589 = vmatpush2.msra.mxu0 0.0
        %590 = vmatprep.subr.mxu0 0.0
        %591 = vmatpush2.msra.mxu0 0.0
        %592 = vmatprep.subr.mxu0 0.0
        %593 = vmatpush2.msra.mxu0 0.0
        %594 = vmatprep.subr.mxu0 0.0
        %595 = vmatpush2.msra.mxu0 0.0
        %596 = vmatprep.subr.mxu0 0.0
        %597 = vmatpush2.msra.mxu0 0.0
        %598 = vmatprep.subr.mxu0 0.0
        %599 = vmatpush2.msra.mxu0 0.0
        %600 = vmatprep.subr.mxu0 0.0
        %601 = vmatpush2.msra.mxu0 0.0
        %602 = vmatprep.subr.mxu0 0.0
        %603 = vmatpush2.msra.mxu0 0.0
        %604 = vmatprep.subr.mxu0 0.0
        %605 = vmatpush2.msra.mxu0 0.0
        %606 = vmatprep.subr.mxu0 0.0
        %607 = vmatpush2.msra.mxu0 0.0
        %608 = vmatprep.subr.mxu0 0.0
        %609 = vmatpush2.msra.mxu0 0.0
        %610 = vmatprep.subr.mxu0 0.0
        %611 = vmatpush2.msra.mxu0 0.0
        %612 = vmatprep.subr.mxu0 0.0
        %613 = vmatpush2.msra.mxu0 0.0
        %614 = vmatprep.subr.mxu0 0.0
        %615 = vmatpush2.msra.mxu0 0.0
        %616 = vmatprep.subr.mxu0 0.0
        %617 = vmatpush2.msra.mxu0 0.0
        %618 = vmatprep.subr.mxu0 0.0
        %619 = vmatpush2.msra.mxu0 0.0
        %620 = vmatprep.mubr.f32.mxu0 0.0
        %621 = vmatmul.mubr.f32.gmra.mxu0 %v554
        %v622 = vpop.f32.mrf.mxu0
        %v623 = vadd.f32 %v551, %v622
        %v624 = vpop.f32.mrf.mxu0
        %625 = vdwg.mxu0
        %v626 = vld [vmem:[%s450] sm:$0x1]
        %v627 = vld [vmem:[%s3] sm:$0xff]
        %v629 = vlaneseq
        %v630 = vshrl.u32 %v629, 7
        %v631 = vsub.s32 0, %v630
        %v632 = vrot.slane %v626, %v631
        %v634 = vmax.f32 %v632, %v627
        %vm635 = vcmp.gt.f32.partialorder %v634, 0.5
        %v636 = vsel %vm635, -1e+30, 0.0
        %vm637 = vcmask 64512
        %v639 = vsel %vm637, %v539, 0
        %v642 = vsel %vm637, %v623, 0
        %644 = vmatprep.subr.mxu0 0.0
        %645 = vmatpush1.xpose.msra.mxu0 0.0
        %646 = vmatprep.subr.mxu0 0.0
        %647 = vmatpush1.xpose.msra.mxu0 0.0
        %648 = vmatprep.subr.mxu0 0.0
        %649 = vmatpush1.xpose.msra.mxu0 0.0
        %650 = vmatprep.subr.mxu0 0.0
        %651 = vmatpush1.xpose.msra.mxu0 0.0
        %652 = vmatprep.subr.mxu0 0.0
        %653 = vmatpush1.xpose.msra.mxu0 0.0
        %654 = vmatprep.subr.mxu0 0.0
        %655 = vmatpush1.xpose.msra.mxu0 0.0
        %656 = vmatprep.subr.mxu0 0.0
        %657 = vmatpush1.xpose.msra.mxu0 0.0
        %658 = vmatprep.subr.mxu0 0.0
        %659 = vmatpush1.xpose.msra.mxu0 0.0
        %660 = vmatprep.subr.mxu0 0.0
        %661 = vmatpush1.xpose.msra.mxu0 0.0
        %662 = vmatprep.subr.mxu0 0.0
        %663 = vmatpush1.xpose.msra.mxu0 0.0
        %664 = vmatprep.subr.mxu0 0.0
        %665 = vmatpush1.xpose.msra.mxu0 0.0
        %666 = vmatprep.subr.mxu0 0.0
        %667 = vmatpush1.xpose.msra.mxu0 0.0
        %668 = vmatprep.subr.mxu0 0.0
        %669 = vmatpush1.xpose.msra.mxu0 0.0
        %670 = vmatprep.subr.mxu0 0.0
        %671 = vmatpush1.xpose.msra.mxu0 0.0
        %672 = vmatprep.subr.mxu0 0.0
        %673 = vmatpush1.xpose.msra.mxu0 0.0
        %674 = vmatprep.subr.mxu0 0.0
        %675 = vmatpush1.xpose.msra.mxu0 %v642
        %676 = vmatprep.subr.mxu0 0.0
        %677 = vmatpush2.xpose.msra.mxu0 0.0
        %678 = vmatprep.subr.mxu0 0.0
        %679 = vmatpush2.xpose.msra.mxu0 0.0
        %680 = vmatprep.subr.mxu0 0.0
        %681 = vmatpush2.xpose.msra.mxu0 0.0
        %682 = vmatprep.subr.mxu0 0.0
        %683 = vmatpush2.xpose.msra.mxu0 0.0
        %684 = vmatprep.subr.mxu0 0.0
        %685 = vmatpush2.xpose.msra.mxu0 0.0
        %686 = vmatprep.subr.mxu0 0.0
        %687 = vmatpush2.xpose.msra.mxu0 0.0
        %688 = vmatprep.subr.mxu0 0.0
        %689 = vmatpush2.xpose.msra.mxu0 0.0
        %690 = vmatprep.subr.mxu0 0.0
        %691 = vmatpush2.xpose.msra.mxu0 0.0
        %692 = vmatprep.subr.mxu0 0.0
        %693 = vmatpush2.xpose.msra.mxu0 0.0
        %694 = vmatprep.subr.mxu0 0.0
        %695 = vmatpush2.xpose.msra.mxu0 0.0
        %696 = vmatprep.subr.mxu0 0.0
        %697 = vmatpush2.xpose.msra.mxu0 0.0
        %698 = vmatprep.subr.mxu0 0.0
        %699 = vmatpush2.xpose.msra.mxu0 0.0
        %700 = vmatprep.subr.mxu0 0.0
        %701 = vmatpush2.xpose.msra.mxu0 0.0
        %702 = vmatprep.subr.mxu0 0.0
        %703 = vmatpush2.xpose.msra.mxu0 0.0
        %704 = vmatprep.subr.mxu0 0.0
        %705 = vmatpush2.xpose.msra.mxu0 0.0
        %706 = vmatprep.subr.mxu0 0.0
        %707 = vmatpush2.xpose.msra.mxu0 0.0
        %708 = vmatprep.mubr.f32.mxu0 0.0
        %709 = vmatmul.mubr.f32.gmra.mxu0 %v639
        %v710 = vpop.f32.mrf.mxu0
        %v711 = vadd.f32 0.0, %v710
        %v712 = vpop.f32.mrf.mxu0
        %713 = vdwg.mxu0
        %v714 = vmul.f32 %v711, 0.35355338
        %v715 = vadd.f32 %v714, %v636
        %v716 = vsel %vm637, %v715, -inf
        %717 = vmax.xlane.f32.xlu0 %v716
        %v718 = vpop.xlane.xlu0 %717
        %v719 = vsub.f32 %v715, %v718
        %v720 = vmul.f32 %v719, 1.442695
        %v721 = vpow.pop %v720
        %v722 = vsel %vm637, %v721, 0.0
        %723 = vadd.xlane.f32.xlu0 %v722
        %v724 = vpop.xlane.xlu0 %723
        %v725 = vrcp.pop %v724
        %v726 = vmul.f32 %v721, %v725
        %727 = vrot.lane.b32.xlu0 %v623, 96
        %v728 = vpop.permute.xlu0 %727
        %v731 = vsel %vm637, %v726, 0
        %733 = vmatprep.subr.mxu0 0.0
        %734 = vmatpush1.msra.mxu0 0.0
        %735 = vmatprep.subr.mxu0 0.0
        %736 = vmatpush1.msra.mxu0 0.0
        %737 = vmatprep.subr.mxu0 0.0
        %738 = vmatpush1.msra.mxu0 0.0
        %739 = vmatprep.subr.mxu0 0.0
        %740 = vmatpush1.msra.mxu0 0.0
        %741 = vmatprep.subr.mxu0 0.0
        %742 = vmatpush1.msra.mxu0 0.0
        %743 = vmatprep.subr.mxu0 0.0
        %744 = vmatpush1.msra.mxu0 0.0
        %745 = vmatprep.subr.mxu0 0.0
        %746 = vmatpush1.msra.mxu0 0.0
        %747 = vmatprep.subr.mxu0 0.0
        %748 = vmatpush1.msra.mxu0 0.0
        %749 = vmatprep.subr.mxu0 0.0
        %750 = vmatpush1.msra.mxu0 0.0
        %751 = vmatprep.subr.mxu0 0.0
        %752 = vmatpush1.msra.mxu0 0.0
        %753 = vmatprep.subr.mxu0 0.0
        %754 = vmatpush1.msra.mxu0 0.0
        %755 = vmatprep.subr.mxu0 0.0
        %756 = vmatpush1.msra.mxu0 0.0
        %757 = vmatprep.subr.mxu0 0.0
        %758 = vmatpush1.msra.mxu0 0.0
        %759 = vmatprep.subr.mxu0 0.0
        %760 = vmatpush1.msra.mxu0 0.0
        %761 = vmatprep.subr.mxu0 0.0
        %762 = vmatpush1.msra.mxu0 0.0
        %763 = vmatprep.subr.mxu0 0.0
        %764 = vmatpush1.msra.mxu0 %v728
        %765 = vmatprep.subr.mxu0 0.0
        %766 = vmatpush2.msra.mxu0 0.0
        %767 = vmatprep.subr.mxu0 0.0
        %768 = vmatpush2.msra.mxu0 0.0
        %769 = vmatprep.subr.mxu0 0.0
        %770 = vmatpush2.msra.mxu0 0.0
        %771 = vmatprep.subr.mxu0 0.0
        %772 = vmatpush2.msra.mxu0 0.0
        %773 = vmatprep.subr.mxu0 0.0
        %774 = vmatpush2.msra.mxu0 0.0
        %775 = vmatprep.subr.mxu0 0.0
        %776 = vmatpush2.msra.mxu0 0.0
        %777 = vmatprep.subr.mxu0 0.0
        %778 = vmatpush2.msra.mxu0 0.0
        %779 = vmatprep.subr.mxu0 0.0
        %780 = vmatpush2.msra.mxu0 0.0
        %781 = vmatprep.subr.mxu0 0.0
        %782 = vmatpush2.msra.mxu0 0.0
        %783 = vmatprep.subr.mxu0 0.0
        %784 = vmatpush2.msra.mxu0 0.0
        %785 = vmatprep.subr.mxu0 0.0
        %786 = vmatpush2.msra.mxu0 0.0
        %787 = vmatprep.subr.mxu0 0.0
        %788 = vmatpush2.msra.mxu0 0.0
        %789 = vmatprep.subr.mxu0 0.0
        %790 = vmatpush2.msra.mxu0 0.0
        %791 = vmatprep.subr.mxu0 0.0
        %792 = vmatpush2.msra.mxu0 0.0
        %793 = vmatprep.subr.mxu0 0.0
        %794 = vmatpush2.msra.mxu0 0.0
        %795 = vmatprep.subr.mxu0 0.0
        %796 = vmatpush2.msra.mxu0 0.0
        %797 = vmatprep.mubr.f32.mxu0 0.0
        %798 = vmatmul.mubr.f32.gmra.mxu0 %v731
        %v799 = vpop.f32.mrf.mxu0
        %v800 = vadd.f32 0.0, %v799
        %v801 = vpop.f32.mrf.mxu0
        %802 = vdwg.mxu0
        %803 = vrot.lane.b32.xlu0 %v539, 120
        %v804 = vpop.permute.xlu0 %803
        %805 = vrot.lane.b32.xlu0 %v623, 120
        %v806 = vpop.permute.xlu0 %805
        %v807 = vsel %vm637, %v804, 0
        %v809 = vsel %vm637, %v806, 0
        %811 = vmatprep.subr.mxu0 0.0
        %812 = vmatpush1.xpose.msra.mxu0 0.0
        %813 = vmatprep.subr.mxu0 0.0
        %814 = vmatpush1.xpose.msra.mxu0 0.0
        %815 = vmatprep.subr.mxu0 0.0
        %816 = vmatpush1.xpose.msra.mxu0 0.0
        %817 = vmatprep.subr.mxu0 0.0
        %818 = vmatpush1.xpose.msra.mxu0 0.0
        %819 = vmatprep.subr.mxu0 0.0
        %820 = vmatpush1.xpose.msra.mxu0 0.0
        %821 = vmatprep.subr.mxu0 0.0
        %822 = vmatpush1.xpose.msra.mxu0 0.0
        %823 = vmatprep.subr.mxu0 0.0
        %824 = vmatpush1.xpose.msra.mxu0 0.0
        %825 = vmatprep.subr.mxu0 0.0
        %826 = vmatpush1.xpose.msra.mxu0 0.0
        %827 = vmatprep.subr.mxu0 0.0
        %828 = vmatpush1.xpose.msra.mxu0 0.0
        %829 = vmatprep.subr.mxu0 0.0
        %830 = vmatpush1.xpose.msra.mxu0 0.0
        %831 = vmatprep.subr.mxu0 0.0
        %832 = vmatpush1.xpose.msra.mxu0 0.0
        %833 = vmatprep.subr.mxu0 0.0
        %834 = vmatpush1.xpose.msra.mxu0 0.0
        %835 = vmatprep.subr.mxu0 0.0
        %836 = vmatpush1.xpose.msra.mxu0 0.0
        %837 = vmatprep.subr.mxu0 0.0
        %838 = vmatpush1.xpose.msra.mxu0 0.0
        %839 = vmatprep.subr.mxu0 0.0
        %840 = vmatpush1.xpose.msra.mxu0 0.0
        %841 = vmatprep.subr.mxu0 0.0
        %842 = vmatpush1.xpose.msra.mxu0 %v809
        %843 = vmatprep.subr.mxu0 0.0
        %844 = vmatpush2.xpose.msra.mxu0 0.0
        %845 = vmatprep.subr.mxu0 0.0
        %846 = vmatpush2.xpose.msra.mxu0 0.0
        %847 = vmatprep.subr.mxu0 0.0
        %848 = vmatpush2.xpose.msra.mxu0 0.0
        %849 = vmatprep.subr.mxu0 0.0
        %850 = vmatpush2.xpose.msra.mxu0 0.0
        %851 = vmatprep.subr.mxu0 0.0
        %852 = vmatpush2.xpose.msra.mxu0 0.0
        %853 = vmatprep.subr.mxu0 0.0
        %854 = vmatpush2.xpose.msra.mxu0 0.0
        %855 = vmatprep.subr.mxu0 0.0
        %856 = vmatpush2.xpose.msra.mxu0 0.0
        %857 = vmatprep.subr.mxu0 0.0
        %858 = vmatpush2.xpose.msra.mxu0 0.0
        %859 = vmatprep.subr.mxu0 0.0
        %860 = vmatpush2.xpose.msra.mxu0 0.0
        %861 = vmatprep.subr.mxu0 0.0
        %862 = vmatpush2.xpose.msra.mxu0 0.0
        %863 = vmatprep.subr.mxu0 0.0
        %864 = vmatpush2.xpose.msra.mxu0 0.0
        %865 = vmatprep.subr.mxu0 0.0
        %866 = vmatpush2.xpose.msra.mxu0 0.0
        %867 = vmatprep.subr.mxu0 0.0
        %868 = vmatpush2.xpose.msra.mxu0 0.0
        %869 = vmatprep.subr.mxu0 0.0
        %870 = vmatpush2.xpose.msra.mxu0 0.0
        %871 = vmatprep.subr.mxu0 0.0
        %872 = vmatpush2.xpose.msra.mxu0 0.0
        %873 = vmatprep.subr.mxu0 0.0
        %874 = vmatpush2.xpose.msra.mxu0 0.0
        %875 = vmatprep.mubr.f32.mxu0 0.0
        %876 = vmatmul.mubr.f32.gmra.mxu0 %v807
        %v877 = vpop.f32.mrf.mxu0
        %v878 = vadd.f32 0.0, %v877
        %v879 = vpop.f32.mrf.mxu0
        %880 = vdwg.mxu0
        %v881 = vmul.f32 %v878, 0.35355338
        %v882 = vadd.f32 %v881, %v636
        %v883 = vsel %vm637, %v882, -inf
        %884 = vmax.xlane.f32.xlu0 %v883
        %v885 = vpop.xlane.xlu0 %884
        %v886 = vsub.f32 %v882, %v885
        %v887 = vmul.f32 %v886, 1.442695
        %v888 = vpow.pop %v887
        %v889 = vsel %vm637, %v888, 0.0
        %890 = vadd.xlane.f32.xlu0 %v889
        %v891 = vpop.xlane.xlu0 %890
        %v892 = vrcp.pop %v891
        %v893 = vmul.f32 %v888, %v892
        %894 = vrot.lane.b32.xlu0 %v623, 88
        %v895 = vpop.permute.xlu0 %894
        %v898 = vsel %vm637, %v893, 0
        %900 = vmatprep.subr.mxu0 0.0
        %901 = vmatpush1.msra.mxu0 0.0
        %902 = vmatprep.subr.mxu0 0.0
        %903 = vmatpush1.msra.mxu0 0.0
        %904 = vmatprep.subr.mxu0 0.0
        %905 = vmatpush1.msra.mxu0 0.0
        %906 = vmatprep.subr.mxu0 0.0
        %907 = vmatpush1.msra.mxu0 0.0
        %908 = vmatprep.subr.mxu0 0.0
        %909 = vmatpush1.msra.mxu0 0.0
        %910 = vmatprep.subr.mxu0 0.0
        %911 = vmatpush1.msra.mxu0 0.0
        %912 = vmatprep.subr.mxu0 0.0
        %913 = vmatpush1.msra.mxu0 0.0
        %914 = vmatprep.subr.mxu0 0.0
        %915 = vmatpush1.msra.mxu0 0.0
        %916 = vmatprep.subr.mxu0 0.0
        %917 = vmatpush1.msra.mxu0 0.0
        %918 = vmatprep.subr.mxu0 0.0
        %919 = vmatpush1.msra.mxu0 0.0
        %920 = vmatprep.subr.mxu0 0.0
        %921 = vmatpush1.msra.mxu0 0.0
        %922 = vmatprep.subr.mxu0 0.0
        %923 = vmatpush1.msra.mxu0 0.0
        %924 = vmatprep.subr.mxu0 0.0
        %925 = vmatpush1.msra.mxu0 0.0
        %926 = vmatprep.subr.mxu0 0.0
        %927 = vmatpush1.msra.mxu0 0.0
        %928 = vmatprep.subr.mxu0 0.0
        %929 = vmatpush1.msra.mxu0 0.0
        %930 = vmatprep.subr.mxu0 0.0
        %931 = vmatpush1.msra.mxu0 %v895
        %932 = vmatprep.subr.mxu0 0.0
        %933 = vmatpush2.msra.mxu0 0.0
        %934 = vmatprep.subr.mxu0 0.0
        %935 = vmatpush2.msra.mxu0 0.0
        %936 = vmatprep.subr.mxu0 0.0
        %937 = vmatpush2.msra.mxu0 0.0
        %938 = vmatprep.subr.mxu0 0.0
        %939 = vmatpush2.msra.mxu0 0.0
        %940 = vmatprep.subr.mxu0 0.0
        %941 = vmatpush2.msra.mxu0 0.0
        %942 = vmatprep.subr.mxu0 0.0
        %943 = vmatpush2.msra.mxu0 0.0
        %944 = vmatprep.subr.mxu0 0.0
        %945 = vmatpush2.msra.mxu0 0.0
        %946 = vmatprep.subr.mxu0 0.0
        %947 = vmatpush2.msra.mxu0 0.0
        %948 = vmatprep.subr.mxu0 0.0
        %949 = vmatpush2.msra.mxu0 0.0
        %950 = vmatprep.subr.mxu0 0.0
        %951 = vmatpush2.msra.mxu0 0.0
        %952 = vmatprep.subr.mxu0 0.0
        %953 = vmatpush2.msra.mxu0 0.0
        %954 = vmatprep.subr.mxu0 0.0
        %955 = vmatpush2.msra.mxu0 0.0
        %956 = vmatprep.subr.mxu0 0.0
        %957 = vmatpush2.msra.mxu0 0.0
        %958 = vmatprep.subr.mxu0 0.0
        %959 = vmatpush2.msra.mxu0 0.0
        %960 = vmatprep.subr.mxu0 0.0
        %961 = vmatpush2.msra.mxu0 0.0
        %962 = vmatprep.subr.mxu0 0.0
        %963 = vmatpush2.msra.mxu0 0.0
        %964 = vmatprep.mubr.f32.mxu0 0.0
        %965 = vmatmul.mubr.f32.gmra.mxu0 %v898
        %v966 = vpop.f32.mrf.mxu0
        %v967 = vadd.f32 0.0, %v966
        %v968 = vpop.f32.mrf.mxu0
        %969 = vdwg.mxu0
        %970 = vrot.lane.b32.xlu0 %v539, 112
        %v971 = vpop.permute.xlu0 %970
        %972 = vrot.lane.b32.xlu0 %v623, 112
        %v973 = vpop.permute.xlu0 %972
        %v974 = vsel %vm637, %v971, 0
        %v976 = vsel %vm637, %v973, 0
        %978 = vmatprep.subr.mxu0 0.0
        %979 = vmatpush1.xpose.msra.mxu0 0.0
        %980 = vmatprep.subr.mxu0 0.0
        %981 = vmatpush1.xpose.msra.mxu0 0.0
        %982 = vmatprep.subr.mxu0 0.0
        %983 = vmatpush1.xpose.msra.mxu0 0.0
        %984 = vmatprep.subr.mxu0 0.0
        %985 = vmatpush1.xpose.msra.mxu0 0.0
        %986 = vmatprep.subr.mxu0 0.0
        %987 = vmatpush1.xpose.msra.mxu0 0.0
        %988 = vmatprep.subr.mxu0 0.0
        %989 = vmatpush1.xpose.msra.mxu0 0.0
        %990 = vmatprep.subr.mxu0 0.0
        %991 = vmatpush1.xpose.msra.mxu0 0.0
        %992 = vmatprep.subr.mxu0 0.0
        %993 = vmatpush1.xpose.msra.mxu0 0.0
        %994 = vmatprep.subr.mxu0 0.0
        %995 = vmatpush1.xpose.msra.mxu0 0.0
        %996 = vmatprep.subr.mxu0 0.0
        %997 = vmatpush1.xpose.msra.mxu0 0.0
        %998 = vmatprep.subr.mxu0 0.0
        %999 = vmatpush1.xpose.msra.mxu0 0.0
        %1000 = vmatprep.subr.mxu0 0.0
        %1001 = vmatpush1.xpose.msra.mxu0 0.0
        %1002 = vmatprep.subr.mxu0 0.0
        %1003 = vmatpush1.xpose.msra.mxu0 0.0
        %1004 = vmatprep.subr.mxu0 0.0
        %1005 = vmatpush1.xpose.msra.mxu0 0.0
        %1006 = vmatprep.subr.mxu0 0.0
        %1007 = vmatpush1.xpose.msra.mxu0 0.0
        %1008 = vmatprep.subr.mxu0 0.0
        %1009 = vmatpush1.xpose.msra.mxu0 %v976
        %1010 = vmatprep.subr.mxu0 0.0
        %1011 = vmatpush2.xpose.msra.mxu0 0.0
        %1012 = vmatprep.subr.mxu0 0.0
        %1013 = vmatpush2.xpose.msra.mxu0 0.0
        %1014 = vmatprep.subr.mxu0 0.0
        %1015 = vmatpush2.xpose.msra.mxu0 0.0
        %1016 = vmatprep.subr.mxu0 0.0
        %1017 = vmatpush2.xpose.msra.mxu0 0.0
        %1018 = vmatprep.subr.mxu0 0.0
        %1019 = vmatpush2.xpose.msra.mxu0 0.0
        %1020 = vmatprep.subr.mxu0 0.0
        %1021 = vmatpush2.xpose.msra.mxu0 0.0
        %1022 = vmatprep.subr.mxu0 0.0
        %1023 = vmatpush2.xpose.msra.mxu0 0.0
        %1024 = vmatprep.subr.mxu0 0.0
        %1025 = vmatpush2.xpose.msra.mxu0 0.0
        %1026 = vmatprep.subr.mxu0 0.0
        %1027 = vmatpush2.xpose.msra.mxu0 0.0
        %1028 = vmatprep.subr.mxu0 0.0
        %1029 = vmatpush2.xpose.msra.mxu0 0.0
        %1030 = vmatprep.subr.mxu0 0.0
        %1031 = vmatpush2.xpose.msra.mxu0 0.0
        %1032 = vmatprep.subr.mxu0 0.0
        %1033 = vmatpush2.xpose.msra.mxu0 0.0
        %1034 = vmatprep.subr.mxu0 0.0
        %1035 = vmatpush2.xpose.msra.mxu0 0.0
        %1036 = vmatprep.subr.mxu0 0.0
        %1037 = vmatpush2.xpose.msra.mxu0 0.0
        %1038 = vmatprep.subr.mxu0 0.0
        %1039 = vmatpush2.xpose.msra.mxu0 0.0
        %1040 = vmatprep.subr.mxu0 0.0
        %1041 = vmatpush2.xpose.msra.mxu0 0.0
        %1042 = vmatprep.mubr.f32.mxu0 0.0
        %1043 = vmatmul.mubr.f32.gmra.mxu0 %v974
        %v1044 = vpop.f32.mrf.mxu0
        %v1045 = vadd.f32 0.0, %v1044
        %v1046 = vpop.f32.mrf.mxu0
        %1047 = vdwg.mxu0
        %v1048 = vmul.f32 %v1045, 0.35355338
        %v1049 = vadd.f32 %v1048, %v636
        %v1050 = vsel %vm637, %v1049, -inf
        %1051 = vmax.xlane.f32.xlu0 %v1050
        %v1052 = vpop.xlane.xlu0 %1051
        %v1053 = vsub.f32 %v1049, %v1052
        %v1054 = vmul.f32 %v1053, 1.442695
        %v1055 = vpow.pop %v1054
        %v1056 = vsel %vm637, %v1055, 0.0
        %1057 = vadd.xlane.f32.xlu0 %v1056
        %v1058 = vpop.xlane.xlu0 %1057
        %v1059 = vrcp.pop %v1058
        %v1060 = vmul.f32 %v1055, %v1059
        %1061 = vrot.lane.b32.xlu0 %v623, 80
        %v1062 = vpop.permute.xlu0 %1061
        %v1065 = vsel %vm637, %v1060, 0
        %1067 = vmatprep.subr.mxu0 0.0
        %1068 = vmatpush1.msra.mxu0 0.0
        %1069 = vmatprep.subr.mxu0 0.0
        %1070 = vmatpush1.msra.mxu0 0.0
        %1071 = vmatprep.subr.mxu0 0.0
        %1072 = vmatpush1.msra.mxu0 0.0
        %1073 = vmatprep.subr.mxu0 0.0
        %1074 = vmatpush1.msra.mxu0 0.0
        %1075 = vmatprep.subr.mxu0 0.0
        %1076 = vmatpush1.msra.mxu0 0.0
        %1077 = vmatprep.subr.mxu0 0.0
        %1078 = vmatpush1.msra.mxu0 0.0
        %1079 = vmatprep.subr.mxu0 0.0
        %1080 = vmatpush1.msra.mxu0 0.0
        %1081 = vmatprep.subr.mxu0 0.0
        %1082 = vmatpush1.msra.mxu0 0.0
        %1083 = vmatprep.subr.mxu0 0.0
        %1084 = vmatpush1.msra.mxu0 0.0
        %1085 = vmatprep.subr.mxu0 0.0
        %1086 = vmatpush1.msra.mxu0 0.0
        %1087 = vmatprep.subr.mxu0 0.0
        %1088 = vmatpush1.msra.mxu0 0.0
        %1089 = vmatprep.subr.mxu0 0.0
        %1090 = vmatpush1.msra.mxu0 0.0
        %1091 = vmatprep.subr.mxu0 0.0
        %1092 = vmatpush1.msra.mxu0 0.0
        %1093 = vmatprep.subr.mxu0 0.0
        %1094 = vmatpush1.msra.mxu0 0.0
        %1095 = vmatprep.subr.mxu0 0.0
        %1096 = vmatpush1.msra.mxu0 0.0
        %1097 = vmatprep.subr.mxu0 0.0
        %1098 = vmatpush1.msra.mxu0 %v1062
        %1099 = vmatprep.subr.mxu0 0.0
        %1100 = vmatpush2.msra.mxu0 0.0
        %1101 = vmatprep.subr.mxu0 0.0
        %1102 = vmatpush2.msra.mxu0 0.0
        %1103 = vmatprep.subr.mxu0 0.0
        %1104 = vmatpush2.msra.mxu0 0.0
        %1105 = vmatprep.subr.mxu0 0.0
        %1106 = vmatpush2.msra.mxu0 0.0
        %1107 = vmatprep.subr.mxu0 0.0
        %1108 = vmatpush2.msra.mxu0 0.0
        %1109 = vmatprep.subr.mxu0 0.0
        %1110 = vmatpush2.msra.mxu0 0.0
        %1111 = vmatprep.subr.mxu0 0.0
        %1112 = vmatpush2.msra.mxu0 0.0
        %1113 = vmatprep.subr.mxu0 0.0
        %1114 = vmatpush2.msra.mxu0 0.0
        %1115 = vmatprep.subr.mxu0 0.0
        %1116 = vmatpush2.msra.mxu0 0.0
        %1117 = vmatprep.subr.mxu0 0.0
        %1118 = vmatpush2.msra.mxu0 0.0
        %1119 = vmatprep.subr.mxu0 0.0
        %1120 = vmatpush2.msra.mxu0 0.0
        %1121 = vmatprep.subr.mxu0 0.0
        %1122 = vmatpush2.msra.mxu0 0.0
        %1123 = vmatprep.subr.mxu0 0.0
        %1124 = vmatpush2.msra.mxu0 0.0
        %1125 = vmatprep.subr.mxu0 0.0
        %1126 = vmatpush2.msra.mxu0 0.0
        %1127 = vmatprep.subr.mxu0 0.0
        %1128 = vmatpush2.msra.mxu0 0.0
        %1129 = vmatprep.subr.mxu0 0.0
        %1130 = vmatpush2.msra.mxu0 0.0
        %1131 = vmatprep.mubr.f32.mxu0 0.0
        %1132 = vmatmul.mubr.f32.gmra.mxu0 %v1065
        %v1133 = vpop.f32.mrf.mxu0
        %v1134 = vadd.f32 0.0, %v1133
        %v1135 = vpop.f32.mrf.mxu0
        %1136 = vdwg.mxu0
        %1137 = vrot.lane.b32.xlu0 %v539, 104
        %v1138 = vpop.permute.xlu0 %1137
        %1139 = vrot.lane.b32.xlu0 %v623, 104
        %v1140 = vpop.permute.xlu0 %1139
        %v1141 = vsel %vm637, %v1138, 0
        %v1143 = vsel %vm637, %v1140, 0
        %1145 = vmatprep.subr.mxu0 0.0
        %1146 = vmatpush1.xpose.msra.mxu0 0.0
        %1147 = vmatprep.subr.mxu0 0.0
        %1148 = vmatpush1.xpose.msra.mxu0 0.0
        %1149 = vmatprep.subr.mxu0 0.0
        %1150 = vmatpush1.xpose.msra.mxu0 0.0
        %1151 = vmatprep.subr.mxu0 0.0
        %1152 = vmatpush1.xpose.msra.mxu0 0.0
        %1153 = vmatprep.subr.mxu0 0.0
        %1154 = vmatpush1.xpose.msra.mxu0 0.0
        %1155 = vmatprep.subr.mxu0 0.0
        %1156 = vmatpush1.xpose.msra.mxu0 0.0
        %1157 = vmatprep.subr.mxu0 0.0
        %1158 = vmatpush1.xpose.msra.mxu0 0.0
        %1159 = vmatprep.subr.mxu0 0.0
        %1160 = vmatpush1.xpose.msra.mxu0 0.0
        %1161 = vmatprep.subr.mxu0 0.0
        %1162 = vmatpush1.xpose.msra.mxu0 0.0
        %1163 = vmatprep.subr.mxu0 0.0
        %1164 = vmatpush1.xpose.msra.mxu0 0.0
        %1165 = vmatprep.subr.mxu0 0.0
        %1166 = vmatpush1.xpose.msra.mxu0 0.0
        %1167 = vmatprep.subr.mxu0 0.0
        %1168 = vmatpush1.xpose.msra.mxu0 0.0
        %1169 = vmatprep.subr.mxu0 0.0
        %1170 = vmatpush1.xpose.msra.mxu0 0.0
        %1171 = vmatprep.subr.mxu0 0.0
        %1172 = vmatpush1.xpose.msra.mxu0 0.0
        %1173 = vmatprep.subr.mxu0 0.0
        %1174 = vmatpush1.xpose.msra.mxu0 0.0
        %1175 = vmatprep.subr.mxu0 0.0
        %1176 = vmatpush1.xpose.msra.mxu0 %v1143
        %1177 = vmatprep.subr.mxu0 0.0
        %1178 = vmatpush2.xpose.msra.mxu0 0.0
        %1179 = vmatprep.subr.mxu0 0.0
        %1180 = vmatpush2.xpose.msra.mxu0 0.0
        %1181 = vmatprep.subr.mxu0 0.0
        %1182 = vmatpush2.xpose.msra.mxu0 0.0
        %1183 = vmatprep.subr.mxu0 0.0
        %1184 = vmatpush2.xpose.msra.mxu0 0.0
        %1185 = vmatprep.subr.mxu0 0.0
        %1186 = vmatpush2.xpose.msra.mxu0 0.0
        %1187 = vmatprep.subr.mxu0 0.0
        %1188 = vmatpush2.xpose.msra.mxu0 0.0
        %1189 = vmatprep.subr.mxu0 0.0
        %1190 = vmatpush2.xpose.msra.mxu0 0.0
        %1191 = vmatprep.subr.mxu0 0.0
        %1192 = vmatpush2.xpose.msra.mxu0 0.0
        %1193 = vmatprep.subr.mxu0 0.0
        %1194 = vmatpush2.xpose.msra.mxu0 0.0
        %1195 = vmatprep.subr.mxu0 0.0
        %1196 = vmatpush2.xpose.msra.mxu0 0.0
        %1197 = vmatprep.subr.mxu0 0.0
        %1198 = vmatpush2.xpose.msra.mxu0 0.0
        %1199 = vmatprep.subr.mxu0 0.0
        %1200 = vmatpush2.xpose.msra.mxu0 0.0
        %1201 = vmatprep.subr.mxu0 0.0
        %1202 = vmatpush2.xpose.msra.mxu0 0.0
        %1203 = vmatprep.subr.mxu0 0.0
        %1204 = vmatpush2.xpose.msra.mxu0 0.0
        %1205 = vmatprep.subr.mxu0 0.0
        %1206 = vmatpush2.xpose.msra.mxu0 0.0
        %1207 = vmatprep.subr.mxu0 0.0
        %1208 = vmatpush2.xpose.msra.mxu0 0.0
        %1209 = vmatprep.mubr.f32.mxu0 0.0
        %1210 = vmatmul.mubr.f32.gmra.mxu0 %v1141
        %v1211 = vpop.f32.mrf.mxu0
        %v1212 = vadd.f32 0.0, %v1211
        %v1213 = vpop.f32.mrf.mxu0
        %1214 = vdwg.mxu0
        %v1215 = vmul.f32 %v1212, 0.35355338
        %v1216 = vadd.f32 %v1215, %v636
        %v1217 = vsel %vm637, %v1216, -inf
        %1218 = vmax.xlane.f32.xlu0 %v1217
        %v1219 = vpop.xlane.xlu0 %1218
        %v1220 = vsub.f32 %v1216, %v1219
        %v1221 = vmul.f32 %v1220, 1.442695
        %v1222 = vpow.pop %v1221
        %v1223 = vsel %vm637, %v1222, 0.0
        %1224 = vadd.xlane.f32.xlu0 %v1223
        %v1225 = vpop.xlane.xlu0 %1224
        %v1226 = vrcp.pop %v1225
        %v1227 = vmul.f32 %v1222, %v1226
        %1228 = vrot.lane.b32.xlu0 %v623, 72
        %v1229 = vpop.permute.xlu0 %1228
        %v1232 = vsel %vm637, %v1227, 0
        %1234 = vmatprep.subr.mxu0 0.0
        %1235 = vmatpush1.msra.mxu0 0.0
        %1236 = vmatprep.subr.mxu0 0.0
        %1237 = vmatpush1.msra.mxu0 0.0
        %1238 = vmatprep.subr.mxu0 0.0
        %1239 = vmatpush1.msra.mxu0 0.0
        %1240 = vmatprep.subr.mxu0 0.0
        %1241 = vmatpush1.msra.mxu0 0.0
        %1242 = vmatprep.subr.mxu0 0.0
        %1243 = vmatpush1.msra.mxu0 0.0
        %1244 = vmatprep.subr.mxu0 0.0
        %1245 = vmatpush1.msra.mxu0 0.0
        %1246 = vmatprep.subr.mxu0 0.0
        %1247 = vmatpush1.msra.mxu0 0.0
        %1248 = vmatprep.subr.mxu0 0.0
        %1249 = vmatpush1.msra.mxu0 0.0
        %1250 = vmatprep.subr.mxu0 0.0
        %1251 = vmatpush1.msra.mxu0 0.0
        %1252 = vmatprep.subr.mxu0 0.0
        %1253 = vmatpush1.msra.mxu0 0.0
        %1254 = vmatprep.subr.mxu0 0.0
        %1255 = vmatpush1.msra.mxu0 0.0
        %1256 = vmatprep.subr.mxu0 0.0
        %1257 = vmatpush1.msra.mxu0 0.0
        %1258 = vmatprep.subr.mxu0 0.0
        %1259 = vmatpush1.msra.mxu0 0.0
        %1260 = vmatprep.subr.mxu0 0.0
        %1261 = vmatpush1.msra.mxu0 0.0
        %1262 = vmatprep.subr.mxu0 0.0
        %1263 = vmatpush1.msra.mxu0 0.0
        %1264 = vmatprep.subr.mxu0 0.0
        %1265 = vmatpush1.msra.mxu0 %v1229
        %1266 = vmatprep.subr.mxu0 0.0
        %1267 = vmatpush2.msra.mxu0 0.0
        %1268 = vmatprep.subr.mxu0 0.0
        %1269 = vmatpush2.msra.mxu0 0.0
        %1270 = vmatprep.subr.mxu0 0.0
        %1271 = vmatpush2.msra.mxu0 0.0
        %1272 = vmatprep.subr.mxu0 0.0
        %1273 = vmatpush2.msra.mxu0 0.0
        %1274 = vmatprep.subr.mxu0 0.0
        %1275 = vmatpush2.msra.mxu0 0.0
        %1276 = vmatprep.subr.mxu0 0.0
        %1277 = vmatpush2.msra.mxu0 0.0
        %1278 = vmatprep.subr.mxu0 0.0
        %1279 = vmatpush2.msra.mxu0 0.0
        %1280 = vmatprep.subr.mxu0 0.0
        %1281 = vmatpush2.msra.mxu0 0.0
        %1282 = vmatprep.subr.mxu0 0.0
        %1283 = vmatpush2.msra.mxu0 0.0
        %1284 = vmatprep.subr.mxu0 0.0
        %1285 = vmatpush2.msra.mxu0 0.0
        %1286 = vmatprep.subr.mxu0 0.0
        %1287 = vmatpush2.msra.mxu0 0.0
        %1288 = vmatprep.subr.mxu0 0.0
        %1289 = vmatpush2.msra.mxu0 0.0
        %1290 = vmatprep.subr.mxu0 0.0
        %1291 = vmatpush2.msra.mxu0 0.0
        %1292 = vmatprep.subr.mxu0 0.0
        %1293 = vmatpush2.msra.mxu0 0.0
        %1294 = vmatprep.subr.mxu0 0.0
        %1295 = vmatpush2.msra.mxu0 0.0
        %1296 = vmatprep.subr.mxu0 0.0
        %1297 = vmatpush2.msra.mxu0 0.0
        %1298 = vmatprep.mubr.f32.mxu0 0.0
        %1299 = vmatmul.mubr.f32.gmra.mxu0 %v1232
        %v1300 = vpop.f32.mrf.mxu0
        %v1301 = vadd.f32 0.0, %v1300
        %v1302 = vpop.f32.mrf.mxu0
        %1303 = vdwg.mxu0
        %1305 = vrot.lane.b32.xlu0 %v967, 8
        %v1306 = vpop.permute.xlu0 %1305
        %1309 = vrot.lane.b32.xlu0 %v1134, 16
        %v1310 = vpop.permute.xlu0 %1309
        %1313 = vrot.lane.b32.xlu0 %v1301, 24
        %v1314 = vpop.permute.xlu0 %1313
        %v1316 = vsel %vm637, %v800, %v1306
        %vm1317 = vcmask 130048
        %v1318 = vsel %vm1317, %v1316, %v1310
        %vm1319 = vcmask 195584
        %v1320 = vsel %vm1319, %v1318, %v1314
        %v1321 = vld [vmem:[#allocation2] sm:$0xff]
        %v1322 = vld [vmem:[#allocation2 + $0x8] sm:$0xff]
        %v1323 = vld [vmem:[#allocation2 + $0x10] sm:$0xff]
        %v1324 = vld [vmem:[#allocation2 + $0x18] sm:$0xff]
        %v1325 = vld [vmem:[%s9] sm:$0x1]
        %v1327 = vlaneseq
        %v1328 = vshrl.u32 %v1327, 7
        %v1329 = vsub.s32 0, %v1328
        %v1330 = vrot.slane %v1325, %v1329
        %v1333 = vsel %vm468, %v1320, 0
        %1335 = vmatprep.subr.mxu0 0.0
        %1336 = vmatpush1.msra.mxu0 0.0
        %1337 = vmatprep.subr.mxu0 0.0
        %1338 = vmatpush1.msra.mxu0 0.0
        %1339 = vmatprep.subr.mxu0 0.0
        %1340 = vmatpush1.msra.mxu0 0.0
        %1341 = vmatprep.subr.mxu0 0.0
        %1342 = vmatpush1.msra.mxu0 0.0
        %1343 = vmatprep.subr.mxu0 0.0
        %1344 = vmatpush1.msra.mxu0 0.0
        %1345 = vmatprep.subr.mxu0 0.0
        %1346 = vmatpush1.msra.mxu0 0.0
        %1347 = vmatprep.subr.mxu0 0.0
        %1348 = vmatpush1.msra.mxu0 0.0
        %1349 = vmatprep.subr.mxu0 0.0
        %1350 = vmatpush1.msra.mxu0 0.0
        %1351 = vmatprep.subr.mxu0 0.0
        %1352 = vmatpush1.msra.mxu0 0.0
        %1353 = vmatprep.subr.mxu0 0.0
        %1354 = vmatpush1.msra.mxu0 0.0
        %1355 = vmatprep.subr.mxu0 0.0
        %1356 = vmatpush1.msra.mxu0 0.0
        %1357 = vmatprep.subr.mxu0 0.0
        %1358 = vmatpush1.msra.mxu0 0.0
        %1359 = vmatprep.subr.mxu0 0.0
        %1360 = vmatpush1.msra.mxu0 %v1324
        %1361 = vmatprep.subr.mxu0 0.0
        %1362 = vmatpush1.msra.mxu0 %v1323
        %1363 = vmatprep.subr.mxu0 0.0
        %1364 = vmatpush1.msra.mxu0 %v1322
        %1365 = vmatprep.subr.mxu0 0.0
        %1366 = vmatpush1.msra.mxu0 %v1321
        %1367 = vmatprep.subr.mxu0 0.0
        %1368 = vmatpush2.msra.mxu0 0.0
        %1369 = vmatprep.subr.mxu0 0.0
        %1370 = vmatpush2.msra.mxu0 0.0
        %1371 = vmatprep.subr.mxu0 0.0
        %1372 = vmatpush2.msra.mxu0 0.0
        %1373 = vmatprep.subr.mxu0 0.0
        %1374 = vmatpush2.msra.mxu0 0.0
        %1375 = vmatprep.subr.mxu0 0.0
        %1376 = vmatpush2.msra.mxu0 0.0
        %1377 = vmatprep.subr.mxu0 0.0
        %1378 = vmatpush2.msra.mxu0 0.0
        %1379 = vmatprep.subr.mxu0 0.0
        %1380 = vmatpush2.msra.mxu0 0.0
        %1381 = vmatprep.subr.mxu0 0.0
        %1382 = vmatpush2.msra.mxu0 0.0
        %1383 = vmatprep.subr.mxu0 0.0
        %1384 = vmatpush2.msra.mxu0 0.0
        %1385 = vmatprep.subr.mxu0 0.0
        %1386 = vmatpush2.msra.mxu0 0.0
        %1387 = vmatprep.subr.mxu0 0.0
        %1388 = vmatpush2.msra.mxu0 0.0
        %1389 = vmatprep.subr.mxu0 0.0
        %1390 = vmatpush2.msra.mxu0 0.0
        %1391 = vmatprep.subr.mxu0 0.0
        %1392 = vmatpush2.msra.mxu0 0.0
        %1393 = vmatprep.subr.mxu0 0.0
        %1394 = vmatpush2.msra.mxu0 0.0
        %1395 = vmatprep.subr.mxu0 0.0
        %1396 = vmatpush2.msra.mxu0 0.0
        %1397 = vmatprep.subr.mxu0 0.0
        %1398 = vmatpush2.msra.mxu0 0.0
        %1399 = vmatprep.mubr.f32.mxu0 0.0
        %1400 = vmatmul.mubr.f32.gmra.mxu0 %v1333
        %v1401 = vpop.f32.mrf.mxu0
        %v1402 = vadd.f32 %v1330, %v1401
        %v1403 = vpop.f32.mrf.mxu0
        %1404 = vdwg.mxu0
        %v1405 = vadd.f32 %v1402, %v455
        %v1406 = vsel %vm468, %v1405, 0.0
        %1407 = vadd.xlane.f32.xlu0 %v1406
        %v1408 = vpop.xlane.xlu0 %1407
        %v1409 = vrcp.pop 32.0
        %v1410 = vmul.f32 %v1408, %v1409
        %v1411 = vsub.f32 %v1405, %v1410
        %v1412 = vmul.f32 %v1411, %v1411
        %v1413 = vsel %vm468, %v1412, 0.0
        %1414 = vadd.xlane.f32.xlu0 %v1413
        %v1415 = vpop.xlane.xlu0 %1414
        %v1416 = vmul.f32 %v1415, 0.032258064
        %v1417 = vrsqrt.pop %v1416
        %v1418 = vmul.f32 %v1411, %v1417
        %v1419 = vadd.f32 %v1418, 1e-05
        %v1420 = vld [vmem:[%s10] sm:$0x1]
        %v1422 = vlaneseq
        %v1423 = vshrl.u32 %v1422, 7
        %v1424 = vsub.s32 0, %v1423
        %v1425 = vrot.slane %v1420, %v1424
        %v1427 = vmul.f32 %v1419, %v1425
        %v1428 = vld [vmem:[%s11] sm:$0x1]
        %v1430 = vlaneseq
        %v1431 = vshrl.u32 %v1430, 7
        %v1432 = vsub.s32 0, %v1431
        %v1433 = vrot.slane %v1428, %v1432
        %v1435 = vadd.f32 %v1427, %v1433
        %1436 = vst.msk [vmem:[%s454] sm:$0xff] %vm468, %v1435
        %p1437 = scmp.lt.s32.totalorder %s24, 1
        %s1438 = scalar_select %p1437, %s24, 1
        %s1439 = smul.addr %s1438, 8
        %s1440 = scalar_lea.vmem %s12, %s1439
        // Predicated region
        $region73: #{transformer_decoder_forward.6} parent=67 // pred_check
          %p1441 = pneg %p309
        $region74: #{transformer_decoder_forward.6} parent=67 // pred_check_branch
          %1443 = sbr.rel (%p1441) target = $region76
        $region75: #{transformer_decoder_forward.6} parent=67 // pred_region
          _
        $region76: #{transformer_decoder_forward.6} parent=67 // pred_fallthru
          _
      $region68: #{transformer_decoder_forward.6} parent=5 // pred_fallthru
        _
      %p1444 = scmp.le.s32.totalorder 2, %s19
      // Predicated region
      $region77: #{transformer_decoder_forward.6} parent=5 // pred_check
        %p1445 = pneg %p1444
      $region78: #{transformer_decoder_forward.6} parent=5 // pred_check_branch
        %1447 = sbr.rel (%p1445) target = $region80
      $region79: #{transformer_decoder_forward.6} parent=5 // pred_region
        %s1448 = ssub.s32 %s19, 2
        // Predicated region
        $region81: #{transformer_decoder_forward.6} parent=79 // pred_check
          %p1449 = pneg %p315
        $region82: #{transformer_decoder_forward.6} parent=79 // pred_check_branch
          %1451 = sbr.rel (%p1449) target = $region84
        $region83: #{transformer_decoder_forward.6} parent=79 // pred_region
          %p1452 = scmp.lt.s32.totalorder %s25, 1
          %s1453 = scalar_select %p1452, %s25, 1
          %s1454 = smul.addr %s1453, 8
          %s1455 = scalar_lea.vmem %s12, %s1454
        $region84: #{transformer_decoder_forward.6} parent=79 // pred_fallthru
          _
      $region80: #{transformer_decoder_forward.6} parent=5 // pred_fallthru
        _
    $region6: #{transformer_decoder_forward.6} parent=1 // loop_footer
      %s23 = sadd.s32 1, %s19
    $region7: #{transformer_decoder_forward.6} parent=1 // loop_footer_branch
      %18 = sbr.rel target = $region3
    $region8: #{transformer_decoder_forward.6} parent=1 // loop_exit
      _
    %1456 = vsyncpa [#allocation3], 1
    %s1457 = scalar_lea.sflag [#allocation3], 1
    %1458 = vsyncpa %s1457, 1

// kernel: transformer_decoder_forward.7
$region0: #{transformer_decoder_forward.7}
  #allocation0 [shape = 'u32[]', space=smem, size = 0x4, offset = 0x4, fixed_abs, tag = 'smem constant byte address 0x4 - core index']
  #allocation1 [shape = 'u32[144,128]{1,0:T(1,128)}', space=vmem, size = 0x12000, scoped, tag = 'internal scratch']
  %s0 = inlined_call_operand.vmem [shape: f32[2,8,32], index: 0, kind: input, shape index: {}, may-alias: {0,1}]
  %s1 = inlined_call_operand.vmem [shape: f32[2,8,32], index: 1, kind: input, shape index: {}, may-alias: {0,1}]
  %s2 = inlined_call_operand.vmem [shape: f32[2,1,8], index: 2, kind: input, shape index: {}]
  %s3 = inlined_call_operand.vmem [shape: f32[8,8], index: 3, kind: input, shape index: {}]
  %s4 = inlined_call_operand.vmem [shape: f32[32,32], index: 4, kind: input, shape index: {}]
  %s5 = inlined_call_operand.vmem [shape: f32[1,32], index: 5, kind: input, shape index: {}]
  %s6 = inlined_call_operand.vmem [shape: f32[32,64], index: 6, kind: input, shape index: {}]
  %s7 = inlined_call_operand.vmem [shape: f32[1,64], index: 7, kind: input, shape index: {}]
  %s8 = inlined_call_operand.vmem [shape: f32[32,32], index: 8, kind: input, shape index: {}]
  %s9 = inlined_call_operand.vmem [shape: f32[1,32], index: 9, kind: input, shape index: {}]
  %s10 = inlined_call_operand.vmem [shape: f32[1,32], index: 10, kind: input, shape index: {}]
  %s11 = inlined_call_operand.vmem [shape: f32[1,32], index: 11, kind: input, shape index: {}]
  %s12 = inlined_call_operand.vmem [shape: f32[2,8,32], index: 12, kind: output, shape index: {}]
  %s13 = sld [smem:[#allocation0]]
  $region81: #{transformer_decoder_forward.7} parent=0
    _
  %s15 = ssub.s32 1, %s13
  %s16 = scalar_select 0, %s15, %s13
  loop: start=0, step=1, limit=4
  $region2: #{transformer_decoder_forward.7} parent=0 // loop_pre_header
    _
  $region3: #{transformer_decoder_forward.7} parent=0 // loop_header
    %s18 = sphi 0, %s22
    %p19 = scmp.ge.s32.totalorder %s18, 4
    %s28 = sphi 0, %s30
    %s31 = sphi 0, %s28
    %s32 = sphi 0, %s31
    %s48 = sphi 0, %s32
    %s54 = sphi 0, %s56
    %s57 = sphi 0, %s54
    %s58 = sphi 0, %s57
    %s74 = sphi 0, %s58
    %s80 = sphi 0, %s82
    %s83 = sphi 0, %s80
    %s84 = sphi 0, %s83
    %s100 = sphi 0, %s84
    %s104 = sphi 0, %s104
    %s106 = sphi 0, %s104
    %s107 = sphi 0, %s106
    %s121 = sphi 0, %s107
    %s125 = sphi 0, %s125
    %s127 = sphi 0, %s125
    %s128 = sphi 0, %s127
    %s142 = sphi 0, %s128
    %s146 = sphi 0, %s146
    %s148 = sphi 0, %s146
    %s149 = sphi 0, %s148
    %s163 = sphi 0, %s149
    %s167 = sphi 0, %s167
    %s169 = sphi 0, %s167
    %s170 = sphi 0, %s169
    %s184 = sphi 0, %s170
    %s188 = sphi 0, %s188
    %s190 = sphi 0, %s188
    %s191 = sphi 0, %s190
    %s205 = sphi 0, %s191
    %s209 = sphi 0, %s209
    %s211 = sphi 0, %s209
    %s212 = sphi 0, %s211
    %s226 = sphi 0, %s212
    %s230 = sphi 0, %s230
    %s232 = sphi 0, %s230
    %s233 = sphi 0, %s232
    %s247 = sphi 0, %s233
    %s251 = sphi 0, %s251
    %s253 = sphi 0, %s251
    %s254 = sphi 0, %s253
    %s268 = sphi 0, %s254
    %s272 = sphi 0, %s272
    %s274 = sphi 0, %s272
    %s275 = sphi 0, %s274
    %s289 = sphi 0, %s275
    %s295 = sphi 0, %s297
    %s298 = sphi 0, %s295
    %s299 = sphi 0, %s298
    %s315 = sphi 0, %s299
  $region4: #{transformer_decoder_forward.7} parent=0 // loop_header_branch
    %21 = sbr.rel (%p19) target = $region8
  $region5: #{transformer_decoder_forward.7} parent=0 // loop_body
    %s23 = ssub.s32 %s18, 1
    %s24 = ssub.s32 %s18, 2
    %s25 = sadd.s32 %s18, 1
    %s26 = ssub.s32 %s18, %s25
    %p27 = scmp.eq.s32.totalorder %s26, 0
    %s29 = sadd.s32 %s28, 1
    %s30 = scalar_select %p27, %s28, %s29
    %p33 = pneg %p27
    %p34 = scmp.eq.s32.totalorder %s18, 1
    %p35 = por %p33, %p34
    %p36 = scmp.ne.s32.totalorder %s28, %s31
    %p37 = scmp.eq.s32.totalorder %s18, 0
    %p38 = por %p36, %p37
    %p39 = scmp.ne.s32.totalorder %s28, %s31
    %p40 = scmp.eq.s32.totalorder %s23, 1
    %p41 = por %p39, %p40
    %p42 = scmp.ne.s32.totalorder %s31, %s32
    %p43 = scmp.eq.s32.totalorder %s23, 0
    %p44 = por %p42, %p43
    %p45 = scmp.ne.s32.totalorder %s31, %s32
    %p46 = scmp.eq.s32.totalorder %s24, 1
    %p47 = por %p45, %p46
    %p49 = scmp.ne.s32.totalorder %s32, %s48
    %p50 = scmp.eq.s32.totalorder %s24, 0
    %p51 = por %p49, %p50
    %s52 = ssub.s32 %s18, %s25
    %p53 = scmp.eq.s32.totalorder %s52, 0
    %s55 = sadd.s32 %s54, 1
    %s56 = scalar_select %p53, %s54, %s55
    %p59 = pneg %p53
    %p60 = scmp.eq.s32.totalorder %s18, 1
    %p61 = por %p59, %p60
    %p62 = scmp.ne.s32.totalorder %s54, %s57
    %p63 = scmp.eq.s32.totalorder %s18, 0
    %p64 = por %p62, %p63
    %p65 = scmp.ne.s32.totalorder %s54, %s57
    %p66 = scmp.eq.s32.totalorder %s23, 1
    %p67 = por %p65, %p66
    %p68 = scmp.ne.s32.totalorder %s57, %s58
    %p69 = scmp.eq.s32.totalorder %s23, 0
    %p70 = por %p68, %p69
    %p71 = scmp.ne.s32.totalorder %s57, %s58
    %p72 = scmp.eq.s32.totalorder %s24, 1
    %p73 = por %p71, %p72
    %p75 = scmp.ne.s32.totalorder %s58, %s74
    %p76 = scmp.eq.s32.totalorder %s24, 0
    %p77 = por %p75, %p76
    %s78 = ssub.s32 %s18, %s25
    %p79 = scmp.eq.s32.totalorder %s78, 0
    %s81 = sadd.s32 %s80, 1
    %s82 = scalar_select %p79, %s80, %s81
    %p85 = pneg %p79
    %p86 = scmp.eq.s32.totalorder %s18, 1
    %p87 = por %p85, %p86
    %p88 = scmp.ne.s32.totalorder %s80, %s83
    %p89 = scmp.eq.s32.totalorder %s18, 0
    %p90 = por %p88, %p89
    %p91 = scmp.ne.s32.totalorder %s80, %s83
    %p92 = scmp.eq.s32.totalorder %s23, 1
    %p93 = por %p91, %p92
    %p94 = scmp.ne.s32.totalorder %s83, %s84
    %p95 = scmp.eq.s32.totalorder %s23, 0
    %p96 = por %p94, %p95
    %p97 = scmp.ne.s32.totalorder %s83, %s84
    %p98 = scmp.eq.s32.totalorder %s24, 1
    %p99 = por %p97, %p98
    %p101 = scmp.ne.s32.totalorder %s84, %s100
    %p102 = scmp.eq.s32.totalorder %s24, 0
    %p103 = por %p101, %p102
    %s105 = sadd.s32 %s104, 1
    %p108 = scmp.eq.s32.totalorder %s18, 1
    %p109 = scmp.ne.s32.totalorder %s104, %s106
    %p110 = scmp.eq.s32.totalorder %s18, 0
    %p111 = por %p109, %p110
    %p112 = scmp.ne.s32.totalorder %s104, %s106
    %p113 = scmp.eq.s32.totalorder %s23, 1
    %p114 = por %p112, %p113
    %p115 = scmp.ne.s32.totalorder %s106, %s107
    %p116 = scmp.eq.s32.totalorder %s23, 0
    %p117 = por %p115, %p116
    %p118 = scmp.ne.s32.totalorder %s106, %s107
    %p119 = scmp.eq.s32.totalorder %s24, 1
    %p120 = por %p118, %p119
    %p122 = scmp.ne.s32.totalorder %s107, %s121
    %p123 = scmp.eq.s32.totalorder %s24, 0
    %p124 = por %p122, %p123
    %s126 = sadd.s32 %s125, 1
    %p129 = scmp.eq.s32.totalorder %s18, 1
    %p130 = scmp.ne.s32.totalorder %s125, %s127
    %p131 = scmp.eq.s32.totalorder %s18, 0
    %p132 = por %p130, %p131
    %p133 = scmp.ne.s32.totalorder %s125, %s127
    %p134 = scmp.eq.s32.totalorder %s23, 1
    %p135 = por %p133, %p134
    %p136 = scmp.ne.s32.totalorder %s127, %s128
    %p137 = scmp.eq.s32.totalorder %s23, 0
    %p138 = por %p136, %p137
    %p139 = scmp.ne.s32.totalorder %s127, %s128
    %p140 = scmp.eq.s32.totalorder %s24, 1
    %p141 = por %p139, %p140
    %p143 = scmp.ne.s32.totalorder %s128, %s142
    %p144 = scmp.eq.s32.totalorder %s24, 0
    %p145 = por %p143, %p144
    %s147 = sadd.s32 %s146, 1
    %p150 = scmp.eq.s32.totalorder %s18, 1
    %p151 = scmp.ne.s32.totalorder %s146, %s148
    %p152 = scmp.eq.s32.totalorder %s18, 0
    %p153 = por %p151, %p152
    %p154 = scmp.ne.s32.totalorder %s146, %s148
    %p155 = scmp.eq.s32.totalorder %s23, 1
    %p156 = por %p154, %p155
    %p157 = scmp.ne.s32.totalorder %s148, %s149
    %p158 = scmp.eq.s32.totalorder %s23, 0
    %p159 = por %p157, %p158
    %p160 = scmp.ne.s32.totalorder %s148, %s149
    %p161 = scmp.eq.s32.totalorder %s24, 1
    %p162 = por %p160, %p161
    %p164 = scmp.ne.s32.totalorder %s149, %s163
    %p165 = scmp.eq.s32.totalorder %s24, 0
    %p166 = por %p164, %p165
    %s168 = sadd.s32 %s167, 1
    %p171 = scmp.eq.s32.totalorder %s18, 1
    %p172 = scmp.ne.s32.totalorder %s167, %s169
    %p173 = scmp.eq.s32.totalorder %s18, 0
    %p174 = por %p172, %p173
    %p175 = scmp.ne.s32.totalorder %s167, %s169
    %p176 = scmp.eq.s32.totalorder %s23, 1
    %p177 = por %p175, %p176
    %p178 = scmp.ne.s32.totalorder %s169, %s170
    %p179 = scmp.eq.s32.totalorder %s23, 0
    %p180 = por %p178, %p179
    %p181 = scmp.ne.s32.totalorder %s169, %s170
    %p182 = scmp.eq.s32.totalorder %s24, 1
    %p183 = por %p181, %p182
    %p185 = scmp.ne.s32.totalorder %s170, %s184
    %p186 = scmp.eq.s32.totalorder %s24, 0
    %p187 = por %p185, %p186
    %s189 = sadd.s32 %s188, 1
    %p192 = scmp.eq.s32.totalorder %s18, 1
    %p193 = scmp.ne.s32.totalorder %s188, %s190
    %p194 = scmp.eq.s32.totalorder %s18, 0
    %p195 = por %p193, %p194
    %p196 = scmp.ne.s32.totalorder %s188, %s190
    %p197 = scmp.eq.s32.totalorder %s23, 1
    %p198 = por %p196, %p197
    %p199 = scmp.ne.s32.totalorder %s190, %s191
    %p200 = scmp.eq.s32.totalorder %s23, 0
    %p201 = por %p199, %p200
    %p202 = scmp.ne.s32.totalorder %s190, %s191
    %p203 = scmp.eq.s32.totalorder %s24, 1
    %p204 = por %p202, %p203
    %p206 = scmp.ne.s32.totalorder %s191, %s205
    %p207 = scmp.eq.s32.totalorder %s24, 0
    %p208 = por %p206, %p207
    %s210 = sadd.s32 %s209, 1
    %p213 = scmp.eq.s32.totalorder %s18, 1
    %p214 = scmp.ne.s32.totalorder %s209, %s211
    %p215 = scmp.eq.s32.totalorder %s18, 0
    %p216 = por %p214, %p215
    %p217 = scmp.ne.s32.totalorder %s209, %s211
    %p218 = scmp.eq.s32.totalorder %s23, 1
    %p219 = por %p217, %p218
    %p220 = scmp.ne.s32.totalorder %s211, %s212
    %p221 = scmp.eq.s32.totalorder %s23, 0
    %p222 = por %p220, %p221
    %p223 = scmp.ne.s32.totalorder %s211, %s212
    %p224 = scmp.eq.s32.totalorder %s24, 1
    %p225 = por %p223, %p224
    %p227 = scmp.ne.s32.totalorder %s212, %s226
    %p228 = scmp.eq.s32.totalorder %s24, 0
    %p229 = por %p227, %p228
    %s231 = sadd.s32 %s230, 1
    %p234 = scmp.eq.s32.totalorder %s18, 1
    %p235 = scmp.ne.s32.totalorder %s230, %s232
    %p236 = scmp.eq.s32.totalorder %s18, 0
    %p237 = por %p235, %p236
    %p238 = scmp.ne.s32.totalorder %s230, %s232
    %p239 = scmp.eq.s32.totalorder %s23, 1
    %p240 = por %p238, %p239
    %p241 = scmp.ne.s32.totalorder %s232, %s233
    %p242 = scmp.eq.s32.totalorder %s23, 0
    %p243 = por %p241, %p242
    %p244 = scmp.ne.s32.totalorder %s232, %s233
    %p245 = scmp.eq.s32.totalorder %s24, 1
    %p246 = por %p244, %p245
    %p248 = scmp.ne.s32.totalorder %s233, %s247
    %p249 = scmp.eq.s32.totalorder %s24, 0
    %p250 = por %p248, %p249
    %s252 = sadd.s32 %s251, 1
    %p255 = scmp.eq.s32.totalorder %s18, 1
    %p256 = scmp.ne.s32.totalorder %s251, %s253
    %p257 = scmp.eq.s32.totalorder %s18, 0
    %p258 = por %p256, %p257
    %p259 = scmp.ne.s32.totalorder %s251, %s253
    %p260 = scmp.eq.s32.totalorder %s23, 1
    %p261 = por %p259, %p260
    %p262 = scmp.ne.s32.totalorder %s253, %s254
    %p263 = scmp.eq.s32.totalorder %s23, 0
    %p264 = por %p262, %p263
    %p265 = scmp.ne.s32.totalorder %s253, %s254
    %p266 = scmp.eq.s32.totalorder %s24, 1
    %p267 = por %p265, %p266
    %p269 = scmp.ne.s32.totalorder %s254, %s268
    %p270 = scmp.eq.s32.totalorder %s24, 0
    %p271 = por %p269, %p270
    %s273 = sadd.s32 %s272, 1
    %p276 = scmp.eq.s32.totalorder %s18, 1
    %p277 = scmp.ne.s32.totalorder %s272, %s274
    %p278 = scmp.eq.s32.totalorder %s18, 0
    %p279 = por %p277, %p278
    %p280 = scmp.ne.s32.totalorder %s272, %s274
    %p281 = scmp.eq.s32.totalorder %s23, 1
    %p282 = por %p280, %p281
    %p283 = scmp.ne.s32.totalorder %s274, %s275
    %p284 = scmp.eq.s32.totalorder %s23, 0
    %p285 = por %p283, %p284
    %p286 = scmp.ne.s32.totalorder %s274, %s275
    %p287 = scmp.eq.s32.totalorder %s24, 1
    %p288 = por %p286, %p287
    %p290 = scmp.ne.s32.totalorder %s275, %s289
    %p291 = scmp.eq.s32.totalorder %s24, 0
    %p292 = por %p290, %p291
    %s293 = ssub.s32 %s18, %s25
    %p294 = scmp.eq.s32.totalorder %s293, 0
    %s296 = sadd.s32 %s295, 1
    %s297 = scalar_select %p294, %s295, %s296
    %p300 = pneg %p294
    %p301 = scmp.eq.s32.totalorder %s18, 1
    %p302 = por %p300, %p301
    %p303 = scmp.ne.s32.totalorder %s295, %s298
    %p304 = scmp.eq.s32.totalorder %s18, 0
    %p305 = por %p303, %p304
    %p306 = scmp.ne.s32.totalorder %s295, %s298
    %p307 = scmp.eq.s32.totalorder %s23, 1
    %p308 = por %p306, %p307
    %p309 = scmp.ne.s32.totalorder %s298, %s299
    %p310 = scmp.eq.s32.totalorder %s23, 0
    %p311 = por %p309, %p310
    %p312 = scmp.ne.s32.totalorder %s298, %s299
    %p313 = scmp.eq.s32.totalorder %s24, 1
    %p314 = por %p312, %p313
    %p316 = scmp.ne.s32.totalorder %s299, %s315
    %p317 = scmp.eq.s32.totalorder %s24, 0
    %p318 = por %p316, %p317
    %p319 = scmp.le.s32.totalorder 1, %s18
    %p320 = scmp.lt.s32.totalorder %s18, 3
    %p321 = pnand %p319, %p320
    %p322 = pneg %p321
    // Predicated region
    $region9: #{transformer_decoder_forward.7} parent=5 // pred_check
      _
    $region10: #{transformer_decoder_forward.7} parent=5 // pred_check_branch
      %324 = sbr.rel (%p321) target = $region12
    $region11: #{transformer_decoder_forward.7} parent=5 // pred_region
      %s325 = ssub.s32 %s18, 1
      // Predicated region
      $region13: #{transformer_decoder_forward.7} parent=11 // pred_check
        %p326 = pneg %p117
      $region14: #{transformer_decoder_forward.7} parent=11 // pred_check_branch
        %328 = sbr.rel (%p326) target = $region16
      $region15: #{transformer_decoder_forward.7} parent=11 // pred_region
        _
      $region16: #{transformer_decoder_forward.7} parent=11 // pred_fallthru
        _
      // Predicated region
      $region17: #{transformer_decoder_forward.7} parent=11 // pred_check
        %p329 = pneg %p138
      $region18: #{transformer_decoder_forward.7} parent=11 // pred_check_branch
        %331 = sbr.rel (%p329) target = $region20
      $region19: #{transformer_decoder_forward.7} parent=11 // pred_region
        _
      $region20: #{transformer_decoder_forward.7} parent=11 // pred_fallthru
        _
      // Predicated region
      $region21: #{transformer_decoder_forward.7} parent=11 // pred_check
        %p332 = pneg %p159
      $region22: #{transformer_decoder_forward.7} parent=11 // pred_check_branch
        %334 = sbr.rel (%p332) target = $region24
      $region23: #{transformer_decoder_forward.7} parent=11 // pred_region
        _
      $region24: #{transformer_decoder_forward.7} parent=11 // pred_fallthru
        _
      // Predicated region
      $region25: #{transformer_decoder_forward.7} parent=11 // pred_check
        %p335 = pneg %p180
      $region26: #{transformer_decoder_forward.7} parent=11 // pred_check_branch
        %337 = sbr.rel (%p335) target = $region28
      $region27: #{transformer_decoder_forward.7} parent=11 // pred_region
        _
      $region28: #{transformer_decoder_forward.7} parent=11 // pred_fallthru
        _
      // Predicated region
      $region29: #{transformer_decoder_forward.7} parent=11 // pred_check
        %p338 = pneg %p201
      $region30: #{transformer_decoder_forward.7} parent=11 // pred_check_branch
        %340 = sbr.rel (%p338) target = $region32
      $region31: #{transformer_decoder_forward.7} parent=11 // pred_region
        _
      $region32: #{transformer_decoder_forward.7} parent=11 // pred_fallthru
        _
      // Predicated region
      $region33: #{transformer_decoder_forward.7} parent=11 // pred_check
        %p341 = pneg %p222
      $region34: #{transformer_decoder_forward.7} parent=11 // pred_check_branch
        %343 = sbr.rel (%p341) target = $region36
      $region35: #{transformer_decoder_forward.7} parent=11 // pred_region
        _
      $region36: #{transformer_decoder_forward.7} parent=11 // pred_fallthru
        _
      // Predicated region
      $region37: #{transformer_decoder_forward.7} parent=11 // pred_check
        %p344 = pneg %p243
      $region38: #{transformer_decoder_forward.7} parent=11 // pred_check_branch
        %346 = sbr.rel (%p344) target = $region40
      $region39: #{transformer_decoder_forward.7} parent=11 // pred_region
        _
      $region40: #{transformer_decoder_forward.7} parent=11 // pred_fallthru
        _
      // Predicated region
      $region41: #{transformer_decoder_forward.7} parent=11 // pred_check
        %p347 = pneg %p264
      $region42: #{transformer_decoder_forward.7} parent=11 // pred_check_branch
        %349 = sbr.rel (%p347) target = $region44
      $region43: #{transformer_decoder_forward.7} parent=11 // pred_region
        _
      $region44: #{transformer_decoder_forward.7} parent=11 // pred_fallthru
        _
      // Predicated region
      $region45: #{transformer_decoder_forward.7} parent=11 // pred_check
        %p350 = pneg %p285
      $region46: #{transformer_decoder_forward.7} parent=11 // pred_check_branch
        %352 = sbr.rel (%p350) target = $region48
      $region47: #{transformer_decoder_forward.7} parent=11 // pred_region
        _
      $region48: #{transformer_decoder_forward.7} parent=11 // pred_fallthru
        _
    $region12: #{transformer_decoder_forward.7} parent=5 // pred_fallthru
      _
    %p353 = scmp.lt.s32.totalorder %s18, 2
    // Predicated region
    $region49: #{transformer_decoder_forward.7} parent=5 // pred_check
      %p354 = pneg %p353
    $region50: #{transformer_decoder_forward.7} parent=5 // pred_check_branch
      %356 = sbr.rel (%p354) target = $region52
    $region51: #{transformer_decoder_forward.7} parent=5 // pred_region
      // Predicated region
      $region53: #{transformer_decoder_forward.7} parent=51 // pred_check
        %p357 = pneg %p38
      $region54: #{transformer_decoder_forward.7} parent=51 // pred_check_branch
        %359 = sbr.rel (%p357) target = $region56
      $region55: #{transformer_decoder_forward.7} parent=51 // pred_region
        %p360 = scmp.lt.s32.totalorder %s18, 1
        %s361 = scalar_select %p360, %s18, 1
        %s362 = smul.addr %s361, 8
        %s363 = scalar_lea.vmem %s0, %s362
      $region56: #{transformer_decoder_forward.7} parent=51 // pred_fallthru
        _
      // Predicated region
      $region57: #{transformer_decoder_forward.7} parent=51 // pred_check
        %p364 = pneg %p64
      $region58: #{transformer_decoder_forward.7} parent=51 // pred_check_branch
        %366 = sbr.rel (%p364) target = $region60
      $region59: #{transformer_decoder_forward.7} parent=51 // pred_region
        %p367 = scmp.lt.s32.totalorder %s18, 1
        %s368 = scalar_select %p367, %s18, 1
        %s369 = smul.addr %s368, 8
        %s370 = scalar_lea.vmem %s1, %s369
      $region60: #{transformer_decoder_forward.7} parent=51 // pred_fallthru
        _
      // Predicated region
      $region61: #{transformer_decoder_forward.7} parent=51 // pred_check
        %p371 = pneg %p90
      $region62: #{transformer_decoder_forward.7} parent=51 // pred_check_branch
        %373 = sbr.rel (%p371) target = $region64
      $region63: #{transformer_decoder_forward.7} parent=51 // pred_region
        %p374 = scmp.lt.s32.totalorder %s18, 1
        %s375 = scalar_select %p374, %s18, 1
        %s376 = scalar_lea.vmem %s2, %s375
      $region64: #{transformer_decoder_forward.7} parent=51 // pred_fallthru
        _
    $region52: #{transformer_decoder_forward.7} parent=5 // pred_fallthru
      _
    %p377 = scmp.le.s32.totalorder 1, %s18
    %p378 = scmp.lt.s32.totalorder %s18, 3
    %p379 = pnand %p377, %p378
    %p380 = pneg %p379
    // Predicated region
    $region65: #{transformer_decoder_forward.7} parent=5 // pred_check
      _
    $region66: #{transformer_decoder_forward.7} parent=5 // pred_check_branch
      %382 = sbr.rel (%p379) target = $region68
    $region67: #{transformer_decoder_forward.7} parent=5 // pred_region
      %s383 = ssub.s32 %s18, 1
      %p384 = scmp.lt.s32.totalorder %s23, 1
      %s385 = scalar_select %p384, %s23, 1
      %s386 = smul.addr %s385, 8
      %s387 = scalar_lea.vmem %s0, %s386
      %p388 = pneg %p44
      %p389 = pneg %p41
      %p390 = scmp.lt.s32.totalorder %s23, 1
      %s391 = scalar_select %p390, %s23, 1
      %s392 = smul.addr %s391, 8
      %s393 = scalar_lea.vmem %s1, %s392
      %p394 = pneg %p70
      %p395 = pneg %p67
      %p396 = scmp.lt.s32.totalorder %s23, 1
      %s397 = scalar_select %p396, %s23, 1
      %s398 = scalar_lea.vmem %s2, %s397
      %p399 = pneg %p96
      %p400 = pneg %p93
      %p401 = pneg %p117
      %p402 = pneg %p114
      %p403 = pneg %p138
      %p404 = pneg %p135
      %p405 = pneg %p159
      %p406 = pneg %p156
      %p407 = pneg %p180
      %p408 = pneg %p177
      %p409 = pneg %p201
      %p410 = pneg %p198
      %p411 = pneg %p222
      %p412 = pneg %p219
      %p413 = pneg %p243
      %p414 = pneg %p240
      %p415 = pneg %p264
      %p416 = pneg %p261
      %p417 = pneg %p285
      %p418 = pneg %p282
      %p419 = pneg %p311
      %p420 = pneg %p308
      %p421 = scmp.lt.s32.totalorder %s23, 1
      %s422 = scalar_select %p421, %s23, 1
      %s423 = smul.addr %s422, 8
      %s424 = scalar_lea.vmem %s12, %s423
      %p425 = scmp.lt.s32.totalorder %s23, 1
      %s426 = scalar_select %p425, %s23, 1
      %s427 = smul.addr %s426, 8
      %s428 = scalar_lea.vmem %s0, %s427
      %p429 = scmp.lt.s32.totalorder %s23, 1
      %s430 = scalar_select %p429, %s23, 1
      %s431 = smul.addr %s430, 8
      %s432 = scalar_lea.vmem %s1, %s431
      %p433 = scmp.lt.s32.totalorder %s23, 1
      %s434 = scalar_select %p433, %s23, 1
      %s435 = scalar_lea.vmem %s2, %s434
      %p436 = scmp.lt.s32.totalorder %s23, 1
      %s437 = scalar_select %p436, %s23, 1
      %s438 = smul.addr %s437, 8
      %s439 = scalar_lea.vmem %s12, %s438
      %v440 = vld [vmem:[%s428] sm:$0xff]
      %v441 = vld [vmem:[%s432] sm:$0xff]
      %v442 = vld [vmem:[%s4] sm:$0xff]
      %v443 = vld [vmem:[%s4 + $0x8] sm:$0xff]
      %v444 = vld [vmem:[%s4 + $0x10] sm:$0xff]
      %v445 = vld [vmem:[%s4 + $0x18] sm:$0xff]
      %v446 = vld [vmem:[%s5] sm:$0x1]
      %v448 = vlaneseq
      %v449 = vshrl.u32 %v448, 7
      %v450 = vsub.s32 0, %v449
      %v451 = vrot.slane %v446, %v450
      %vm453 = vcmask 261120
      %v455 = vsel %vm453, %v440, 0
      %457 = vmatprep.subr.mxu0 0.0
      %458 = vmatpush1.msra.mxu0 0.0
      %459 = vmatprep.subr.mxu0 0.0
      %460 = vmatpush1.msra.mxu0 0.0
      %461 = vmatprep.subr.mxu0 0.0
      %462 = vmatpush1.msra.mxu0 0.0
      %463 = vmatprep.subr.mxu0 0.0
      %464 = vmatpush1.msra.mxu0 0.0
      %465 = vmatprep.subr.mxu0 0.0
      %466 = vmatpush1.msra.mxu0 0.0
      %467 = vmatprep.subr.mxu0 0.0
      %468 = vmatpush1.msra.mxu0 0.0
      %469 = vmatprep.subr.mxu0 0.0
      %470 = vmatpush1.msra.mxu0 0.0
      %471 = vmatprep.subr.mxu0 0.0
      %472 = vmatpush1.msra.mxu0 0.0
      %473 = vmatprep.subr.mxu0 0.0
      %474 = vmatpush1.msra.mxu0 0.0
      %475 = vmatprep.subr.mxu0 0.0
      %476 = vmatpush1.msra.mxu0 0.0
      %477 = vmatprep.subr.mxu0 0.0
      %478 = vmatpush1.msra.mxu0 0.0
      %479 = vmatprep.subr.mxu0 0.0
      %480 = vmatpush1.msra.mxu0 0.0
      %481 = vmatprep.subr.mxu0 0.0
      %482 = vmatpush1.msra.mxu0 %v445
      %483 = vmatprep.subr.mxu0 0.0
      %484 = vmatpush1.msra.mxu0 %v444
      %485 = vmatprep.subr.mxu0 0.0
      %486 = vmatpush1.msra.mxu0 %v443
      %487 = vmatprep.subr.mxu0 0.0
      %488 = vmatpush1.msra.mxu0 %v442
      %489 = vmatprep.subr.mxu0 0.0
      %490 = vmatpush2.msra.mxu0 0.0
      %491 = vmatprep.subr.mxu0 0.0
      %492 = vmatpush2.msra.mxu0 0.0
      %493 = vmatprep.subr.mxu0 0.0
      %494 = vmatpush2.msra.mxu0 0.0
      %495 = vmatprep.subr.mxu0 0.0
      %496 = vmatpush2.msra.mxu0 0.0
      %497 = vmatprep.subr.mxu0 0.0
      %498 = vmatpush2.msra.mxu0 0.0
      %499 = vmatprep.subr.mxu0 0.0
      %500 = vmatpush2.msra.mxu0 0.0
      %501 = vmatprep.subr.mxu0 0.0
      %502 = vmatpush2.msra.mxu0 0.0
      %503 = vmatprep.subr.mxu0 0.0
      %504 = vmatpush2.msra.mxu0 0.0
      %505 = vmatprep.subr.mxu0 0.0
      %506 = vmatpush2.msra.mxu0 0.0
      %507 = vmatprep.subr.mxu0 0.0
      %508 = vmatpush2.msra.mxu0 0.0
      %509 = vmatprep.subr.mxu0 0.0
      %510 = vmatpush2.msra.mxu0 0.0
      %511 = vmatprep.subr.mxu0 0.0
      %512 = vmatpush2.msra.mxu0 0.0
      %513 = vmatprep.subr.mxu0 0.0
      %514 = vmatpush2.msra.mxu0 0.0
      %515 = vmatprep.subr.mxu0 0.0
      %516 = vmatpush2.msra.mxu0 0.0
      %517 = vmatprep.subr.mxu0 0.0
      %518 = vmatpush2.msra.mxu0 0.0
      %519 = vmatprep.subr.mxu0 0.0
      %520 = vmatpush2.msra.mxu0 0.0
      %521 = vmatprep.mubr.f32.mxu0 0.0
      %522 = vmatmul.mubr.f32.gmra.mxu0 %v455
      %v523 = vpop.f32.mrf.mxu0
      %v524 = vadd.f32 %v451, %v523
      %v525 = vpop.f32.mrf.mxu0
      %526 = vdwg.mxu0
      %v527 = vld [vmem:[%s6] sm:$0xff]
      %v528 = vld [vmem:[%s6 + $0x8] sm:$0xff]
      %v529 = vld [vmem:[%s6 + $0x10] sm:$0xff]
      %v530 = vld [vmem:[%s6 + $0x18] sm:$0xff]
      %v531 = vld [vmem:[%s7] sm:$0x1]
      %v533 = vlaneseq
      %v534 = vshrl.u32 %v533, 7
      %v535 = vsub.s32 0, %v534
      %v536 = vrot.slane %v531, %v535
      %v539 = vsel %vm453, %v441, 0
      %541 = vmatprep.subr.mxu0 0.0
      %542 = vmatpush1.msra.mxu0 0.0
      %543 = vmatprep.subr.mxu0 0.0
      %544 = vmatpush1.msra.mxu0 0.0
      %545 = vmatprep.subr.mxu0 0.0
      %546 = vmatpush1.msra.mxu0 0.0
      %547 = vmatprep.subr.mxu0 0.0
      %548 = vmatpush1.msra.mxu0 0.0
      %549 = vmatprep.subr.mxu0 0.0
      %550 = vmatpush1.msra.mxu0 0.0
      %551 = vmatprep.subr.mxu0 0.0
      %552 = vmatpush1.msra.mxu0 0.0
      %553 = vmatprep.subr.mxu0 0.0
      %554 = vmatpush1.msra.mxu0 0.0
      %555 = vmatprep.subr.mxu0 0.0
      %556 = vmatpush1.msra.mxu0 0.0
      %557 = vmatprep.subr.mxu0 0.0
      %558 = vmatpush1.msra.mxu0 0.0
      %559 = vmatprep.subr.mxu0 0.0
      %560 = vmatpush1.msra.mxu0 0.0
      %561 = vmatprep.subr.mxu0 0.0
      %562 = vmatpush1.msra.mxu0 0.0
      %563 = vmatprep.subr.mxu0 0.0
      %564 = vmatpush1.msra.mxu0 0.0
      %565 = vmatprep.subr.mxu0 0.0
      %566 = vmatpush1.msra.mxu0 %v530
      %567 = vmatprep.subr.mxu0 0.0
      %568 = vmatpush1.msra.mxu0 %v529
      %569 = vmatprep.subr.mxu0 0.0
      %570 = vmatpush1.msra.mxu0 %v528
      %571 = vmatprep.subr.mxu0 0.0
      %572 = vmatpush1.msra.mxu0 %v527
      %573 = vmatprep.subr.mxu0 0.0
      %574 = vmatpush2.msra.mxu0 0.0
      %575 = vmatprep.subr.mxu0 0.0
      %576 = vmatpush2.msra.mxu0 0.0
      %577 = vmatprep.subr.mxu0 0.0
      %578 = vmatpush2.msra.mxu0 0.0
      %579 = vmatprep.subr.mxu0 0.0
      %580 = vmatpush2.msra.mxu0 0.0
      %581 = vmatprep.subr.mxu0 0.0
      %582 = vmatpush2.msra.mxu0 0.0
      %583 = vmatprep.subr.mxu0 0.0
      %584 = vmatpush2.msra.mxu0 0.0
      %585 = vmatprep.subr.mxu0 0.0
      %586 = vmatpush2.msra.mxu0 0.0
      %587 = vmatprep.subr.mxu0 0.0
      %588 = vmatpush2.msra.mxu0 0.0
      %589 = vmatprep.subr.mxu0 0.0
      %590 = vmatpush2.msra.mxu0 0.0
      %591 = vmatprep.subr.mxu0 0.0
      %592 = vmatpush2.msra.mxu0 0.0
      %593 = vmatprep.subr.mxu0 0.0
      %594 = vmatpush2.msra.mxu0 0.0
      %595 = vmatprep.subr.mxu0 0.0
      %596 = vmatpush2.msra.mxu0 0.0
      %597 = vmatprep.subr.mxu0 0.0
      %598 = vmatpush2.msra.mxu0 0.0
      %599 = vmatprep.subr.mxu0 0.0
      %600 = vmatpush2.msra.mxu0 0.0
      %601 = vmatprep.subr.mxu0 0.0
      %602 = vmatpush2.msra.mxu0 0.0
      %603 = vmatprep.subr.mxu0 0.0
      %604 = vmatpush2.msra.mxu0 0.0
      %605 = vmatprep.mubr.f32.mxu0 0.0
      %606 = vmatmul.mubr.f32.gmra.mxu0 %v539
      %v607 = vpop.f32.mrf.mxu0
      %v608 = vadd.f32 %v536, %v607
      %v609 = vpop.f32.mrf.mxu0
      %610 = vdwg.mxu0
      %v611 = vld [vmem:[%s435] sm:$0x1]
      %v612 = vld [vmem:[%s3] sm:$0xff]
      %v614 = vlaneseq
      %v615 = vshrl.u32 %v614, 7
      %v616 = vsub.s32 0, %v615
      %v617 = vrot.slane %v611, %v616
      %v619 = vmax.f32 %v617, %v612
      %vm620 = vcmp.gt.f32.partialorder %v619, 0.5
      %v621 = vsel %vm620, -1e+30, 0.0
      %vm622 = vcmask 64512
      %v624 = vsel %vm622, %v524, 0
      %v627 = vsel %vm622, %v608, 0
      %629 = vmatprep.subr.mxu0 0.0
      %630 = vmatpush1.xpose.msra.mxu0 0.0
      %631 = vmatprep.subr.mxu0 0.0
      %632 = vmatpush1.xpose.msra.mxu0 0.0
      %633 = vmatprep.subr.mxu0 0.0
      %634 = vmatpush1.xpose.msra.mxu0 0.0
      %635 = vmatprep.subr.mxu0 0.0
      %636 = vmatpush1.xpose.msra.mxu0 0.0
      %637 = vmatprep.subr.mxu0 0.0
      %638 = vmatpush1.xpose.msra.mxu0 0.0
      %639 = vmatprep.subr.mxu0 0.0
      %640 = vmatpush1.xpose.msra.mxu0 0.0
      %641 = vmatprep.subr.mxu0 0.0
      %642 = vmatpush1.xpose.msra.mxu0 0.0
      %643 = vmatprep.subr.mxu0 0.0
      %644 = vmatpush1.xpose.msra.mxu0 0.0
      %645 = vmatprep.subr.mxu0 0.0
      %646 = vmatpush1.xpose.msra.mxu0 0.0
      %647 = vmatprep.subr.mxu0 0.0
      %648 = vmatpush1.xpose.msra.mxu0 0.0
      %649 = vmatprep.subr.mxu0 0.0
      %650 = vmatpush1.xpose.msra.mxu0 0.0
      %651 = vmatprep.subr.mxu0 0.0
      %652 = vmatpush1.xpose.msra.mxu0 0.0
      %653 = vmatprep.subr.mxu0 0.0
      %654 = vmatpush1.xpose.msra.mxu0 0.0
      %655 = vmatprep.subr.mxu0 0.0
      %656 = vmatpush1.xpose.msra.mxu0 0.0
      %657 = vmatprep.subr.mxu0 0.0
      %658 = vmatpush1.xpose.msra.mxu0 0.0
      %659 = vmatprep.subr.mxu0 0.0
      %660 = vmatpush1.xpose.msra.mxu0 %v627
      %661 = vmatprep.subr.mxu0 0.0
      %662 = vmatpush2.xpose.msra.mxu0 0.0
      %663 = vmatprep.subr.mxu0 0.0
      %664 = vmatpush2.xpose.msra.mxu0 0.0
      %665 = vmatprep.subr.mxu0 0.0
      %666 = vmatpush2.xpose.msra.mxu0 0.0
      %667 = vmatprep.subr.mxu0 0.0
      %668 = vmatpush2.xpose.msra.mxu0 0.0
      %669 = vmatprep.subr.mxu0 0.0
      %670 = vmatpush2.xpose.msra.mxu0 0.0
      %671 = vmatprep.subr.mxu0 0.0
      %672 = vmatpush2.xpose.msra.mxu0 0.0
      %673 = vmatprep.subr.mxu0 0.0
      %674 = vmatpush2.xpose.msra.mxu0 0.0
      %675 = vmatprep.subr.mxu0 0.0
      %676 = vmatpush2.xpose.msra.mxu0 0.0
      %677 = vmatprep.subr.mxu0 0.0
      %678 = vmatpush2.xpose.msra.mxu0 0.0
      %679 = vmatprep.subr.mxu0 0.0
      %680 = vmatpush2.xpose.msra.mxu0 0.0
      %681 = vmatprep.subr.mxu0 0.0
      %682 = vmatpush2.xpose.msra.mxu0 0.0
      %683 = vmatprep.subr.mxu0 0.0
      %684 = vmatpush2.xpose.msra.mxu0 0.0
      %685 = vmatprep.subr.mxu0 0.0
      %686 = vmatpush2.xpose.msra.mxu0 0.0
      %687 = vmatprep.subr.mxu0 0.0
      %688 = vmatpush2.xpose.msra.mxu0 0.0
      %689 = vmatprep.subr.mxu0 0.0
      %690 = vmatpush2.xpose.msra.mxu0 0.0
      %691 = vmatprep.subr.mxu0 0.0
      %692 = vmatpush2.xpose.msra.mxu0 0.0
      %693 = vmatprep.mubr.f32.mxu0 0.0
      %694 = vmatmul.mubr.f32.gmra.mxu0 %v624
      %v695 = vpop.f32.mrf.mxu0
      %v696 = vadd.f32 0.0, %v695
      %v697 = vpop.f32.mrf.mxu0
      %698 = vdwg.mxu0
      %v699 = vmul.f32 %v696, 0.35355338
      %v700 = vadd.f32 %v699, %v621
      %v701 = vsel %vm622, %v700, -inf
      %702 = vmax.xlane.f32.xlu0 %v701
      %v703 = vpop.xlane.xlu0 %702
      %v704 = vsub.f32 %v700, %v703
      %v705 = vmul.f32 %v704, 1.442695
      %v706 = vpow.pop %v705
      %v707 = vsel %vm622, %v706, 0.0
      %708 = vadd.xlane.f32.xlu0 %v707
      %v709 = vpop.xlane.xlu0 %708
      %v710 = vrcp.pop %v709
      %v711 = vmul.f32 %v706, %v710
      %712 = vrot.lane.b32.xlu0 %v608, 96
      %v713 = vpop.permute.xlu0 %712
      %v716 = vsel %vm622, %v711, 0
      %718 = vmatprep.subr.mxu0 0.0
      %719 = vmatpush1.msra.mxu0 0.0
      %720 = vmatprep.subr.mxu0 0.0
      %721 = vmatpush1.msra.mxu0 0.0
      %722 = vmatprep.subr.mxu0 0.0
      %723 = vmatpush1.msra.mxu0 0.0
      %724 = vmatprep.subr.mxu0 0.0
      %725 = vmatpush1.msra.mxu0 0.0
      %726 = vmatprep.subr.mxu0 0.0
      %727 = vmatpush1.msra.mxu0 0.0
      %728 = vmatprep.subr.mxu0 0.0
      %729 = vmatpush1.msra.mxu0 0.0
      %730 = vmatprep.subr.mxu0 0.0
      %731 = vmatpush1.msra.mxu0 0.0
      %732 = vmatprep.subr.mxu0 0.0
      %733 = vmatpush1.msra.mxu0 0.0
      %734 = vmatprep.subr.mxu0 0.0
      %735 = vmatpush1.msra.mxu0 0.0
      %736 = vmatprep.subr.mxu0 0.0
      %737 = vmatpush1.msra.mxu0 0.0
      %738 = vmatprep.subr.mxu0 0.0
      %739 = vmatpush1.msra.mxu0 0.0
      %740 = vmatprep.subr.mxu0 0.0
      %741 = vmatpush1.msra.mxu0 0.0
      %742 = vmatprep.subr.mxu0 0.0
      %743 = vmatpush1.msra.mxu0 0.0
      %744 = vmatprep.subr.mxu0 0.0
      %745 = vmatpush1.msra.mxu0 0.0
      %746 = vmatprep.subr.mxu0 0.0
      %747 = vmatpush1.msra.mxu0 0.0
      %748 = vmatprep.subr.mxu0 0.0
      %749 = vmatpush1.msra.mxu0 %v713
      %750 = vmatprep.subr.mxu0 0.0
      %751 = vmatpush2.msra.mxu0 0.0
      %752 = vmatprep.subr.mxu0 0.0
      %753 = vmatpush2.msra.mxu0 0.0
      %754 = vmatprep.subr.mxu0 0.0
      %755 = vmatpush2.msra.mxu0 0.0
      %756 = vmatprep.subr.mxu0 0.0
      %757 = vmatpush2.msra.mxu0 0.0
      %758 = vmatprep.subr.mxu0 0.0
      %759 = vmatpush2.msra.mxu0 0.0
      %760 = vmatprep.subr.mxu0 0.0
      %761 = vmatpush2.msra.mxu0 0.0
      %762 = vmatprep.subr.mxu0 0.0
      %763 = vmatpush2.msra.mxu0 0.0
      %764 = vmatprep.subr.mxu0 0.0
      %765 = vmatpush2.msra.mxu0 0.0
      %766 = vmatprep.subr.mxu0 0.0
      %767 = vmatpush2.msra.mxu0 0.0
      %768 = vmatprep.subr.mxu0 0.0
      %769 = vmatpush2.msra.mxu0 0.0
      %770 = vmatprep.subr.mxu0 0.0
      %771 = vmatpush2.msra.mxu0 0.0
      %772 = vmatprep.subr.mxu0 0.0
      %773 = vmatpush2.msra.mxu0 0.0
      %774 = vmatprep.subr.mxu0 0.0
      %775 = vmatpush2.msra.mxu0 0.0
      %776 = vmatprep.subr.mxu0 0.0
      %777 = vmatpush2.msra.mxu0 0.0
      %778 = vmatprep.subr.mxu0 0.0
      %779 = vmatpush2.msra.mxu0 0.0
      %780 = vmatprep.subr.mxu0 0.0
      %781 = vmatpush2.msra.mxu0 0.0
      %782 = vmatprep.mubr.f32.mxu0 0.0
      %783 = vmatmul.mubr.f32.gmra.mxu0 %v716
      %v784 = vpop.f32.mrf.mxu0
      %v785 = vadd.f32 0.0, %v784
      %v786 = vpop.f32.mrf.mxu0
      %787 = vdwg.mxu0
      %788 = vrot.lane.b32.xlu0 %v524, 120
      %v789 = vpop.permute.xlu0 %788
      %790 = vrot.lane.b32.xlu0 %v608, 120
      %v791 = vpop.permute.xlu0 %790
      %v792 = vsel %vm622, %v789, 0
      %v794 = vsel %vm622, %v791, 0
      %796 = vmatprep.subr.mxu0 0.0
      %797 = vmatpush1.xpose.msra.mxu0 0.0
      %798 = vmatprep.subr.mxu0 0.0
      %799 = vmatpush1.xpose.msra.mxu0 0.0
      %800 = vmatprep.subr.mxu0 0.0
      %801 = vmatpush1.xpose.msra.mxu0 0.0
      %802 = vmatprep.subr.mxu0 0.0
      %803 = vmatpush1.xpose.msra.mxu0 0.0
      %804 = vmatprep.subr.mxu0 0.0
      %805 = vmatpush1.xpose.msra.mxu0 0.0
      %806 = vmatprep.subr.mxu0 0.0
      %807 = vmatpush1.xpose.msra.mxu0 0.0
      %808 = vmatprep.subr.mxu0 0.0
      %809 = vmatpush1.xpose.msra.mxu0 0.0
      %810 = vmatprep.subr.mxu0 0.0
      %811 = vmatpush1.xpose.msra.mxu0 0.0
      %812 = vmatprep.subr.mxu0 0.0
      %813 = vmatpush1.xpose.msra.mxu0 0.0
      %814 = vmatprep.subr.mxu0 0.0
      %815 = vmatpush1.xpose.msra.mxu0 0.0
      %816 = vmatprep.subr.mxu0 0.0
      %817 = vmatpush1.xpose.msra.mxu0 0.0
      %818 = vmatprep.subr.mxu0 0.0
      %819 = vmatpush1.xpose.msra.mxu0 0.0
      %820 = vmatprep.subr.mxu0 0.0
      %821 = vmatpush1.xpose.msra.mxu0 0.0
      %822 = vmatprep.subr.mxu0 0.0
      %823 = vmatpush1.xpose.msra.mxu0 0.0
      %824 = vmatprep.subr.mxu0 0.0
      %825 = vmatpush1.xpose.msra.mxu0 0.0
      %826 = vmatprep.subr.mxu0 0.0
      %827 = vmatpush1.xpose.msra.mxu0 %v794
      %828 = vmatprep.subr.mxu0 0.0
      %829 = vmatpush2.xpose.msra.mxu0 0.0
      %830 = vmatprep.subr.mxu0 0.0
      %831 = vmatpush2.xpose.msra.mxu0 0.0
      %832 = vmatprep.subr.mxu0 0.0
      %833 = vmatpush2.xpose.msra.mxu0 0.0
      %834 = vmatprep.subr.mxu0 0.0
      %835 = vmatpush2.xpose.msra.mxu0 0.0
      %836 = vmatprep.subr.mxu0 0.0
      %837 = vmatpush2.xpose.msra.mxu0 0.0
      %838 = vmatprep.subr.mxu0 0.0
      %839 = vmatpush2.xpose.msra.mxu0 0.0
      %840 = vmatprep.subr.mxu0 0.0
      %841 = vmatpush2.xpose.msra.mxu0 0.0
      %842 = vmatprep.subr.mxu0 0.0
      %843 = vmatpush2.xpose.msra.mxu0 0.0
      %844 = vmatprep.subr.mxu0 0.0
      %845 = vmatpush2.xpose.msra.mxu0 0.0
      %846 = vmatprep.subr.mxu0 0.0
      %847 = vmatpush2.xpose.msra.mxu0 0.0
      %848 = vmatprep.subr.mxu0 0.0
      %849 = vmatpush2.xpose.msra.mxu0 0.0
      %850 = vmatprep.subr.mxu0 0.0
      %851 = vmatpush2.xpose.msra.mxu0 0.0
      %852 = vmatprep.subr.mxu0 0.0
      %853 = vmatpush2.xpose.msra.mxu0 0.0
      %854 = vmatprep.subr.mxu0 0.0
      %855 = vmatpush2.xpose.msra.mxu0 0.0
      %856 = vmatprep.subr.mxu0 0.0
      %857 = vmatpush2.xpose.msra.mxu0 0.0
      %858 = vmatprep.subr.mxu0 0.0
      %859 = vmatpush2.xpose.msra.mxu0 0.0
      %860 = vmatprep.mubr.f32.mxu0 0.0
      %861 = vmatmul.mubr.f32.gmra.mxu0 %v792
      %v862 = vpop.f32.mrf.mxu0
      %v863 = vadd.f32 0.0, %v862
      %v864 = vpop.f32.mrf.mxu0
      %865 = vdwg.mxu0
      %v866 = vmul.f32 %v863, 0.35355338
      %v867 = vadd.f32 %v866, %v621
      %v868 = vsel %vm622, %v867, -inf
      %869 = vmax.xlane.f32.xlu0 %v868
      %v870 = vpop.xlane.xlu0 %869
      %v871 = vsub.f32 %v867, %v870
      %v872 = vmul.f32 %v871, 1.442695
      %v873 = vpow.pop %v872
      %v874 = vsel %vm622, %v873, 0.0
      %875 = vadd.xlane.f32.xlu0 %v874
      %v876 = vpop.xlane.xlu0 %875
      %v877 = vrcp.pop %v876
      %v878 = vmul.f32 %v873, %v877
      %879 = vrot.lane.b32.xlu0 %v608, 88
      %v880 = vpop.permute.xlu0 %879
      %v883 = vsel %vm622, %v878, 0
      %885 = vmatprep.subr.mxu0 0.0
      %886 = vmatpush1.msra.mxu0 0.0
      %887 = vmatprep.subr.mxu0 0.0
      %888 = vmatpush1.msra.mxu0 0.0
      %889 = vmatprep.subr.mxu0 0.0
      %890 = vmatpush1.msra.mxu0 0.0
      %891 = vmatprep.subr.mxu0 0.0
      %892 = vmatpush1.msra.mxu0 0.0
      %893 = vmatprep.subr.mxu0 0.0
      %894 = vmatpush1.msra.mxu0 0.0
      %895 = vmatprep.subr.mxu0 0.0
      %896 = vmatpush1.msra.mxu0 0.0
      %897 = vmatprep.subr.mxu0 0.0
      %898 = vmatpush1.msra.mxu0 0.0
      %899 = vmatprep.subr.mxu0 0.0
      %900 = vmatpush1.msra.mxu0 0.0
      %901 = vmatprep.subr.mxu0 0.0
      %902 = vmatpush1.msra.mxu0 0.0
      %903 = vmatprep.subr.mxu0 0.0
      %904 = vmatpush1.msra.mxu0 0.0
      %905 = vmatprep.subr.mxu0 0.0
      %906 = vmatpush1.msra.mxu0 0.0
      %907 = vmatprep.subr.mxu0 0.0
      %908 = vmatpush1.msra.mxu0 0.0
      %909 = vmatprep.subr.mxu0 0.0
      %910 = vmatpush1.msra.mxu0 0.0
      %911 = vmatprep.subr.mxu0 0.0
      %912 = vmatpush1.msra.mxu0 0.0
      %913 = vmatprep.subr.mxu0 0.0
      %914 = vmatpush1.msra.mxu0 0.0
      %915 = vmatprep.subr.mxu0 0.0
      %916 = vmatpush1.msra.mxu0 %v880
      %917 = vmatprep.subr.mxu0 0.0
      %918 = vmatpush2.msra.mxu0 0.0
      %919 = vmatprep.subr.mxu0 0.0
      %920 = vmatpush2.msra.mxu0 0.0
      %921 = vmatprep.subr.mxu0 0.0
      %922 = vmatpush2.msra.mxu0 0.0
      %923 = vmatprep.subr.mxu0 0.0
      %924 = vmatpush2.msra.mxu0 0.0
      %925 = vmatprep.subr.mxu0 0.0
      %926 = vmatpush2.msra.mxu0 0.0
      %927 = vmatprep.subr.mxu0 0.0
      %928 = vmatpush2.msra.mxu0 0.0
      %929 = vmatprep.subr.mxu0 0.0
      %930 = vmatpush2.msra.mxu0 0.0
      %931 = vmatprep.subr.mxu0 0.0
      %932 = vmatpush2.msra.mxu0 0.0
      %933 = vmatprep.subr.mxu0 0.0
      %934 = vmatpush2.msra.mxu0 0.0
      %935 = vmatprep.subr.mxu0 0.0
      %936 = vmatpush2.msra.mxu0 0.0
      %937 = vmatprep.subr.mxu0 0.0
      %938 = vmatpush2.msra.mxu0 0.0
      %939 = vmatprep.subr.mxu0 0.0
      %940 = vmatpush2.msra.mxu0 0.0
      %941 = vmatprep.subr.mxu0 0.0
      %942 = vmatpush2.msra.mxu0 0.0
      %943 = vmatprep.subr.mxu0 0.0
      %944 = vmatpush2.msra.mxu0 0.0
      %945 = vmatprep.subr.mxu0 0.0
      %946 = vmatpush2.msra.mxu0 0.0
      %947 = vmatprep.subr.mxu0 0.0
      %948 = vmatpush2.msra.mxu0 0.0
      %949 = vmatprep.mubr.f32.mxu0 0.0
      %950 = vmatmul.mubr.f32.gmra.mxu0 %v883
      %v951 = vpop.f32.mrf.mxu0
      %v952 = vadd.f32 0.0, %v951
      %v953 = vpop.f32.mrf.mxu0
      %954 = vdwg.mxu0
      %955 = vrot.lane.b32.xlu0 %v524, 112
      %v956 = vpop.permute.xlu0 %955
      %957 = vrot.lane.b32.xlu0 %v608, 112
      %v958 = vpop.permute.xlu0 %957
      %v959 = vsel %vm622, %v956, 0
      %v961 = vsel %vm622, %v958, 0
      %963 = vmatprep.subr.mxu0 0.0
      %964 = vmatpush1.xpose.msra.mxu0 0.0
      %965 = vmatprep.subr.mxu0 0.0
      %966 = vmatpush1.xpose.msra.mxu0 0.0
      %967 = vmatprep.subr.mxu0 0.0
      %968 = vmatpush1.xpose.msra.mxu0 0.0
      %969 = vmatprep.subr.mxu0 0.0
      %970 = vmatpush1.xpose.msra.mxu0 0.0
      %971 = vmatprep.subr.mxu0 0.0
      %972 = vmatpush1.xpose.msra.mxu0 0.0
      %973 = vmatprep.subr.mxu0 0.0
      %974 = vmatpush1.xpose.msra.mxu0 0.0
      %975 = vmatprep.subr.mxu0 0.0
      %976 = vmatpush1.xpose.msra.mxu0 0.0
      %977 = vmatprep.subr.mxu0 0.0
      %978 = vmatpush1.xpose.msra.mxu0 0.0
      %979 = vmatprep.subr.mxu0 0.0
      %980 = vmatpush1.xpose.msra.mxu0 0.0
      %981 = vmatprep.subr.mxu0 0.0
      %982 = vmatpush1.xpose.msra.mxu0 0.0
      %983 = vmatprep.subr.mxu0 0.0
      %984 = vmatpush1.xpose.msra.mxu0 0.0
      %985 = vmatprep.subr.mxu0 0.0
      %986 = vmatpush1.xpose.msra.mxu0 0.0
      %987 = vmatprep.subr.mxu0 0.0
      %988 = vmatpush1.xpose.msra.mxu0 0.0
      %989 = vmatprep.subr.mxu0 0.0
      %990 = vmatpush1.xpose.msra.mxu0 0.0
      %991 = vmatprep.subr.mxu0 0.0
      %992 = vmatpush1.xpose.msra.mxu0 0.0
      %993 = vmatprep.subr.mxu0 0.0
      %994 = vmatpush1.xpose.msra.mxu0 %v961
      %995 = vmatprep.subr.mxu0 0.0
      %996 = vmatpush2.xpose.msra.mxu0 0.0
      %997 = vmatprep.subr.mxu0 0.0
      %998 = vmatpush2.xpose.msra.mxu0 0.0
      %999 = vmatprep.subr.mxu0 0.0
      %1000 = vmatpush2.xpose.msra.mxu0 0.0
      %1001 = vmatprep.subr.mxu0 0.0
      %1002 = vmatpush2.xpose.msra.mxu0 0.0
      %1003 = vmatprep.subr.mxu0 0.0
      %1004 = vmatpush2.xpose.msra.mxu0 0.0
      %1005 = vmatprep.subr.mxu0 0.0
      %1006 = vmatpush2.xpose.msra.mxu0 0.0
      %1007 = vmatprep.subr.mxu0 0.0
      %1008 = vmatpush2.xpose.msra.mxu0 0.0
      %1009 = vmatprep.subr.mxu0 0.0
      %1010 = vmatpush2.xpose.msra.mxu0 0.0
      %1011 = vmatprep.subr.mxu0 0.0
      %1012 = vmatpush2.xpose.msra.mxu0 0.0
      %1013 = vmatprep.subr.mxu0 0.0
      %1014 = vmatpush2.xpose.msra.mxu0 0.0
      %1015 = vmatprep.subr.mxu0 0.0
      %1016 = vmatpush2.xpose.msra.mxu0 0.0
      %1017 = vmatprep.subr.mxu0 0.0
      %1018 = vmatpush2.xpose.msra.mxu0 0.0
      %1019 = vmatprep.subr.mxu0 0.0
      %1020 = vmatpush2.xpose.msra.mxu0 0.0
      %1021 = vmatprep.subr.mxu0 0.0
      %1022 = vmatpush2.xpose.msra.mxu0 0.0
      %1023 = vmatprep.subr.mxu0 0.0
      %1024 = vmatpush2.xpose.msra.mxu0 0.0
      %1025 = vmatprep.subr.mxu0 0.0
      %1026 = vmatpush2.xpose.msra.mxu0 0.0
      %1027 = vmatprep.mubr.f32.mxu0 0.0
      %1028 = vmatmul.mubr.f32.gmra.mxu0 %v959
      %v1029 = vpop.f32.mrf.mxu0
      %v1030 = vadd.f32 0.0, %v1029
      %v1031 = vpop.f32.mrf.mxu0
      %1032 = vdwg.mxu0
      %v1033 = vmul.f32 %v1030, 0.35355338
      %v1034 = vadd.f32 %v1033, %v621
      %v1035 = vsel %vm622, %v1034, -inf
      %1036 = vmax.xlane.f32.xlu0 %v1035
      %v1037 = vpop.xlane.xlu0 %1036
      %v1038 = vsub.f32 %v1034, %v1037
      %v1039 = vmul.f32 %v1038, 1.442695
      %v1040 = vpow.pop %v1039
      %v1041 = vsel %vm622, %v1040, 0.0
      %1042 = vadd.xlane.f32.xlu0 %v1041
      %v1043 = vpop.xlane.xlu0 %1042
      %v1044 = vrcp.pop %v1043
      %v1045 = vmul.f32 %v1040, %v1044
      %1046 = vrot.lane.b32.xlu0 %v608, 80
      %v1047 = vpop.permute.xlu0 %1046
      %v1050 = vsel %vm622, %v1045, 0
      %1052 = vmatprep.subr.mxu0 0.0
      %1053 = vmatpush1.msra.mxu0 0.0
      %1054 = vmatprep.subr.mxu0 0.0
      %1055 = vmatpush1.msra.mxu0 0.0
      %1056 = vmatprep.subr.mxu0 0.0
      %1057 = vmatpush1.msra.mxu0 0.0
      %1058 = vmatprep.subr.mxu0 0.0
      %1059 = vmatpush1.msra.mxu0 0.0
      %1060 = vmatprep.subr.mxu0 0.0
      %1061 = vmatpush1.msra.mxu0 0.0
      %1062 = vmatprep.subr.mxu0 0.0
      %1063 = vmatpush1.msra.mxu0 0.0
      %1064 = vmatprep.subr.mxu0 0.0
      %1065 = vmatpush1.msra.mxu0 0.0
      %1066 = vmatprep.subr.mxu0 0.0
      %1067 = vmatpush1.msra.mxu0 0.0
      %1068 = vmatprep.subr.mxu0 0.0
      %1069 = vmatpush1.msra.mxu0 0.0
      %1070 = vmatprep.subr.mxu0 0.0
      %1071 = vmatpush1.msra.mxu0 0.0
      %1072 = vmatprep.subr.mxu0 0.0
      %1073 = vmatpush1.msra.mxu0 0.0
      %1074 = vmatprep.subr.mxu0 0.0
      %1075 = vmatpush1.msra.mxu0 0.0
      %1076 = vmatprep.subr.mxu0 0.0
      %1077 = vmatpush1.msra.mxu0 0.0
      %1078 = vmatprep.subr.mxu0 0.0
      %1079 = vmatpush1.msra.mxu0 0.0
      %1080 = vmatprep.subr.mxu0 0.0
      %1081 = vmatpush1.msra.mxu0 0.0
      %1082 = vmatprep.subr.mxu0 0.0
      %1083 = vmatpush1.msra.mxu0 %v1047
      %1084 = vmatprep.subr.mxu0 0.0
      %1085 = vmatpush2.msra.mxu0 0.0
      %1086 = vmatprep.subr.mxu0 0.0
      %1087 = vmatpush2.msra.mxu0 0.0
      %1088 = vmatprep.subr.mxu0 0.0
      %1089 = vmatpush2.msra.mxu0 0.0
      %1090 = vmatprep.subr.mxu0 0.0
      %1091 = vmatpush2.msra.mxu0 0.0
      %1092 = vmatprep.subr.mxu0 0.0
      %1093 = vmatpush2.msra.mxu0 0.0
      %1094 = vmatprep.subr.mxu0 0.0
      %1095 = vmatpush2.msra.mxu0 0.0
      %1096 = vmatprep.subr.mxu0 0.0
      %1097 = vmatpush2.msra.mxu0 0.0
      %1098 = vmatprep.subr.mxu0 0.0
      %1099 = vmatpush2.msra.mxu0 0.0
      %1100 = vmatprep.subr.mxu0 0.0
      %1101 = vmatpush2.msra.mxu0 0.0
      %1102 = vmatprep.subr.mxu0 0.0
      %1103 = vmatpush2.msra.mxu0 0.0
      %1104 = vmatprep.subr.mxu0 0.0
      %1105 = vmatpush2.msra.mxu0 0.0
      %1106 = vmatprep.subr.mxu0 0.0
      %1107 = vmatpush2.msra.mxu0 0.0
      %1108 = vmatprep.subr.mxu0 0.0
      %1109 = vmatpush2.msra.mxu0 0.0
      %1110 = vmatprep.subr.mxu0 0.0
      %1111 = vmatpush2.msra.mxu0 0.0
      %1112 = vmatprep.subr.mxu0 0.0
      %1113 = vmatpush2.msra.mxu0 0.0
      %1114 = vmatprep.subr.mxu0 0.0
      %1115 = vmatpush2.msra.mxu0 0.0
      %1116 = vmatprep.mubr.f32.mxu0 0.0
      %1117 = vmatmul.mubr.f32.gmra.mxu0 %v1050
      %v1118 = vpop.f32.mrf.mxu0
      %v1119 = vadd.f32 0.0, %v1118
      %v1120 = vpop.f32.mrf.mxu0
      %1121 = vdwg.mxu0
      %1122 = vrot.lane.b32.xlu0 %v524, 104
      %v1123 = vpop.permute.xlu0 %1122
      %1124 = vrot.lane.b32.xlu0 %v608, 104
      %v1125 = vpop.permute.xlu0 %1124
      %v1126 = vsel %vm622, %v1123, 0
      %v1128 = vsel %vm622, %v1125, 0
      %1130 = vmatprep.subr.mxu0 0.0
      %1131 = vmatpush1.xpose.msra.mxu0 0.0
      %1132 = vmatprep.subr.mxu0 0.0
      %1133 = vmatpush1.xpose.msra.mxu0 0.0
      %1134 = vmatprep.subr.mxu0 0.0
      %1135 = vmatpush1.xpose.msra.mxu0 0.0
      %1136 = vmatprep.subr.mxu0 0.0
      %1137 = vmatpush1.xpose.msra.mxu0 0.0
      %1138 = vmatprep.subr.mxu0 0.0
      %1139 = vmatpush1.xpose.msra.mxu0 0.0
      %1140 = vmatprep.subr.mxu0 0.0
      %1141 = vmatpush1.xpose.msra.mxu0 0.0
      %1142 = vmatprep.subr.mxu0 0.0
      %1143 = vmatpush1.xpose.msra.mxu0 0.0
      %1144 = vmatprep.subr.mxu0 0.0
      %1145 = vmatpush1.xpose.msra.mxu0 0.0
      %1146 = vmatprep.subr.mxu0 0.0
      %1147 = vmatpush1.xpose.msra.mxu0 0.0
      %1148 = vmatprep.subr.mxu0 0.0
      %1149 = vmatpush1.xpose.msra.mxu0 0.0
      %1150 = vmatprep.subr.mxu0 0.0
      %1151 = vmatpush1.xpose.msra.mxu0 0.0
      %1152 = vmatprep.subr.mxu0 0.0
      %1153 = vmatpush1.xpose.msra.mxu0 0.0
      %1154 = vmatprep.subr.mxu0 0.0
      %1155 = vmatpush1.xpose.msra.mxu0 0.0
      %1156 = vmatprep.subr.mxu0 0.0
      %1157 = vmatpush1.xpose.msra.mxu0 0.0
      %1158 = vmatprep.subr.mxu0 0.0
      %1159 = vmatpush1.xpose.msra.mxu0 0.0
      %1160 = vmatprep.subr.mxu0 0.0
      %1161 = vmatpush1.xpose.msra.mxu0 %v1128
      %1162 = vmatprep.subr.mxu0 0.0
      %1163 = vmatpush2.xpose.msra.mxu0 0.0
      %1164 = vmatprep.subr.mxu0 0.0
      %1165 = vmatpush2.xpose.msra.mxu0 0.0
      %1166 = vmatprep.subr.mxu0 0.0
      %1167 = vmatpush2.xpose.msra.mxu0 0.0
      %1168 = vmatprep.subr.mxu0 0.0
      %1169 = vmatpush2.xpose.msra.mxu0 0.0
      %1170 = vmatprep.subr.mxu0 0.0
      %1171 = vmatpush2.xpose.msra.mxu0 0.0
      %1172 = vmatprep.subr.mxu0 0.0
      %1173 = vmatpush2.xpose.msra.mxu0 0.0
      %1174 = vmatprep.subr.mxu0 0.0
      %1175 = vmatpush2.xpose.msra.mxu0 0.0
      %1176 = vmatprep.subr.mxu0 0.0
      %1177 = vmatpush2.xpose.msra.mxu0 0.0
      %1178 = vmatprep.subr.mxu0 0.0
      %1179 = vmatpush2.xpose.msra.mxu0 0.0
      %1180 = vmatprep.subr.mxu0 0.0
      %1181 = vmatpush2.xpose.msra.mxu0 0.0
      %1182 = vmatprep.subr.mxu0 0.0
      %1183 = vmatpush2.xpose.msra.mxu0 0.0
      %1184 = vmatprep.subr.mxu0 0.0
      %1185 = vmatpush2.xpose.msra.mxu0 0.0
      %1186 = vmatprep.subr.mxu0 0.0
      %1187 = vmatpush2.xpose.msra.mxu0 0.0
      %1188 = vmatprep.subr.mxu0 0.0
      %1189 = vmatpush2.xpose.msra.mxu0 0.0
      %1190 = vmatprep.subr.mxu0 0.0
      %1191 = vmatpush2.xpose.msra.mxu0 0.0
      %1192 = vmatprep.subr.mxu0 0.0
      %1193 = vmatpush2.xpose.msra.mxu0 0.0
      %1194 = vmatprep.mubr.f32.mxu0 0.0
      %1195 = vmatmul.mubr.f32.gmra.mxu0 %v1126
      %v1196 = vpop.f32.mrf.mxu0
      %v1197 = vadd.f32 0.0, %v1196
      %v1198 = vpop.f32.mrf.mxu0
      %1199 = vdwg.mxu0
      %v1200 = vmul.f32 %v1197, 0.35355338
      %v1201 = vadd.f32 %v1200, %v621
      %v1202 = vsel %vm622, %v1201, -inf
      %1203 = vmax.xlane.f32.xlu0 %v1202
      %v1204 = vpop.xlane.xlu0 %1203
      %v1205 = vsub.f32 %v1201, %v1204
      %v1206 = vmul.f32 %v1205, 1.442695
      %v1207 = vpow.pop %v1206
      %v1208 = vsel %vm622, %v1207, 0.0
      %1209 = vadd.xlane.f32.xlu0 %v1208
      %v1210 = vpop.xlane.xlu0 %1209
      %v1211 = vrcp.pop %v1210
      %v1212 = vmul.f32 %v1207, %v1211
      %1213 = vrot.lane.b32.xlu0 %v608, 72
      %v1214 = vpop.permute.xlu0 %1213
      %v1217 = vsel %vm622, %v1212, 0
      %1219 = vmatprep.subr.mxu0 0.0
      %1220 = vmatpush1.msra.mxu0 0.0
      %1221 = vmatprep.subr.mxu0 0.0
      %1222 = vmatpush1.msra.mxu0 0.0
      %1223 = vmatprep.subr.mxu0 0.0
      %1224 = vmatpush1.msra.mxu0 0.0
      %1225 = vmatprep.subr.mxu0 0.0
      %1226 = vmatpush1.msra.mxu0 0.0
      %1227 = vmatprep.subr.mxu0 0.0
      %1228 = vmatpush1.msra.mxu0 0.0
      %1229 = vmatprep.subr.mxu0 0.0
      %1230 = vmatpush1.msra.mxu0 0.0
      %1231 = vmatprep.subr.mxu0 0.0
      %1232 = vmatpush1.msra.mxu0 0.0
      %1233 = vmatprep.subr.mxu0 0.0
      %1234 = vmatpush1.msra.mxu0 0.0
      %1235 = vmatprep.subr.mxu0 0.0
      %1236 = vmatpush1.msra.mxu0 0.0
      %1237 = vmatprep.subr.mxu0 0.0
      %1238 = vmatpush1.msra.mxu0 0.0
      %1239 = vmatprep.subr.mxu0 0.0
      %1240 = vmatpush1.msra.mxu0 0.0
      %1241 = vmatprep.subr.mxu0 0.0
      %1242 = vmatpush1.msra.mxu0 0.0
      %1243 = vmatprep.subr.mxu0 0.0
      %1244 = vmatpush1.msra.mxu0 0.0
      %1245 = vmatprep.subr.mxu0 0.0
      %1246 = vmatpush1.msra.mxu0 0.0
      %1247 = vmatprep.subr.mxu0 0.0
      %1248 = vmatpush1.msra.mxu0 0.0
      %1249 = vmatprep.subr.mxu0 0.0
      %1250 = vmatpush1.msra.mxu0 %v1214
      %1251 = vmatprep.subr.mxu0 0.0
      %1252 = vmatpush2.msra.mxu0 0.0
      %1253 = vmatprep.subr.mxu0 0.0
      %1254 = vmatpush2.msra.mxu0 0.0
      %1255 = vmatprep.subr.mxu0 0.0
      %1256 = vmatpush2.msra.mxu0 0.0
      %1257 = vmatprep.subr.mxu0 0.0
      %1258 = vmatpush2.msra.mxu0 0.0
      %1259 = vmatprep.subr.mxu0 0.0
      %1260 = vmatpush2.msra.mxu0 0.0
      %1261 = vmatprep.subr.mxu0 0.0
      %1262 = vmatpush2.msra.mxu0 0.0
      %1263 = vmatprep.subr.mxu0 0.0
      %1264 = vmatpush2.msra.mxu0 0.0
      %1265 = vmatprep.subr.mxu0 0.0
      %1266 = vmatpush2.msra.mxu0 0.0
      %1267 = vmatprep.subr.mxu0 0.0
      %1268 = vmatpush2.msra.mxu0 0.0
      %1269 = vmatprep.subr.mxu0 0.0
      %1270 = vmatpush2.msra.mxu0 0.0
      %1271 = vmatprep.subr.mxu0 0.0
      %1272 = vmatpush2.msra.mxu0 0.0
      %1273 = vmatprep.subr.mxu0 0.0
      %1274 = vmatpush2.msra.mxu0 0.0
      %1275 = vmatprep.subr.mxu0 0.0
      %1276 = vmatpush2.msra.mxu0 0.0
      %1277 = vmatprep.subr.mxu0 0.0
      %1278 = vmatpush2.msra.mxu0 0.0
      %1279 = vmatprep.subr.mxu0 0.0
      %1280 = vmatpush2.msra.mxu0 0.0
      %1281 = vmatprep.subr.mxu0 0.0
      %1282 = vmatpush2.msra.mxu0 0.0
      %1283 = vmatprep.mubr.f32.mxu0 0.0
      %1284 = vmatmul.mubr.f32.gmra.mxu0 %v1217
      %v1285 = vpop.f32.mrf.mxu0
      %v1286 = vadd.f32 0.0, %v1285
      %v1287 = vpop.f32.mrf.mxu0
      %1288 = vdwg.mxu0
      %1290 = vrot.lane.b32.xlu0 %v952, 8
      %v1291 = vpop.permute.xlu0 %1290
      %1294 = vrot.lane.b32.xlu0 %v1119, 16
      %v1295 = vpop.permute.xlu0 %1294
      %1298 = vrot.lane.b32.xlu0 %v1286, 24
      %v1299 = vpop.permute.xlu0 %1298
      %v1301 = vsel %vm622, %v785, %v1291
      %vm1302 = vcmask 130048
      %v1303 = vsel %vm1302, %v1301, %v1295
      %vm1304 = vcmask 195584
      %v1305 = vsel %vm1304, %v1303, %v1299
      %v1306 = vld [vmem:[%s8] sm:$0xff]
      %v1307 = vld [vmem:[%s8 + $0x8] sm:$0xff]
      %v1308 = vld [vmem:[%s8 + $0x10] sm:$0xff]
      %v1309 = vld [vmem:[%s8 + $0x18] sm:$0xff]
      %v1310 = vld [vmem:[%s9] sm:$0x1]
      %v1312 = vlaneseq
      %v1313 = vshrl.u32 %v1312, 7
      %v1314 = vsub.s32 0, %v1313
      %v1315 = vrot.slane %v1310, %v1314
      %v1318 = vsel %vm453, %v1305, 0
      %1320 = vmatprep.subr.mxu0 0.0
      %1321 = vmatpush1.msra.mxu0 0.0
      %1322 = vmatprep.subr.mxu0 0.0
      %1323 = vmatpush1.msra.mxu0 0.0
      %1324 = vmatprep.subr.mxu0 0.0
      %1325 = vmatpush1.msra.mxu0 0.0
      %1326 = vmatprep.subr.mxu0 0.0
      %1327 = vmatpush1.msra.mxu0 0.0
      %1328 = vmatprep.subr.mxu0 0.0
      %1329 = vmatpush1.msra.mxu0 0.0
      %1330 = vmatprep.subr.mxu0 0.0
      %1331 = vmatpush1.msra.mxu0 0.0
      %1332 = vmatprep.subr.mxu0 0.0
      %1333 = vmatpush1.msra.mxu0 0.0
      %1334 = vmatprep.subr.mxu0 0.0
      %1335 = vmatpush1.msra.mxu0 0.0
      %1336 = vmatprep.subr.mxu0 0.0
      %1337 = vmatpush1.msra.mxu0 0.0
      %1338 = vmatprep.subr.mxu0 0.0
      %1339 = vmatpush1.msra.mxu0 0.0
      %1340 = vmatprep.subr.mxu0 0.0
      %1341 = vmatpush1.msra.mxu0 0.0
      %1342 = vmatprep.subr.mxu0 0.0
      %1343 = vmatpush1.msra.mxu0 0.0
      %1344 = vmatprep.subr.mxu0 0.0
      %1345 = vmatpush1.msra.mxu0 %v1309
      %1346 = vmatprep.subr.mxu0 0.0
      %1347 = vmatpush1.msra.mxu0 %v1308
      %1348 = vmatprep.subr.mxu0 0.0
      %1349 = vmatpush1.msra.mxu0 %v1307
      %1350 = vmatprep.subr.mxu0 0.0
      %1351 = vmatpush1.msra.mxu0 %v1306
      %1352 = vmatprep.subr.mxu0 0.0
      %1353 = vmatpush2.msra.mxu0 0.0
      %1354 = vmatprep.subr.mxu0 0.0
      %1355 = vmatpush2.msra.mxu0 0.0
      %1356 = vmatprep.subr.mxu0 0.0
      %1357 = vmatpush2.msra.mxu0 0.0
      %1358 = vmatprep.subr.mxu0 0.0
      %1359 = vmatpush2.msra.mxu0 0.0
      %1360 = vmatprep.subr.mxu0 0.0
      %1361 = vmatpush2.msra.mxu0 0.0
      %1362 = vmatprep.subr.mxu0 0.0
      %1363 = vmatpush2.msra.mxu0 0.0
      %1364 = vmatprep.subr.mxu0 0.0
      %1365 = vmatpush2.msra.mxu0 0.0
      %1366 = vmatprep.subr.mxu0 0.0
      %1367 = vmatpush2.msra.mxu0 0.0
      %1368 = vmatprep.subr.mxu0 0.0
      %1369 = vmatpush2.msra.mxu0 0.0
      %1370 = vmatprep.subr.mxu0 0.0
      %1371 = vmatpush2.msra.mxu0 0.0
      %1372 = vmatprep.subr.mxu0 0.0
      %1373 = vmatpush2.msra.mxu0 0.0
      %1374 = vmatprep.subr.mxu0 0.0
      %1375 = vmatpush2.msra.mxu0 0.0
      %1376 = vmatprep.subr.mxu0 0.0
      %1377 = vmatpush2.msra.mxu0 0.0
      %1378 = vmatprep.subr.mxu0 0.0
      %1379 = vmatpush2.msra.mxu0 0.0
      %1380 = vmatprep.subr.mxu0 0.0
      %1381 = vmatpush2.msra.mxu0 0.0
      %1382 = vmatprep.subr.mxu0 0.0
      %1383 = vmatpush2.msra.mxu0 0.0
      %1384 = vmatprep.mubr.f32.mxu0 0.0
      %1385 = vmatmul.mubr.f32.gmra.mxu0 %v1318
      %v1386 = vpop.f32.mrf.mxu0
      %v1387 = vadd.f32 %v1315, %v1386
      %v1388 = vpop.f32.mrf.mxu0
      %1389 = vdwg.mxu0
      %v1390 = vadd.f32 %v1387, %v440
      %v1391 = vsel %vm453, %v1390, 0.0
      %1392 = vadd.xlane.f32.xlu0 %v1391
      %v1393 = vpop.xlane.xlu0 %1392
      %v1394 = vrcp.pop 32.0
      %v1395 = vmul.f32 %v1393, %v1394
      %v1396 = vsub.f32 %v1390, %v1395
      %v1397 = vmul.f32 %v1396, %v1396
      %v1398 = vsel %vm453, %v1397, 0.0
      %1399 = vadd.xlane.f32.xlu0 %v1398
      %v1400 = vpop.xlane.xlu0 %1399
      %v1401 = vmul.f32 %v1400, 0.032258064
      %v1402 = vrsqrt.pop %v1401
      %v1403 = vmul.f32 %v1396, %v1402
      %v1404 = vadd.f32 %v1403, 1e-05
      %v1405 = vld [vmem:[%s10] sm:$0x1]
      %v1407 = vlaneseq
      %v1408 = vshrl.u32 %v1407, 7
      %v1409 = vsub.s32 0, %v1408
      %v1410 = vrot.slane %v1405, %v1409
      %v1412 = vmul.f32 %v1404, %v1410
      %v1413 = vld [vmem:[%s11] sm:$0x1]
      %v1415 = vlaneseq
      %v1416 = vshrl.u32 %v1415, 7
      %v1417 = vsub.s32 0, %v1416
      %v1418 = vrot.slane %v1413, %v1417
      %v1420 = vadd.f32 %v1412, %v1418
      %1421 = vst.msk [vmem:[%s439] sm:$0xff] %vm453, %v1420
      %p1422 = scmp.lt.s32.totalorder %s23, 1
      %s1423 = scalar_select %p1422, %s23, 1
      %s1424 = smul.addr %s1423, 8
      %s1425 = scalar_lea.vmem %s12, %s1424
      // Predicated region
      $region69: #{transformer_decoder_forward.7} parent=67 // pred_check
        %p1426 = pneg %p308
      $region70: #{transformer_decoder_forward.7} parent=67 // pred_check_branch
        %1428 = sbr.rel (%p1426) target = $region72
      $region71: #{transformer_decoder_forward.7} parent=67 // pred_region
        _
      $region72: #{transformer_decoder_forward.7} parent=67 // pred_fallthru
        _
    $region68: #{transformer_decoder_forward.7} parent=5 // pred_fallthru
      _
    %p1429 = scmp.le.s32.totalorder 2, %s18
    // Predicated region
    $region73: #{transformer_decoder_forward.7} parent=5 // pred_check
      %p1430 = pneg %p1429
    $region74: #{transformer_decoder_forward.7} parent=5 // pred_check_branch
      %1432 = sbr.rel (%p1430) target = $region76
    $region75: #{transformer_decoder_forward.7} parent=5 // pred_region
      %s1433 = ssub.s32 %s18, 2
      // Predicated region
      $region77: #{transformer_decoder_forward.7} parent=75 // pred_check
        %p1434 = pneg %p314
      $region78: #{transformer_decoder_forward.7} parent=75 // pred_check_branch
        %1436 = sbr.rel (%p1434) target = $region80
      $region79: #{transformer_decoder_forward.7} parent=75 // pred_region
        %p1437 = scmp.lt.s32.totalorder %s24, 1
        %s1438 = scalar_select %p1437, %s24, 1
        %s1439 = smul.addr %s1438, 8
        %s1440 = scalar_lea.vmem %s12, %s1439
      $region80: #{transformer_decoder_forward.7} parent=75 // pred_fallthru
        _
    $region76: #{transformer_decoder_forward.7} parent=5 // pred_fallthru
      _
  $region6: #{transformer_decoder_forward.7} parent=0 // loop_footer
    %s22 = sadd.s32 1, %s18
  $region7: #{transformer_decoder_forward.7} parent=0 // loop_footer_branch
    %17 = sbr.rel target = $region3
  $region8: #{transformer_decoder_forward.7} parent=0 // loop_exit
    _

</llo_original>
